<compile_context>
chip_gen: v7x
topology: tpu7x:2x2x1
jax: 0.10.0
libtpu: 0.0.40
codegen_flags: <defaults>
</compile_context>

<pallas_src>
import functools

import jax
import jax.numpy as jnp
from jax.experimental import pallas as pl
from jax.experimental.pallas import tpu as pltpu


def _vmem_capacity_bytes(default=64 << 20):
    """Physical VMEM per TensorCore (128 MiB v5e/v6e, 64 MiB v7x)."""
    try:
        info = pltpu.get_tpu_info()
    except Exception:
        return default
    for name in ("vmem_capacity_bytes", "vmem_bytes", "vmem_capacity"):
        v = getattr(info, name, None)
        if v:
            return int(v)
    return default


# =============================================================================
# Path 1: whole problem resident in VMEM -> single fused kernel (no grid).
# =============================================================================
def fused_conv_bn_kernel(x_ref, w_ref, gamma_ref, beta_ref, o_ref, *, eps, inv_count):
    n_batch = x_ref.shape[0]
    cout = o_ref.shape[1]
    w = w_ref[...]

    # ---- Pass A: 1x1 conv (per-image matmul) + one-pass channel sums/sumsq.
    def body_a(n, carry):
        s, ssq = carry
        y = jnp.dot(w, x_ref[n], preferred_element_type=jnp.float32)
        o_ref[n] = y
        return (s + jnp.sum(y, axis=1, keepdims=True),
                ssq + jnp.sum(y * y, axis=1, keepdims=True))

    init = (jnp.zeros((cout, 1), jnp.float32), jnp.zeros((cout, 1), jnp.float32))
    s, ssq = jax.lax.fori_loop(0, n_batch, body_a, init, unroll=n_batch <= 8)

    # ---- BN batch statistics (biased variance), folded into scale/shift.
    mean = s * inv_count
    var = jnp.maximum(ssq * inv_count - mean * mean, 0.0)
    scale = gamma_ref[...] * jax.lax.rsqrt(var + eps)          # (Cout, 1)
    shift = beta_ref[...] - mean * scale

    # ---- Pass B: normalize + affine in place (single read-modify-write).
    @pl.loop(0, n_batch)
    def _(n):
        o_ref[n] = o_ref[n] * scale + shift


# =============================================================================
# Path 2 (fallback): two passes, BN fused into the second matmul (recompute).
# =============================================================================
def conv_stats_kernel(x_ref, w_ref, stat_ref, *, hw_total, t_hw, needs_mask):
    # x_ref: (bn, Cin, t_hw), w_ref: (Cout, Cin), stat_ref: (1, 1, Cout, 2)
    w = w_ref[...]
    cout = w.shape[0]
    bn = x_ref.shape[0]
    col0 = pl.program_id(1) * t_hw

    def body(n, carry):
        s, ssq = carry
        y = jnp.dot(w, x_ref[n], preferred_element_type=jnp.float32)
        if needs_mask:  # partial spatial edge block: zero out padded lanes
            col = jax.lax.broadcasted_iota(jnp.int32, y.shape, 1) + col0
            y = jnp.where(col < hw_total, y, 0.0)
        return (s + jnp.sum(y, axis=1, keepdims=True),
                ssq + jnp.sum(y * y, axis=1, keepdims=True))

    init = (jnp.zeros((cout, 1), jnp.float32), jnp.zeros((cout, 1), jnp.float32))
    s, ssq = jax.lax.fori_loop(0, bn, body, init, unroll=bn <= 8)
    stat_ref[0, 0] = jnp.concatenate([s, ssq], axis=1)          # (Cout, 2)


def conv_bn_apply_kernel(x_ref, w_ref, scale_ref, shift_ref, o_ref):
    # x_ref: (bn, Cin, t_hw) -> o_ref: (bn, Cout, t_hw); OOB columns are dropped
    w = w_ref[...]
    scale = scale_ref[...]
    shift = shift_ref[...]
    bn = x_ref.shape[0]

    @pl.loop(0, bn)
    def _(n):
        y = jnp.dot(w, x_ref[n], preferred_element_type=jnp.float32)
        o_ref[n] = y * scale + shift


# =============================================================================
# Wrapper
# =============================================================================
def conv_bn_forward(x_nchw, weight, gamma, beta, *, eps=1e-5,
                    vmem_budget_bytes=None, max_step_bytes=None):
    """x_nchw: (N, 32, H, W) f32.  weight: (96, 32, 1, 1).  Returns NCHW f32."""
    n, cin, h, w = x_nchw.shape
    cout = weight.shape[0]
    hw = h * w
    count = n * hw

    # Free layout changes (NCHW is contiguous; no transposes anywhere).
    x3d = x_nchw.reshape(n, cin, hw).astype(jnp.float32)
    w2d = weight.reshape(cout, cin).astype(jnp.float32)
    gamma2d = gamma.reshape(cout, 1).astype(jnp.float32)
    beta2d = beta.reshape(cout, 1).astype(jnp.float32)

    vmem_cap = _vmem_capacity_bytes()
    if vmem_budget_bytes is None:
        # ~96 MiB on v5e/v6e (128 MiB VMEM), ~48 MiB on v7x (64 MiB VMEM).
        vmem_budget_bytes = (vmem_cap * 3) // 4
    if max_step_bytes is None:
        max_step_bytes = min(12 << 20, vmem_cap // 8)

    bytes_resident = 4 * (n * cin * hw + n * cout * hw + cout * cin + 2 * cout)

    # ------------------------------------------------------------------ fused
    if bytes_resident <= vmem_budget_bytes:
        vmem_limit = int(min(vmem_cap - (8 << 20),
                             max(32 << 20, int(1.5 * bytes_resident))))
        o3d = pl.pallas_call(
            functools.partial(fused_conv_bn_kernel, eps=float(eps),
                              inv_count=1.0 / float(count)),
            out_shape=jax.ShapeDtypeStruct((n, cout, hw), jnp.float32),
            compiler_params=pltpu.CompilerParams(vmem_limit_bytes=vmem_limit),
        )(x3d, w2d, gamma2d, beta2d)
        return o3d.reshape(n, cout, h, w)

    # --------------------------------------------------------------- fallback
    # Choose per-step blocking: several images per step when HW is small (to
    # amortize ~0.35us/step and issue larger DMAs), spatial tiling when a
    # single image's slab would not fit the per-step VMEM allowance.
    per_image_bytes = 4 * (cin + cout) * hw
    if per_image_bytes <= max_step_bytes:
        t_hw = hw
        sb = 1
        bn_cap = min(n, max(1, max_step_bytes // per_image_bytes))
        bn = 1
        for d in range(bn_cap, 0, -1):          # largest divisor of n <= cap
            if n % d == 0:
                bn = d
                break
    else:
        bn = 1
        cols = max(128, (max_step_bytes // (4 * (cin + cout))) // 128 * 128)
        t_hw = min(cols, ((hw + 127) // 128) * 128)
        sb = pl.cdiv(hw, t_hw)
    nb = n // bn
    needs_mask = (hw % t_hw) != 0

    fb_vmem_limit = int(min(vmem_cap - (8 << 20),
                            max(32 << 20, 6 * max_step_bytes)))
    fb_params = pltpu.CompilerParams(
        dimension_semantics=("parallel", "parallel"),
        vmem_limit_bytes=fb_vmem_limit)

    # Pass 1: per-block (sum, sumsq) stats, merged into one (Cout, 2) output.
    stats = pl.pallas_call(
        functools.partial(conv_stats_kernel, hw_total=hw, t_hw=t_hw,
                          needs_mask=needs_mask),
        out_shape=jax.ShapeDtypeStruct((nb, sb, cout, 2), jnp.float32),
        grid=(nb, sb),
        in_specs=[pl.BlockSpec((bn, cin, t_hw), lambda i, j: (i, 0, j)),
                  pl.BlockSpec((cout, cin), lambda i, j: (0, 0))],
        out_specs=pl.BlockSpec((1, 1, cout, 2), lambda i, j: (i, j, 0, 0)),
        compiler_params=fb_params,
    )(x3d, w2d)

    # Fold BN (batch stats, biased variance) into per-channel scale/shift.
    sums = jnp.sum(stats, axis=(0, 1))                          # (Cout, 2)
    mean = sums[:, 0:1] / count
    var = jnp.maximum(sums[:, 1:2] / count - mean * mean, 0.0)
    scale = gamma2d * jax.lax.rsqrt(var + eps)
    shift = beta2d - mean * scale

    # Pass 2: recompute the cheap K=32 matmul and apply folded scale/shift.
    o3d = pl.pallas_call(
        conv_bn_apply_kernel,
        out_shape=jax.ShapeDtypeStruct((n, cout, hw), jnp.float32),
        grid=(nb, sb),
        in_specs=[pl.BlockSpec((bn, cin, t_hw), lambda i, j: (i, 0, j)),
                  pl.BlockSpec((cout, cin), lambda i, j: (0, 0)),
                  pl.BlockSpec((cout, 1), lambda i, j: (0, 0)),
                  pl.BlockSpec((cout, 1), lambda i, j: (0, 0))],
        out_specs=pl.BlockSpec((bn, cout, t_hw), lambda i, j: (i, 0, j)),
        compiler_params=fb_params,
    )(x3d, w2d, scale, shift)
    return o3d.reshape(n, cout, h, w)


# =============================================================================
# Reference + tests
# =============================================================================
def reference_conv_bn(x, conv_w, gamma, beta, eps=1e-5):
    cout, cin = conv_w.shape[0], conv_w.shape[1]
    y = jnp.einsum("oc,nchw->nohw", conv_w.reshape(cout, cin), x,
                   precision=jax.lax.Precision.HIGHEST)
    m = y.mean(axis=(0, 2, 3), keepdims=True)
    v = ((y - m) ** 2).mean(axis=(0, 2, 3), keepdims=True)
    out = (y - m) * jax.lax.rsqrt(v + eps)
    return out * gamma.reshape(1, cout, 1, 1) + beta.reshape(1, cout, 1, 1)


if __name__ == "__main__":
    def check(out, ref, tag):
        err = float(jnp.max(jnp.abs(out - ref)))
        assert jnp.allclose(out, ref, atol=2e-2, rtol=2e-2), (tag, err)

    key = jax.random.PRNGKey(0)
    k_x, k_w, k_g, k_b, k_x2 = jax.random.split(key, 5)

    # --- module's shape: (1, 32, 56, 56) -> (1, 96, 56, 56)
    N, CIN, COUT, H, W = 1, 32, 96, 56, 56
    x = jax.random.normal(k_x, (N, CIN, H, W), dtype=jnp.float32)
    conv_w = jax.random.normal(k_w, (COUT, CIN, 1, 1), dtype=jnp.float32) * 0.1
    gamma = 1.0 + 0.1 * jax.random.normal(k_g, (COUT,), dtype=jnp.float32)
    beta = 0.1 * jax.random.normal(k_b, (COUT,), dtype=jnp.float32)
    ref = reference_conv_bn(x, conv_w, gamma, beta)

    # Path 1: fully-fused single-kernel path (used for this problem size).
    out = jax.jit(conv_bn_forward)(x, conv_w, gamma, beta)
    jax.block_until_ready(out)
    assert out.shape == (N, COUT, H, W), out.shape
    check(out, ref, "fused")

    # Path 2: force the tiled fallback with spatial tiling (partial edge block).
    fwd_tiled = jax.jit(functools.partial(conv_bn_forward, vmem_budget_bytes=0,
                                          max_step_bytes=256 * 1024))
    out2 = fwd_tiled(x, conv_w, gamma, beta)
    jax.block_until_ready(out2)
    check(out2, ref, "tiled-spatial")

    # --- small batched case: exercises the per-image loops (fused + bn>1 fallback).
    N2, H2, W2 = 2, 16, 16
    x2 = jax.random.normal(k_x2, (N2, CIN, H2, W2), dtype=jnp.float32)
    ref2 = reference_conv_bn(x2, conv_w, gamma, beta)

    out3 = jax.jit(conv_bn_forward)(x2, conv_w, gamma, beta)
    jax.block_until_ready(out3)
    check(out3, ref2, "fused-batch2")

    out4 = jax.jit(functools.partial(conv_bn_forward, vmem_budget_bytes=0))(
        x2, conv_w, gamma, beta)
    jax.block_until_ready(out4)
    check(out4, ref2, "tiled-batch2")

    print("KERNEL_OK")
</pallas_src>

<mosaic_0001>
module attributes {stable_mosaic.version = 11 : i64} {
  func.func @fused_conv_bn_kernel(%arg0: memref<1x32x3136xf32, #tpu.memory_space<vmem>>, %arg1: memref<96x32xf32, #tpu.memory_space<vmem>>, %arg2: memref<96x1xf32, #tpu.memory_space<vmem>>, %arg3: memref<96x1xf32, #tpu.memory_space<vmem>>, %arg4: memref<1x96x3136xf32, #tpu.memory_space<vmem>>) attributes {dimension_semantics = [], scalar_prefetch = 0 : i64, scratch_operands = 0 : i64, tpu.core_type = #tpu.core_type<tc>} {
    %c0 = arith.constant 0 : index
    %c0_0 = arith.constant 0 : index
    %0 = vector.load %arg1[%c0, %c0_0] : memref<96x32xf32, #tpu.memory_space<vmem>>, vector<96x32xf32>
    %cst = arith.constant 0.000000e+00 : f32
    %1 = vector.broadcast %cst : f32 to vector<96x1xf32>
    %cst_1 = arith.constant 0.000000e+00 : f32
    %2 = vector.broadcast %cst_1 : f32 to vector<96x1xf32>
    %c0_i32 = arith.constant 0 : i32
    %3 = arith.index_cast %c0_i32 : i32 to index
    %c0_2 = arith.constant 0 : index
    %c0_3 = arith.constant 0 : index
    %4 = vector.load %arg0[%3, %c0_2, %c0_3] : memref<1x32x3136xf32, #tpu.memory_space<vmem>>, vector<1x32x3136xf32>
    %5 = vector.shape_cast %4 : vector<1x32x3136xf32> to vector<32x3136xf32>
    %cst_4 = arith.constant dense<0.000000e+00> : vector<96x3136xf32>
    %6 = tpu.matmul %0, %5, %cst_4 {dimension_numbers = #tpu.dot_dimension_numbers<[1], [0], [0], [1], [0, 0, 1, 1], [], []>} : vector<96x32xf32>, vector<32x3136xf32>, vector<96x3136xf32> -> vector<96x3136xf32>
    %7 = arith.index_cast %c0_i32 : i32 to index
    %c0_5 = arith.constant 0 : index
    %c0_6 = arith.constant 0 : index
    %8 = vector.load %arg4[%7, %c0_5, %c0_6] : memref<1x96x3136xf32, #tpu.memory_space<vmem>>, vector<1x96x3136xf32>
    %9 = vector.shape_cast %8 : vector<1x96x3136xf32> to vector<96x3136xf32>
    %10 = vector.shape_cast %6 : vector<96x3136xf32> to vector<1x96x3136xf32>
    tpu.vector_store %arg4[%7, %c0_5, %c0_6], %10 {strides = array<i32>} : memref<1x96x3136xf32, #tpu.memory_space<vmem>>, vector<1x96x3136xf32>,
    %cst_7 = arith.constant dense<0.000000e+00> : vector<96xf32>
    %11 = vector.multi_reduction <add>, %6, %cst_7 [1] : vector<96x3136xf32> to vector<96xf32>
    %12 = vector.shape_cast %11 : vector<96xf32> to vector<96x1xf32>
    %13 = arith.addf %1, %12 : vector<96x1xf32>
    %14 = arith.mulf %6, %6 : vector<96x3136xf32>
    %cst_8 = arith.constant dense<0.000000e+00> : vector<96xf32>
    %15 = vector.multi_reduction <add>, %14, %cst_8 [1] : vector<96x3136xf32> to vector<96xf32>
    %16 = vector.shape_cast %15 : vector<96xf32> to vector<96x1xf32>
    %17 = arith.addf %2, %16 : vector<96x1xf32>
    %c1_i32 = arith.constant 1 : i32
    %cst_9 = arith.constant 3.18877544E-4 : f32
    %18 = vector.broadcast %cst_9 : f32 to vector<96x1xf32>
    %19 = arith.mulf %13, %18 : vector<96x1xf32>
    %cst_10 = arith.constant 3.18877544E-4 : f32
    %20 = vector.broadcast %cst_10 : f32 to vector<96x1xf32>
    %21 = arith.mulf %17, %20 : vector<96x1xf32>
    %22 = arith.mulf %19, %19 : vector<96x1xf32>
    %23 = arith.subf %21, %22 : vector<96x1xf32>
    %cst_11 = arith.constant 0.000000e+00 : f32
    %24 = vector.broadcast %cst_11 : f32 to vector<96x1xf32>
    %25 = arith.maximumf %23, %24 : vector<96x1xf32>
    %c0_12 = arith.constant 0 : index
    %c0_13 = arith.constant 0 : index
    %26 = vector.load %arg2[%c0_12, %c0_13] : memref<96x1xf32, #tpu.memory_space<vmem>>, vector<96x1xf32>
    %cst_14 = arith.constant 9.99999974E-6 : f32
    %27 = vector.broadcast %cst_14 : f32 to vector<96x1xf32>
    %28 = arith.addf %25, %27 : vector<96x1xf32>
    %29 = math.rsqrt %28 : vector<96x1xf32>
    %30 = arith.mulf %26, %29 : vector<96x1xf32>
    %c0_15 = arith.constant 0 : index
    %c0_16 = arith.constant 0 : index
    %31 = vector.load %arg3[%c0_15, %c0_16] : memref<96x1xf32, #tpu.memory_space<vmem>>, vector<96x1xf32>
    %32 = arith.mulf %19, %30 : vector<96x1xf32>
    %33 = arith.subf %31, %32 : vector<96x1xf32>
    %c0_i32_17 = arith.constant 0 : i32
    %c1_i32_18 = arith.constant 1 : i32
    %34 = arith.muli %c0_i32_17, %c1_i32_18 : i32
    %c0_i32_19 = arith.constant 0 : i32
    %35 = arith.addi %c0_i32_19, %34 : i32
    %36 = arith.index_cast %35 : i32 to index
    %c0_20 = arith.constant 0 : index
    %c0_21 = arith.constant 0 : index
    %37 = vector.load %arg4[%36, %c0_20, %c0_21] : memref<1x96x3136xf32, #tpu.memory_space<vmem>>, vector<1x96x3136xf32>
    %38 = vector.shape_cast %37 : vector<1x96x3136xf32> to vector<96x3136xf32>
    %39 = vector.broadcast %30 : vector<96x1xf32> to vector<96x3136xf32>
    %40 = arith.mulf %38, %39 : vector<96x3136xf32>
    %41 = vector.broadcast %33 : vector<96x1xf32> to vector<96x3136xf32>
    %42 = arith.addf %40, %41 : vector<96x3136xf32>
    %43 = arith.index_cast %35 : i32 to index
    %c0_22 = arith.constant 0 : index
    %c0_23 = arith.constant 0 : index
    %44 = vector.load %arg4[%43, %c0_22, %c0_23] : memref<1x96x3136xf32, #tpu.memory_space<vmem>>, vector<1x96x3136xf32>
    %45 = vector.shape_cast %44 : vector<1x96x3136xf32> to vector<96x3136xf32>
    %46 = vector.shape_cast %42 : vector<96x3136xf32> to vector<1x96x3136xf32>
    tpu.vector_store %arg4[%43, %c0_22, %c0_23], %46 {strides = array<i32>} : memref<1x96x3136xf32, #tpu.memory_space<vmem>>, vector<1x96x3136xf32>,
    %c1_i32_24 = arith.constant 1 : i32
    return
  }
}

</mosaic_0001>

<llo_original>
// kernel: conv_bn_forward.1
$region0: #{conv_bn_forward.1}
  #allocation0 [shape = 'u32[]', space=smem, size = 0x4, offset = 0x4, fixed_abs, tag = 'smem constant byte address 0x4 - core index']
  #allocation1 [shape = 'u32[144,128]{1,0:T(1,128)}', space=vmem, size = 0x12000, scoped, tag = 'internal scratch']
  %s0 = inlined_call_operand.vmem [shape: f32[1,32,3136], index: 0, kind: input, shape index: {}]
  %s1 = inlined_call_operand.vmem [shape: f32[96,32], index: 1, kind: input, shape index: {}]
  %s2 = inlined_call_operand.vmem [shape: f32[96,1], index: 2, kind: input, shape index: {}]
  %s3 = inlined_call_operand.vmem [shape: f32[96,1], index: 3, kind: input, shape index: {}]
  %s4 = inlined_call_operand.vmem [shape: f32[1,96,3136], index: 4, kind: output, shape index: {}]
  %s5 = sld [smem:[#allocation0]]
  $region26: #{conv_bn_forward.1} parent=0
    _
  %s7 = ssub.s32 1, %s5
  %s8 = scalar_select 0, %s7, %s5
  // Predicated region
  $region2: #{conv_bn_forward.1} parent=0 // pred_check
    _
  $region3: #{conv_bn_forward.1} parent=0 // pred_check_branch
    %10 = sbr.rel (0) target = $region5
  $region4: #{conv_bn_forward.1} parent=0 // pred_region
    _
  $region5: #{conv_bn_forward.1} parent=0 // pred_fallthru
    _
  // Predicated region
  $region6: #{conv_bn_forward.1} parent=0 // pred_check
    _
  $region7: #{conv_bn_forward.1} parent=0 // pred_check_branch
    %12 = sbr.rel (0) target = $region9
  $region8: #{conv_bn_forward.1} parent=0 // pred_region
    _
  $region9: #{conv_bn_forward.1} parent=0 // pred_fallthru
    _
  // Predicated region
  $region10: #{conv_bn_forward.1} parent=0 // pred_check
    _
  $region11: #{conv_bn_forward.1} parent=0 // pred_check_branch
    %14 = sbr.rel (0) target = $region13
  $region12: #{conv_bn_forward.1} parent=0 // pred_region
    _
  $region13: #{conv_bn_forward.1} parent=0 // pred_fallthru
    _
  // Predicated region
  $region14: #{conv_bn_forward.1} parent=0 // pred_check
    _
  $region15: #{conv_bn_forward.1} parent=0 // pred_check_branch
    %16 = sbr.rel (0) target = $region17
  $region16: #{conv_bn_forward.1} parent=0 // pred_region
    _
  $region17: #{conv_bn_forward.1} parent=0 // pred_fallthru
    _
  %v17 = vld [vmem:[%s1] sm:$0xff]
  %v18 = vld [vmem:[%s1 + $0x8] sm:$0xff]
  %v19 = vld [vmem:[%s1 + $0x10] sm:$0xff]
  %v20 = vld [vmem:[%s1 + $0x18] sm:$0xff]
  %v21 = vld [vmem:[%s1 + $0x20] sm:$0xff]
  %v22 = vld [vmem:[%s1 + $0x28] sm:$0xff]
  %v23 = vld [vmem:[%s1 + $0x30] sm:$0xff]
  %v24 = vld [vmem:[%s1 + $0x38] sm:$0xff]
  %v25 = vld [vmem:[%s1 + $0x40] sm:$0xff]
  %v26 = vld [vmem:[%s1 + $0x48] sm:$0xff]
  %v27 = vld [vmem:[%s1 + $0x50] sm:$0xff]
  %v28 = vld [vmem:[%s1 + $0x58] sm:$0xff]
  %v29 = vld [vmem:[%s0] sm:$0xff]
  %v30 = vld [vmem:[%s0 + $0x8] sm:$0xff]
  %v31 = vld [vmem:[%s0 + $0x10] sm:$0xff]
  %v32 = vld [vmem:[%s0 + $0x18] sm:$0xff]
  %v33 = vld [vmem:[%s0 + $0x20] sm:$0xff]
  %v34 = vld [vmem:[%s0 + $0x28] sm:$0xff]
  %v35 = vld [vmem:[%s0 + $0x30] sm:$0xff]
  %v36 = vld [vmem:[%s0 + $0x38] sm:$0xff]
  %v37 = vld [vmem:[%s0 + $0x40] sm:$0xff]
  %v38 = vld [vmem:[%s0 + $0x48] sm:$0xff]
  %v39 = vld [vmem:[%s0 + $0x50] sm:$0xff]
  %v40 = vld [vmem:[%s0 + $0x58] sm:$0xff]
  %v41 = vld [vmem:[%s0 + $0x60] sm:$0xff]
  %v42 = vld [vmem:[%s0 + $0x68] sm:$0xff]
  %v43 = vld [vmem:[%s0 + $0x70] sm:$0xff]
  %v44 = vld [vmem:[%s0 + $0x78] sm:$0xff]
  %v45 = vld [vmem:[%s0 + $0x80] sm:$0xff]
  %v46 = vld [vmem:[%s0 + $0x88] sm:$0xff]
  %v47 = vld [vmem:[%s0 + $0x90] sm:$0xff]
  %v48 = vld [vmem:[%s0 + $0x98] sm:$0xff]
  %v49 = vld [vmem:[%s0 + $0xa0] sm:$0xff]
  %v50 = vld [vmem:[%s0 + $0xa8] sm:$0xff]
  %v51 = vld [vmem:[%s0 + $0xb0] sm:$0xff]
  %v52 = vld [vmem:[%s0 + $0xb8] sm:$0xff]
  %v53 = vld [vmem:[%s0 + $0xc0] sm:$0xff]
  %v54 = vld [vmem:[%s0 + $0xc8] sm:$0xff]
  %v55 = vld [vmem:[%s0 + $0xd0] sm:$0xff]
  %v56 = vld [vmem:[%s0 + $0xd8] sm:$0xff]
  %v57 = vld [vmem:[%s0 + $0xe0] sm:$0xff]
  %v58 = vld [vmem:[%s0 + $0xe8] sm:$0xff]
  %v59 = vld [vmem:[%s0 + $0xf0] sm:$0xff]
  %v60 = vld [vmem:[%s0 + $0xf8] sm:$0xff]
  %v61 = vld [vmem:[%s0 + $0x100] sm:$0xff]
  %v62 = vld [vmem:[%s0 + $0x108] sm:$0xff]
  %v63 = vld [vmem:[%s0 + $0x110] sm:$0xff]
  %v64 = vld [vmem:[%s0 + $0x118] sm:$0xff]
  %v65 = vld [vmem:[%s0 + $0x120] sm:$0xff]
  %v66 = vld [vmem:[%s0 + $0x128] sm:$0xff]
  %v67 = vld [vmem:[%s0 + $0x130] sm:$0xff]
  %v68 = vld [vmem:[%s0 + $0x138] sm:$0xff]
  %v69 = vld [vmem:[%s0 + $0x140] sm:$0xff]
  %v70 = vld [vmem:[%s0 + $0x148] sm:$0xff]
  %v71 = vld [vmem:[%s0 + $0x150] sm:$0xff]
  %v72 = vld [vmem:[%s0 + $0x158] sm:$0xff]
  %v73 = vld [vmem:[%s0 + $0x160] sm:$0xff]
  %v74 = vld [vmem:[%s0 + $0x168] sm:$0xff]
  %v75 = vld [vmem:[%s0 + $0x170] sm:$0xff]
  %v76 = vld [vmem:[%s0 + $0x178] sm:$0xff]
  %v77 = vld [vmem:[%s0 + $0x180] sm:$0xff]
  %v78 = vld [vmem:[%s0 + $0x188] sm:$0xff]
  %v79 = vld [vmem:[%s0 + $0x190] sm:$0xff]
  %v80 = vld [vmem:[%s0 + $0x198] sm:$0xff]
  %v81 = vld [vmem:[%s0 + $0x1a0] sm:$0xff]
  %v82 = vld [vmem:[%s0 + $0x1a8] sm:$0xff]
  %v83 = vld [vmem:[%s0 + $0x1b0] sm:$0xff]
  %v84 = vld [vmem:[%s0 + $0x1b8] sm:$0xff]
  %v85 = vld [vmem:[%s0 + $0x1c0] sm:$0xff]
  %v86 = vld [vmem:[%s0 + $0x1c8] sm:$0xff]
  %v87 = vld [vmem:[%s0 + $0x1d0] sm:$0xff]
  %v88 = vld [vmem:[%s0 + $0x1d8] sm:$0xff]
  %v89 = vld [vmem:[%s0 + $0x1e0] sm:$0xff]
  %v90 = vld [vmem:[%s0 + $0x1e8] sm:$0xff]
  %v91 = vld [vmem:[%s0 + $0x1f0] sm:$0xff]
  %v92 = vld [vmem:[%s0 + $0x1f8] sm:$0xff]
  %v93 = vld [vmem:[%s0 + $0x200] sm:$0xff]
  %v94 = vld [vmem:[%s0 + $0x208] sm:$0xff]
  %v95 = vld [vmem:[%s0 + $0x210] sm:$0xff]
  %v96 = vld [vmem:[%s0 + $0x218] sm:$0xff]
  %v97 = vld [vmem:[%s0 + $0x220] sm:$0xff]
  %v98 = vld [vmem:[%s0 + $0x228] sm:$0xff]
  %v99 = vld [vmem:[%s0 + $0x230] sm:$0xff]
  %v100 = vld [vmem:[%s0 + $0x238] sm:$0xff]
  %v101 = vld [vmem:[%s0 + $0x240] sm:$0xff]
  %v102 = vld [vmem:[%s0 + $0x248] sm:$0xff]
  %v103 = vld [vmem:[%s0 + $0x250] sm:$0xff]
  %v104 = vld [vmem:[%s0 + $0x258] sm:$0xff]
  %v105 = vld [vmem:[%s0 + $0x260] sm:$0xff]
  %v106 = vld [vmem:[%s0 + $0x268] sm:$0xff]
  %v107 = vld [vmem:[%s0 + $0x270] sm:$0xff]
  %v108 = vld [vmem:[%s0 + $0x278] sm:$0xff]
  %v109 = vld [vmem:[%s0 + $0x280] sm:$0xff]
  %v110 = vld [vmem:[%s0 + $0x288] sm:$0xff]
  %v111 = vld [vmem:[%s0 + $0x290] sm:$0xff]
  %v112 = vld [vmem:[%s0 + $0x298] sm:$0xff]
  %v113 = vld [vmem:[%s0 + $0x2a0] sm:$0xff]
  %v114 = vld [vmem:[%s0 + $0x2a8] sm:$0xff]
  %v115 = vld [vmem:[%s0 + $0x2b0] sm:$0xff]
  %v116 = vld [vmem:[%s0 + $0x2b8] sm:$0xff]
  %v117 = vld [vmem:[%s0 + $0x2c0] sm:$0xff]
  %v118 = vld [vmem:[%s0 + $0x2c8] sm:$0xff]
  %v119 = vld [vmem:[%s0 + $0x2d0] sm:$0xff]
  %v120 = vld [vmem:[%s0 + $0x2d8] sm:$0xff]
  %v121 = vld [vmem:[%s0 + $0x2e0] sm:$0xff]
  %v122 = vld [vmem:[%s0 + $0x2e8] sm:$0xff]
  %v123 = vld [vmem:[%s0 + $0x2f0] sm:$0xff]
  %v124 = vld [vmem:[%s0 + $0x2f8] sm:$0xff]
  %v125 = vld [vmem:[%s0 + $0x300] sm:$0xff]
  %v126 = vld [vmem:[%s0 + $0x308] sm:$0xff]
  %v127 = vld [vmem:[%s0 + $0x310] sm:$0xff]
  %v128 = vld [vmem:[%s0 + $0x318] sm:$0xff]
  %vm129 = vcmask 261120
  %v131 = vsel %vm129, %v17, 0
  %v134 = vsel %vm129, %v18, 0
  %v137 = vsel %vm129, %v19, 0
  %v140 = vsel %vm129, %v20, 0
  %v143 = vsel %vm129, %v21, 0
  %v146 = vsel %vm129, %v22, 0
  %v149 = vsel %vm129, %v23, 0
  %v152 = vsel %vm129, %v24, 0
  %v155 = vsel %vm129, %v25, 0
  %v158 = vsel %vm129, %v26, 0
  %v161 = vsel %vm129, %v27, 0
  %v164 = vsel %vm129, %v28, 0
  %166 = vmatprep.subr.mxu0 %v30
  %167 = vmatpush1.msra.mxu0 %v29
  %168 = vmatprep.subr.mxu0 %v55
  %169 = vmatpush1.msra.mxu0 %v54
  %170 = vmatprep.subr.mxu0 %v80
  %171 = vmatpush1.msra.mxu0 %v79
  %172 = vmatprep.subr.mxu0 %v105
  %173 = vmatpush1.msra.mxu0 %v104
  %174 = vmatprep.subr.mxu0 0.0
  %175 = vmatpush1.msra.mxu0 0.0
  %176 = vmatprep.subr.mxu0 0.0
  %177 = vmatpush1.msra.mxu0 0.0
  %178 = vmatprep.subr.mxu0 0.0
  %179 = vmatpush1.msra.mxu0 0.0
  %180 = vmatprep.subr.mxu0 0.0
  %181 = vmatpush1.msra.mxu0 0.0
  %182 = vmatprep.subr.mxu0 0.0
  %183 = vmatpush1.msra.mxu0 0.0
  %184 = vmatprep.subr.mxu0 0.0
  %185 = vmatpush1.msra.mxu0 0.0
  %186 = vmatprep.subr.mxu0 0.0
  %187 = vmatpush1.msra.mxu0 0.0
  %188 = vmatprep.subr.mxu0 0.0
  %189 = vmatpush1.msra.mxu0 0.0
  %190 = vmatprep.subr.mxu0 0.0
  %191 = vmatpush1.msra.mxu0 0.0
  %192 = vmatprep.subr.mxu0 0.0
  %193 = vmatpush1.msra.mxu0 0.0
  %194 = vmatprep.subr.mxu0 0.0
  %195 = vmatpush1.msra.mxu0 0.0
  %196 = vmatprep.subr.mxu0 0.0
  %197 = vmatpush1.msra.mxu0 0.0
  %198 = vmatprep.subr.mxu0 0.0
  %199 = vmatpush1.msra.mxu0 0.0
  %200 = vmatprep.subr.mxu0 0.0
  %201 = vmatpush1.msra.mxu0 0.0
  %202 = vmatprep.subr.mxu0 0.0
  %203 = vmatpush1.msra.mxu0 0.0
  %204 = vmatprep.subr.mxu0 0.0
  %205 = vmatpush1.msra.mxu0 0.0
  %206 = vmatprep.subr.mxu0 0.0
  %207 = vmatpush1.msra.mxu0 0.0
  %208 = vmatprep.subr.mxu0 0.0
  %209 = vmatpush1.msra.mxu0 0.0
  %210 = vmatprep.subr.mxu0 0.0
  %211 = vmatpush1.msra.mxu0 0.0
  %212 = vmatprep.subr.mxu0 0.0
  %213 = vmatpush1.msra.mxu0 0.0
  %214 = vmatprep.subr.mxu0 0.0
  %215 = vmatpush1.msra.mxu0 0.0
  %216 = vmatprep.subr.mxu0 0.0
  %217 = vmatpush1.msra.mxu0 0.0
  %218 = vmatprep.subr.mxu0 0.0
  %219 = vmatpush1.msra.mxu0 0.0
  %220 = vmatprep.subr.mxu0 0.0
  %221 = vmatpush1.msra.mxu0 0.0
  %222 = vmatprep.subr.mxu0 0.0
  %223 = vmatpush1.msra.mxu0 0.0
  %224 = vmatprep.subr.mxu0 0.0
  %225 = vmatpush1.msra.mxu0 0.0
  %226 = vmatprep.subr.mxu0 0.0
  %227 = vmatpush1.msra.mxu0 0.0
  %228 = vmatprep.subr.mxu0 0.0
  %229 = vmatpush1.msra.mxu0 0.0
  %230 = vmatprep.mubr.f32.mxu0 0.0
  %231 = vmatmul.mubr.f32.gmra.mrb[0].mxu0 %v131
  %v232 = vpop.f32.mrb[0].mxu0
  %v233 = vadd.f32 0.0, %v232
  %v234 = vpop.f32.mrb[0].mxu0
  %v235 = vadd.f32 0.0, %v234
  %236 = vmatprep.mubr.f32.mxu0 0.0
  %237 = vmatmul.mubr.f32.gmra.mrb[0].mxu0 %v134
  %v238 = vpop.f32.mrb[0].mxu0
  %v239 = vadd.f32 0.0, %v238
  %v240 = vpop.f32.mrb[0].mxu0
  %v241 = vadd.f32 0.0, %v240
  %242 = vmatprep.mubr.f32.mxu0 0.0
  %243 = vmatmul.mubr.f32.gmra.mrb[0].mxu0 %v137
  %v244 = vpop.f32.mrb[0].mxu0
  %v245 = vadd.f32 0.0, %v244
  %v246 = vpop.f32.mrb[0].mxu0
  %v247 = vadd.f32 0.0, %v246
  %248 = vmatprep.mubr.f32.mxu0 0.0
  %249 = vmatmul.mubr.f32.gmra.mrb[0].mxu0 %v140
  %v250 = vpop.f32.mrb[0].mxu0
  %v251 = vadd.f32 0.0, %v250
  %v252 = vpop.f32.mrb[0].mxu0
  %v253 = vadd.f32 0.0, %v252
  %254 = vmatprep.mubr.f32.mxu0 0.0
  %255 = vmatmul.mubr.f32.gmra.mrb[0].mxu0 %v143
  %v256 = vpop.f32.mrb[0].mxu0
  %v257 = vadd.f32 0.0, %v256
  %v258 = vpop.f32.mrb[0].mxu0
  %v259 = vadd.f32 0.0, %v258
  %260 = vmatprep.mubr.f32.mxu0 0.0
  %261 = vmatmul.mubr.f32.gmra.mrb[0].mxu0 %v146
  %v262 = vpop.f32.mrb[0].mxu0
  %v263 = vadd.f32 0.0, %v262
  %v264 = vpop.f32.mrb[0].mxu0
  %v265 = vadd.f32 0.0, %v264
  %266 = vmatprep.mubr.f32.mxu0 0.0
  %267 = vmatmul.mubr.f32.gmra.mrb[0].mxu0 %v149
  %v268 = vpop.f32.mrb[0].mxu0
  %v269 = vadd.f32 0.0, %v268
  %v270 = vpop.f32.mrb[0].mxu0
  %v271 = vadd.f32 0.0, %v270
  %272 = vmatprep.mubr.f32.mxu0 0.0
  %273 = vmatmul.mubr.f32.gmra.mrb[0].mxu0 %v152
  %v274 = vpop.f32.mrb[0].mxu0
  %v275 = vadd.f32 0.0, %v274
  %v276 = vpop.f32.mrb[0].mxu0
  %v277 = vadd.f32 0.0, %v276
  %278 = vmatprep.mubr.f32.mxu0 0.0
  %279 = vmatmul.mubr.f32.gmra.mrb[0].mxu0 %v155
  %v280 = vpop.f32.mrb[0].mxu0
  %v281 = vadd.f32 0.0, %v280
  %v282 = vpop.f32.mrb[0].mxu0
  %v283 = vadd.f32 0.0, %v282
  %284 = vmatprep.mubr.f32.mxu0 0.0
  %285 = vmatmul.mubr.f32.gmra.mrb[0].mxu0 %v158
  %v286 = vpop.f32.mrb[0].mxu0
  %v287 = vadd.f32 0.0, %v286
  %v288 = vpop.f32.mrb[0].mxu0
  %v289 = vadd.f32 0.0, %v288
  %290 = vmatprep.mubr.f32.mxu0 0.0
  %291 = vmatmul.mubr.f32.gmra.mrb[0].mxu0 %v161
  %v292 = vpop.f32.mrb[0].mxu0
  %v293 = vadd.f32 0.0, %v292
  %v294 = vpop.f32.mrb[0].mxu0
  %v295 = vadd.f32 0.0, %v294
  %296 = vmatprep.mubr.f32.mxu0 0.0
  %297 = vmatmul.mubr.f32.gmra.mrb[0].mxu0 %v164
  %v298 = vpop.f32.mrb[0].mxu0
  %v299 = vadd.f32 0.0, %v298
  %v300 = vpop.f32.mrb[0].mxu0
  %v301 = vadd.f32 0.0, %v300
  %302 = vdwg.mxu0
  %303 = vmatprep.subr.mxu0 %v32
  %304 = vmatpush1.msra.mxu0 %v31
  %305 = vmatprep.subr.mxu0 %v57
  %306 = vmatpush1.msra.mxu0 %v56
  %307 = vmatprep.subr.mxu0 %v82
  %308 = vmatpush1.msra.mxu0 %v81
  %309 = vmatprep.subr.mxu0 %v107
  %310 = vmatpush1.msra.mxu0 %v106
  %311 = vmatprep.subr.mxu0 0.0
  %312 = vmatpush1.msra.mxu0 0.0
  %313 = vmatprep.subr.mxu0 0.0
  %314 = vmatpush1.msra.mxu0 0.0
  %315 = vmatprep.subr.mxu0 0.0
  %316 = vmatpush1.msra.mxu0 0.0
  %317 = vmatprep.subr.mxu0 0.0
  %318 = vmatpush1.msra.mxu0 0.0
  %319 = vmatprep.subr.mxu0 0.0
  %320 = vmatpush1.msra.mxu0 0.0
  %321 = vmatprep.subr.mxu0 0.0
  %322 = vmatpush1.msra.mxu0 0.0
  %323 = vmatprep.subr.mxu0 0.0
  %324 = vmatpush1.msra.mxu0 0.0
  %325 = vmatprep.subr.mxu0 0.0
  %326 = vmatpush1.msra.mxu0 0.0
  %327 = vmatprep.subr.mxu0 0.0
  %328 = vmatpush1.msra.mxu0 0.0
  %329 = vmatprep.subr.mxu0 0.0
  %330 = vmatpush1.msra.mxu0 0.0
  %331 = vmatprep.subr.mxu0 0.0
  %332 = vmatpush1.msra.mxu0 0.0
  %333 = vmatprep.subr.mxu0 0.0
  %334 = vmatpush1.msra.mxu0 0.0
  %335 = vmatprep.subr.mxu0 0.0
  %336 = vmatpush1.msra.mxu0 0.0
  %337 = vmatprep.subr.mxu0 0.0
  %338 = vmatpush1.msra.mxu0 0.0
  %339 = vmatprep.subr.mxu0 0.0
  %340 = vmatpush1.msra.mxu0 0.0
  %341 = vmatprep.subr.mxu0 0.0
  %342 = vmatpush1.msra.mxu0 0.0
  %343 = vmatprep.subr.mxu0 0.0
  %344 = vmatpush1.msra.mxu0 0.0
  %345 = vmatprep.subr.mxu0 0.0
  %346 = vmatpush1.msra.mxu0 0.0
  %347 = vmatprep.subr.mxu0 0.0
  %348 = vmatpush1.msra.mxu0 0.0
  %349 = vmatprep.subr.mxu0 0.0
  %350 = vmatpush1.msra.mxu0 0.0
  %351 = vmatprep.subr.mxu0 0.0
  %352 = vmatpush1.msra.mxu0 0.0
  %353 = vmatprep.subr.mxu0 0.0
  %354 = vmatpush1.msra.mxu0 0.0
  %355 = vmatprep.subr.mxu0 0.0
  %356 = vmatpush1.msra.mxu0 0.0
  %357 = vmatprep.subr.mxu0 0.0
  %358 = vmatpush1.msra.mxu0 0.0
  %359 = vmatprep.subr.mxu0 0.0
  %360 = vmatpush1.msra.mxu0 0.0
  %361 = vmatprep.subr.mxu0 0.0
  %362 = vmatpush1.msra.mxu0 0.0
  %363 = vmatprep.subr.mxu0 0.0
  %364 = vmatpush1.msra.mxu0 0.0
  %365 = vmatprep.subr.mxu0 0.0
  %366 = vmatpush1.msra.mxu0 0.0
  %367 = vmatprep.mubr.f32.mxu0 0.0
  %368 = vmatmul.mubr.f32.gmra.mrb[0].mxu0 %v131
  %v369 = vpop.f32.mrb[0].mxu0
  %v370 = vadd.f32 0.0, %v369
  %v371 = vpop.f32.mrb[0].mxu0
  %v372 = vadd.f32 0.0, %v371
  %373 = vmatprep.mubr.f32.mxu0 0.0
  %374 = vmatmul.mubr.f32.gmra.mrb[0].mxu0 %v134
  %v375 = vpop.f32.mrb[0].mxu0
  %v376 = vadd.f32 0.0, %v375
  %v377 = vpop.f32.mrb[0].mxu0
  %v378 = vadd.f32 0.0, %v377
  %379 = vmatprep.mubr.f32.mxu0 0.0
  %380 = vmatmul.mubr.f32.gmra.mrb[0].mxu0 %v137
  %v381 = vpop.f32.mrb[0].mxu0
  %v382 = vadd.f32 0.0, %v381
  %v383 = vpop.f32.mrb[0].mxu0
  %v384 = vadd.f32 0.0, %v383
  %385 = vmatprep.mubr.f32.mxu0 0.0
  %386 = vmatmul.mubr.f32.gmra.mrb[0].mxu0 %v140
  %v387 = vpop.f32.mrb[0].mxu0
  %v388 = vadd.f32 0.0, %v387
  %v389 = vpop.f32.mrb[0].mxu0
  %v390 = vadd.f32 0.0, %v389
  %391 = vmatprep.mubr.f32.mxu0 0.0
  %392 = vmatmul.mubr.f32.gmra.mrb[0].mxu0 %v143
  %v393 = vpop.f32.mrb[0].mxu0
  %v394 = vadd.f32 0.0, %v393
  %v395 = vpop.f32.mrb[0].mxu0
  %v396 = vadd.f32 0.0, %v395
  %397 = vmatprep.mubr.f32.mxu0 0.0
  %398 = vmatmul.mubr.f32.gmra.mrb[0].mxu0 %v146
  %v399 = vpop.f32.mrb[0].mxu0
  %v400 = vadd.f32 0.0, %v399
  %v401 = vpop.f32.mrb[0].mxu0
  %v402 = vadd.f32 0.0, %v401
  %403 = vmatprep.mubr.f32.mxu0 0.0
  %404 = vmatmul.mubr.f32.gmra.mrb[0].mxu0 %v149
  %v405 = vpop.f32.mrb[0].mxu0
  %v406 = vadd.f32 0.0, %v405
  %v407 = vpop.f32.mrb[0].mxu0
  %v408 = vadd.f32 0.0, %v407
  %409 = vmatprep.mubr.f32.mxu0 0.0
  %410 = vmatmul.mubr.f32.gmra.mrb[0].mxu0 %v152
  %v411 = vpop.f32.mrb[0].mxu0
  %v412 = vadd.f32 0.0, %v411
  %v413 = vpop.f32.mrb[0].mxu0
  %v414 = vadd.f32 0.0, %v413
  %415 = vmatprep.mubr.f32.mxu0 0.0
  %416 = vmatmul.mubr.f32.gmra.mrb[0].mxu0 %v155
  %v417 = vpop.f32.mrb[0].mxu0
  %v418 = vadd.f32 0.0, %v417
  %v419 = vpop.f32.mrb[0].mxu0
  %v420 = vadd.f32 0.0, %v419
  %421 = vmatprep.mubr.f32.mxu0 0.0
  %422 = vmatmul.mubr.f32.gmra.mrb[0].mxu0 %v158
  %v423 = vpop.f32.mrb[0].mxu0
  %v424 = vadd.f32 0.0, %v423
  %v425 = vpop.f32.mrb[0].mxu0
  %v426 = vadd.f32 0.0, %v425
  %427 = vmatprep.mubr.f32.mxu0 0.0
  %428 = vmatmul.mubr.f32.gmra.mrb[0].mxu0 %v161
  %v429 = vpop.f32.mrb[0].mxu0
  %v430 = vadd.f32 0.0, %v429
  %v431 = vpop.f32.mrb[0].mxu0
  %v432 = vadd.f32 0.0, %v431
  %433 = vmatprep.mubr.f32.mxu0 0.0
  %434 = vmatmul.mubr.f32.gmra.mrb[0].mxu0 %v164
  %v435 = vpop.f32.mrb[0].mxu0
  %v436 = vadd.f32 0.0, %v435
  %v437 = vpop.f32.mrb[0].mxu0
  %v438 = vadd.f32 0.0, %v437
  %439 = vdwg.mxu0
  %440 = vmatprep.subr.mxu0 %v34
  %441 = vmatpush1.msra.mxu0 %v33
  %442 = vmatprep.subr.mxu0 %v59
  %443 = vmatpush1.msra.mxu0 %v58
  %444 = vmatprep.subr.mxu0 %v84
  %445 = vmatpush1.msra.mxu0 %v83
  %446 = vmatprep.subr.mxu0 %v109
  %447 = vmatpush1.msra.mxu0 %v108
  %448 = vmatprep.subr.mxu0 0.0
  %449 = vmatpush1.msra.mxu0 0.0
  %450 = vmatprep.subr.mxu0 0.0
  %451 = vmatpush1.msra.mxu0 0.0
  %452 = vmatprep.subr.mxu0 0.0
  %453 = vmatpush1.msra.mxu0 0.0
  %454 = vmatprep.subr.mxu0 0.0
  %455 = vmatpush1.msra.mxu0 0.0
  %456 = vmatprep.subr.mxu0 0.0
  %457 = vmatpush1.msra.mxu0 0.0
  %458 = vmatprep.subr.mxu0 0.0
  %459 = vmatpush1.msra.mxu0 0.0
  %460 = vmatprep.subr.mxu0 0.0
  %461 = vmatpush1.msra.mxu0 0.0
  %462 = vmatprep.subr.mxu0 0.0
  %463 = vmatpush1.msra.mxu0 0.0
  %464 = vmatprep.subr.mxu0 0.0
  %465 = vmatpush1.msra.mxu0 0.0
  %466 = vmatprep.subr.mxu0 0.0
  %467 = vmatpush1.msra.mxu0 0.0
  %468 = vmatprep.subr.mxu0 0.0
  %469 = vmatpush1.msra.mxu0 0.0
  %470 = vmatprep.subr.mxu0 0.0
  %471 = vmatpush1.msra.mxu0 0.0
  %472 = vmatprep.subr.mxu0 0.0
  %473 = vmatpush1.msra.mxu0 0.0
  %474 = vmatprep.subr.mxu0 0.0
  %475 = vmatpush1.msra.mxu0 0.0
  %476 = vmatprep.subr.mxu0 0.0
  %477 = vmatpush1.msra.mxu0 0.0
  %478 = vmatprep.subr.mxu0 0.0
  %479 = vmatpush1.msra.mxu0 0.0
  %480 = vmatprep.subr.mxu0 0.0
  %481 = vmatpush1.msra.mxu0 0.0
  %482 = vmatprep.subr.mxu0 0.0
  %483 = vmatpush1.msra.mxu0 0.0
  %484 = vmatprep.subr.mxu0 0.0
  %485 = vmatpush1.msra.mxu0 0.0
  %486 = vmatprep.subr.mxu0 0.0
  %487 = vmatpush1.msra.mxu0 0.0
  %488 = vmatprep.subr.mxu0 0.0
  %489 = vmatpush1.msra.mxu0 0.0
  %490 = vmatprep.subr.mxu0 0.0
  %491 = vmatpush1.msra.mxu0 0.0
  %492 = vmatprep.subr.mxu0 0.0
  %493 = vmatpush1.msra.mxu0 0.0
  %494 = vmatprep.subr.mxu0 0.0
  %495 = vmatpush1.msra.mxu0 0.0
  %496 = vmatprep.subr.mxu0 0.0
  %497 = vmatpush1.msra.mxu0 0.0
  %498 = vmatprep.subr.mxu0 0.0
  %499 = vmatpush1.msra.mxu0 0.0
  %500 = vmatprep.subr.mxu0 0.0
  %501 = vmatpush1.msra.mxu0 0.0
  %502 = vmatprep.subr.mxu0 0.0
  %503 = vmatpush1.msra.mxu0 0.0
  %504 = vmatprep.mubr.f32.mxu0 0.0
  %505 = vmatmul.mubr.f32.gmra.mrb[0].mxu0 %v131
  %v506 = vpop.f32.mrb[0].mxu0
  %v507 = vadd.f32 0.0, %v506
  %v508 = vpop.f32.mrb[0].mxu0
  %v509 = vadd.f32 0.0, %v508
  %510 = vmatprep.mubr.f32.mxu0 0.0
  %511 = vmatmul.mubr.f32.gmra.mrb[0].mxu0 %v134
  %v512 = vpop.f32.mrb[0].mxu0
  %v513 = vadd.f32 0.0, %v512
  %v514 = vpop.f32.mrb[0].mxu0
  %v515 = vadd.f32 0.0, %v514
  %516 = vmatprep.mubr.f32.mxu0 0.0
  %517 = vmatmul.mubr.f32.gmra.mrb[0].mxu0 %v137
  %v518 = vpop.f32.mrb[0].mxu0
  %v519 = vadd.f32 0.0, %v518
  %v520 = vpop.f32.mrb[0].mxu0
  %v521 = vadd.f32 0.0, %v520
  %522 = vmatprep.mubr.f32.mxu0 0.0
  %523 = vmatmul.mubr.f32.gmra.mrb[0].mxu0 %v140
  %v524 = vpop.f32.mrb[0].mxu0
  %v525 = vadd.f32 0.0, %v524
  %v526 = vpop.f32.mrb[0].mxu0
  %v527 = vadd.f32 0.0, %v526
  %528 = vmatprep.mubr.f32.mxu0 0.0
  %529 = vmatmul.mubr.f32.gmra.mrb[0].mxu0 %v143
  %v530 = vpop.f32.mrb[0].mxu0
  %v531 = vadd.f32 0.0, %v530
  %v532 = vpop.f32.mrb[0].mxu0
  %v533 = vadd.f32 0.0, %v532
  %534 = vmatprep.mubr.f32.mxu0 0.0
  %535 = vmatmul.mubr.f32.gmra.mrb[0].mxu0 %v146
  %v536 = vpop.f32.mrb[0].mxu0
  %v537 = vadd.f32 0.0, %v536
  %v538 = vpop.f32.mrb[0].mxu0
  %v539 = vadd.f32 0.0, %v538
  %540 = vmatprep.mubr.f32.mxu0 0.0
  %541 = vmatmul.mubr.f32.gmra.mrb[0].mxu0 %v149
  %v542 = vpop.f32.mrb[0].mxu0
  %v543 = vadd.f32 0.0, %v542
  %v544 = vpop.f32.mrb[0].mxu0
  %v545 = vadd.f32 0.0, %v544
  %546 = vmatprep.mubr.f32.mxu0 0.0
  %547 = vmatmul.mubr.f32.gmra.mrb[0].mxu0 %v152
  %v548 = vpop.f32.mrb[0].mxu0
  %v549 = vadd.f32 0.0, %v548
  %v550 = vpop.f32.mrb[0].mxu0
  %v551 = vadd.f32 0.0, %v550
  %552 = vmatprep.mubr.f32.mxu0 0.0
  %553 = vmatmul.mubr.f32.gmra.mrb[0].mxu0 %v155
  %v554 = vpop.f32.mrb[0].mxu0
  %v555 = vadd.f32 0.0, %v554
  %v556 = vpop.f32.mrb[0].mxu0
  %v557 = vadd.f32 0.0, %v556
  %558 = vmatprep.mubr.f32.mxu0 0.0
  %559 = vmatmul.mubr.f32.gmra.mrb[0].mxu0 %v158
  %v560 = vpop.f32.mrb[0].mxu0
  %v561 = vadd.f32 0.0, %v560
  %v562 = vpop.f32.mrb[0].mxu0
  %v563 = vadd.f32 0.0, %v562
  %564 = vmatprep.mubr.f32.mxu0 0.0
  %565 = vmatmul.mubr.f32.gmra.mrb[0].mxu0 %v161
  %v566 = vpop.f32.mrb[0].mxu0
  %v567 = vadd.f32 0.0, %v566
  %v568 = vpop.f32.mrb[0].mxu0
  %v569 = vadd.f32 0.0, %v568
  %570 = vmatprep.mubr.f32.mxu0 0.0
  %571 = vmatmul.mubr.f32.gmra.mrb[0].mxu0 %v164
  %v572 = vpop.f32.mrb[0].mxu0
  %v573 = vadd.f32 0.0, %v572
  %v574 = vpop.f32.mrb[0].mxu0
  %v575 = vadd.f32 0.0, %v574
  %576 = vdwg.mxu0
  %577 = vmatprep.subr.mxu0 %v36
  %578 = vmatpush1.msra.mxu0 %v35
  %579 = vmatprep.subr.mxu0 %v61
  %580 = vmatpush1.msra.mxu0 %v60
  %581 = vmatprep.subr.mxu0 %v86
  %582 = vmatpush1.msra.mxu0 %v85
  %583 = vmatprep.subr.mxu0 %v111
  %584 = vmatpush1.msra.mxu0 %v110
  %585 = vmatprep.subr.mxu0 0.0
  %586 = vmatpush1.msra.mxu0 0.0
  %587 = vmatprep.subr.mxu0 0.0
  %588 = vmatpush1.msra.mxu0 0.0
  %589 = vmatprep.subr.mxu0 0.0
  %590 = vmatpush1.msra.mxu0 0.0
  %591 = vmatprep.subr.mxu0 0.0
  %592 = vmatpush1.msra.mxu0 0.0
  %593 = vmatprep.subr.mxu0 0.0
  %594 = vmatpush1.msra.mxu0 0.0
  %595 = vmatprep.subr.mxu0 0.0
  %596 = vmatpush1.msra.mxu0 0.0
  %597 = vmatprep.subr.mxu0 0.0
  %598 = vmatpush1.msra.mxu0 0.0
  %599 = vmatprep.subr.mxu0 0.0
  %600 = vmatpush1.msra.mxu0 0.0
  %601 = vmatprep.subr.mxu0 0.0
  %602 = vmatpush1.msra.mxu0 0.0
  %603 = vmatprep.subr.mxu0 0.0
  %604 = vmatpush1.msra.mxu0 0.0
  %605 = vmatprep.subr.mxu0 0.0
  %606 = vmatpush1.msra.mxu0 0.0
  %607 = vmatprep.subr.mxu0 0.0
  %608 = vmatpush1.msra.mxu0 0.0
  %609 = vmatprep.subr.mxu0 0.0
  %610 = vmatpush1.msra.mxu0 0.0
  %611 = vmatprep.subr.mxu0 0.0
  %612 = vmatpush1.msra.mxu0 0.0
  %613 = vmatprep.subr.mxu0 0.0
  %614 = vmatpush1.msra.mxu0 0.0
  %615 = vmatprep.subr.mxu0 0.0
  %616 = vmatpush1.msra.mxu0 0.0
  %617 = vmatprep.subr.mxu0 0.0
  %618 = vmatpush1.msra.mxu0 0.0
  %619 = vmatprep.subr.mxu0 0.0
  %620 = vmatpush1.msra.mxu0 0.0
  %621 = vmatprep.subr.mxu0 0.0
  %622 = vmatpush1.msra.mxu0 0.0
  %623 = vmatprep.subr.mxu0 0.0
  %624 = vmatpush1.msra.mxu0 0.0
  %625 = vmatprep.subr.mxu0 0.0
  %626 = vmatpush1.msra.mxu0 0.0
  %627 = vmatprep.subr.mxu0 0.0
  %628 = vmatpush1.msra.mxu0 0.0
  %629 = vmatprep.subr.mxu0 0.0
  %630 = vmatpush1.msra.mxu0 0.0
  %631 = vmatprep.subr.mxu0 0.0
  %632 = vmatpush1.msra.mxu0 0.0
  %633 = vmatprep.subr.mxu0 0.0
  %634 = vmatpush1.msra.mxu0 0.0
  %635 = vmatprep.subr.mxu0 0.0
  %636 = vmatpush1.msra.mxu0 0.0
  %637 = vmatprep.subr.mxu0 0.0
  %638 = vmatpush1.msra.mxu0 0.0
  %639 = vmatprep.subr.mxu0 0.0
  %640 = vmatpush1.msra.mxu0 0.0
  %641 = vmatprep.mubr.f32.mxu0 0.0
  %642 = vmatmul.mubr.f32.gmra.mrb[0].mxu0 %v131
  %v643 = vpop.f32.mrb[0].mxu0
  %v644 = vadd.f32 0.0, %v643
  %v645 = vpop.f32.mrb[0].mxu0
  %v646 = vadd.f32 0.0, %v645
  %647 = vmatprep.mubr.f32.mxu0 0.0
  %648 = vmatmul.mubr.f32.gmra.mrb[0].mxu0 %v134
  %v649 = vpop.f32.mrb[0].mxu0
  %v650 = vadd.f32 0.0, %v649
  %v651 = vpop.f32.mrb[0].mxu0
  %v652 = vadd.f32 0.0, %v651
  %653 = vmatprep.mubr.f32.mxu0 0.0
  %654 = vmatmul.mubr.f32.gmra.mrb[0].mxu0 %v137
  %v655 = vpop.f32.mrb[0].mxu0
  %v656 = vadd.f32 0.0, %v655
  %v657 = vpop.f32.mrb[0].mxu0
  %v658 = vadd.f32 0.0, %v657
  %659 = vmatprep.mubr.f32.mxu0 0.0
  %660 = vmatmul.mubr.f32.gmra.mrb[0].mxu0 %v140
  %v661 = vpop.f32.mrb[0].mxu0
  %v662 = vadd.f32 0.0, %v661
  %v663 = vpop.f32.mrb[0].mxu0
  %v664 = vadd.f32 0.0, %v663
  %665 = vmatprep.mubr.f32.mxu0 0.0
  %666 = vmatmul.mubr.f32.gmra.mrb[0].mxu0 %v143
  %v667 = vpop.f32.mrb[0].mxu0
  %v668 = vadd.f32 0.0, %v667
  %v669 = vpop.f32.mrb[0].mxu0
  %v670 = vadd.f32 0.0, %v669
  %671 = vmatprep.mubr.f32.mxu0 0.0
  %672 = vmatmul.mubr.f32.gmra.mrb[0].mxu0 %v146
  %v673 = vpop.f32.mrb[0].mxu0
  %v674 = vadd.f32 0.0, %v673
  %v675 = vpop.f32.mrb[0].mxu0
  %v676 = vadd.f32 0.0, %v675
  %677 = vmatprep.mubr.f32.mxu0 0.0
  %678 = vmatmul.mubr.f32.gmra.mrb[0].mxu0 %v149
  %v679 = vpop.f32.mrb[0].mxu0
  %v680 = vadd.f32 0.0, %v679
  %v681 = vpop.f32.mrb[0].mxu0
  %v682 = vadd.f32 0.0, %v681
  %683 = vmatprep.mubr.f32.mxu0 0.0
  %684 = vmatmul.mubr.f32.gmra.mrb[0].mxu0 %v152
  %v685 = vpop.f32.mrb[0].mxu0
  %v686 = vadd.f32 0.0, %v685
  %v687 = vpop.f32.mrb[0].mxu0
  %v688 = vadd.f32 0.0, %v687
  %689 = vmatprep.mubr.f32.mxu0 0.0
  %690 = vmatmul.mubr.f32.gmra.mrb[0].mxu0 %v155
  %v691 = vpop.f32.mrb[0].mxu0
  %v692 = vadd.f32 0.0, %v691
  %v693 = vpop.f32.mrb[0].mxu0
  %v694 = vadd.f32 0.0, %v693
  %695 = vmatprep.mubr.f32.mxu0 0.0
  %696 = vmatmul.mubr.f32.gmra.mrb[0].mxu0 %v158
  %v697 = vpop.f32.mrb[0].mxu0
  %v698 = vadd.f32 0.0, %v697
  %v699 = vpop.f32.mrb[0].mxu0
  %v700 = vadd.f32 0.0, %v699
  %701 = vmatprep.mubr.f32.mxu0 0.0
  %702 = vmatmul.mubr.f32.gmra.mrb[0].mxu0 %v161
  %v703 = vpop.f32.mrb[0].mxu0
  %v704 = vadd.f32 0.0, %v703
  %v705 = vpop.f32.mrb[0].mxu0
  %v706 = vadd.f32 0.0, %v705
  %707 = vmatprep.mubr.f32.mxu0 0.0
  %708 = vmatmul.mubr.f32.gmra.mrb[0].mxu0 %v164
  %v709 = vpop.f32.mrb[0].mxu0
  %v710 = vadd.f32 0.0, %v709
  %v711 = vpop.f32.mrb[0].mxu0
  %v712 = vadd.f32 0.0, %v711
  %713 = vdwg.mxu0
  %714 = vmatprep.subr.mxu0 %v38
  %715 = vmatpush1.msra.mxu0 %v37
  %716 = vmatprep.subr.mxu0 %v63
  %717 = vmatpush1.msra.mxu0 %v62
  %718 = vmatprep.subr.mxu0 %v88
  %719 = vmatpush1.msra.mxu0 %v87
  %720 = vmatprep.subr.mxu0 %v113
  %721 = vmatpush1.msra.mxu0 %v112
  %722 = vmatprep.subr.mxu0 0.0
  %723 = vmatpush1.msra.mxu0 0.0
  %724 = vmatprep.subr.mxu0 0.0
  %725 = vmatpush1.msra.mxu0 0.0
  %726 = vmatprep.subr.mxu0 0.0
  %727 = vmatpush1.msra.mxu0 0.0
  %728 = vmatprep.subr.mxu0 0.0
  %729 = vmatpush1.msra.mxu0 0.0
  %730 = vmatprep.subr.mxu0 0.0
  %731 = vmatpush1.msra.mxu0 0.0
  %732 = vmatprep.subr.mxu0 0.0
  %733 = vmatpush1.msra.mxu0 0.0
  %734 = vmatprep.subr.mxu0 0.0
  %735 = vmatpush1.msra.mxu0 0.0
  %736 = vmatprep.subr.mxu0 0.0
  %737 = vmatpush1.msra.mxu0 0.0
  %738 = vmatprep.subr.mxu0 0.0
  %739 = vmatpush1.msra.mxu0 0.0
  %740 = vmatprep.subr.mxu0 0.0
  %741 = vmatpush1.msra.mxu0 0.0
  %742 = vmatprep.subr.mxu0 0.0
  %743 = vmatpush1.msra.mxu0 0.0
  %744 = vmatprep.subr.mxu0 0.0
  %745 = vmatpush1.msra.mxu0 0.0
  %746 = vmatprep.subr.mxu0 0.0
  %747 = vmatpush1.msra.mxu0 0.0
  %748 = vmatprep.subr.mxu0 0.0
  %749 = vmatpush1.msra.mxu0 0.0
  %750 = vmatprep.subr.mxu0 0.0
  %751 = vmatpush1.msra.mxu0 0.0
  %752 = vmatprep.subr.mxu0 0.0
  %753 = vmatpush1.msra.mxu0 0.0
  %754 = vmatprep.subr.mxu0 0.0
  %755 = vmatpush1.msra.mxu0 0.0
  %756 = vmatprep.subr.mxu0 0.0
  %757 = vmatpush1.msra.mxu0 0.0
  %758 = vmatprep.subr.mxu0 0.0
  %759 = vmatpush1.msra.mxu0 0.0
  %760 = vmatprep.subr.mxu0 0.0
  %761 = vmatpush1.msra.mxu0 0.0
  %762 = vmatprep.subr.mxu0 0.0
  %763 = vmatpush1.msra.mxu0 0.0
  %764 = vmatprep.subr.mxu0 0.0
  %765 = vmatpush1.msra.mxu0 0.0
  %766 = vmatprep.subr.mxu0 0.0
  %767 = vmatpush1.msra.mxu0 0.0
  %768 = vmatprep.subr.mxu0 0.0
  %769 = vmatpush1.msra.mxu0 0.0
  %770 = vmatprep.subr.mxu0 0.0
  %771 = vmatpush1.msra.mxu0 0.0
  %772 = vmatprep.subr.mxu0 0.0
  %773 = vmatpush1.msra.mxu0 0.0
  %774 = vmatprep.subr.mxu0 0.0
  %775 = vmatpush1.msra.mxu0 0.0
  %776 = vmatprep.subr.mxu0 0.0
  %777 = vmatpush1.msra.mxu0 0.0
  %778 = vmatprep.mubr.f32.mxu0 0.0
  %779 = vmatmul.mubr.f32.gmra.mrb[0].mxu0 %v131
  %v780 = vpop.f32.mrb[0].mxu0
  %v781 = vadd.f32 0.0, %v780
  %v782 = vpop.f32.mrb[0].mxu0
  %v783 = vadd.f32 0.0, %v782
  %784 = vmatprep.mubr.f32.mxu0 0.0
  %785 = vmatmul.mubr.f32.gmra.mrb[0].mxu0 %v134
  %v786 = vpop.f32.mrb[0].mxu0
  %v787 = vadd.f32 0.0, %v786
  %v788 = vpop.f32.mrb[0].mxu0
  %v789 = vadd.f32 0.0, %v788
  %790 = vmatprep.mubr.f32.mxu0 0.0
  %791 = vmatmul.mubr.f32.gmra.mrb[0].mxu0 %v137
  %v792 = vpop.f32.mrb[0].mxu0
  %v793 = vadd.f32 0.0, %v792
  %v794 = vpop.f32.mrb[0].mxu0
  %v795 = vadd.f32 0.0, %v794
  %796 = vmatprep.mubr.f32.mxu0 0.0
  %797 = vmatmul.mubr.f32.gmra.mrb[0].mxu0 %v140
  %v798 = vpop.f32.mrb[0].mxu0
  %v799 = vadd.f32 0.0, %v798
  %v800 = vpop.f32.mrb[0].mxu0
  %v801 = vadd.f32 0.0, %v800
  %802 = vmatprep.mubr.f32.mxu0 0.0
  %803 = vmatmul.mubr.f32.gmra.mrb[0].mxu0 %v143
  %v804 = vpop.f32.mrb[0].mxu0
  %v805 = vadd.f32 0.0, %v804
  %v806 = vpop.f32.mrb[0].mxu0
  %v807 = vadd.f32 0.0, %v806
  %808 = vmatprep.mubr.f32.mxu0 0.0
  %809 = vmatmul.mubr.f32.gmra.mrb[0].mxu0 %v146
  %v810 = vpop.f32.mrb[0].mxu0
  %v811 = vadd.f32 0.0, %v810
  %v812 = vpop.f32.mrb[0].mxu0
  %v813 = vadd.f32 0.0, %v812
  %814 = vmatprep.mubr.f32.mxu0 0.0
  %815 = vmatmul.mubr.f32.gmra.mrb[0].mxu0 %v149
  %v816 = vpop.f32.mrb[0].mxu0
  %v817 = vadd.f32 0.0, %v816
  %v818 = vpop.f32.mrb[0].mxu0
  %v819 = vadd.f32 0.0, %v818
  %820 = vmatprep.mubr.f32.mxu0 0.0
  %821 = vmatmul.mubr.f32.gmra.mrb[0].mxu0 %v152
  %v822 = vpop.f32.mrb[0].mxu0
  %v823 = vadd.f32 0.0, %v822
  %v824 = vpop.f32.mrb[0].mxu0
  %v825 = vadd.f32 0.0, %v824
  %826 = vmatprep.mubr.f32.mxu0 0.0
  %827 = vmatmul.mubr.f32.gmra.mrb[0].mxu0 %v155
  %v828 = vpop.f32.mrb[0].mxu0
  %v829 = vadd.f32 0.0, %v828
  %v830 = vpop.f32.mrb[0].mxu0
  %v831 = vadd.f32 0.0, %v830
  %832 = vmatprep.mubr.f32.mxu0 0.0
  %833 = vmatmul.mubr.f32.gmra.mrb[0].mxu0 %v158
  %v834 = vpop.f32.mrb[0].mxu0
  %v835 = vadd.f32 0.0, %v834
  %v836 = vpop.f32.mrb[0].mxu0
  %v837 = vadd.f32 0.0, %v836
  %838 = vmatprep.mubr.f32.mxu0 0.0
  %839 = vmatmul.mubr.f32.gmra.mrb[0].mxu0 %v161
  %v840 = vpop.f32.mrb[0].mxu0
  %v841 = vadd.f32 0.0, %v840
  %v842 = vpop.f32.mrb[0].mxu0
  %v843 = vadd.f32 0.0, %v842
  %844 = vmatprep.mubr.f32.mxu0 0.0
  %845 = vmatmul.mubr.f32.gmra.mrb[0].mxu0 %v164
  %v846 = vpop.f32.mrb[0].mxu0
  %v847 = vadd.f32 0.0, %v846
  %v848 = vpop.f32.mrb[0].mxu0
  %v849 = vadd.f32 0.0, %v848
  %850 = vdwg.mxu0
  %851 = vmatprep.subr.mxu0 %v40
  %852 = vmatpush1.msra.mxu0 %v39
  %853 = vmatprep.subr.mxu0 %v65
  %854 = vmatpush1.msra.mxu0 %v64
  %855 = vmatprep.subr.mxu0 %v90
  %856 = vmatpush1.msra.mxu0 %v89
  %857 = vmatprep.subr.mxu0 %v115
  %858 = vmatpush1.msra.mxu0 %v114
  %859 = vmatprep.subr.mxu0 0.0
  %860 = vmatpush1.msra.mxu0 0.0
  %861 = vmatprep.subr.mxu0 0.0
  %862 = vmatpush1.msra.mxu0 0.0
  %863 = vmatprep.subr.mxu0 0.0
  %864 = vmatpush1.msra.mxu0 0.0
  %865 = vmatprep.subr.mxu0 0.0
  %866 = vmatpush1.msra.mxu0 0.0
  %867 = vmatprep.subr.mxu0 0.0
  %868 = vmatpush1.msra.mxu0 0.0
  %869 = vmatprep.subr.mxu0 0.0
  %870 = vmatpush1.msra.mxu0 0.0
  %871 = vmatprep.subr.mxu0 0.0
  %872 = vmatpush1.msra.mxu0 0.0
  %873 = vmatprep.subr.mxu0 0.0
  %874 = vmatpush1.msra.mxu0 0.0
  %875 = vmatprep.subr.mxu0 0.0
  %876 = vmatpush1.msra.mxu0 0.0
  %877 = vmatprep.subr.mxu0 0.0
  %878 = vmatpush1.msra.mxu0 0.0
  %879 = vmatprep.subr.mxu0 0.0
  %880 = vmatpush1.msra.mxu0 0.0
  %881 = vmatprep.subr.mxu0 0.0
  %882 = vmatpush1.msra.mxu0 0.0
  %883 = vmatprep.subr.mxu0 0.0
  %884 = vmatpush1.msra.mxu0 0.0
  %885 = vmatprep.subr.mxu0 0.0
  %886 = vmatpush1.msra.mxu0 0.0
  %887 = vmatprep.subr.mxu0 0.0
  %888 = vmatpush1.msra.mxu0 0.0
  %889 = vmatprep.subr.mxu0 0.0
  %890 = vmatpush1.msra.mxu0 0.0
  %891 = vmatprep.subr.mxu0 0.0
  %892 = vmatpush1.msra.mxu0 0.0
  %893 = vmatprep.subr.mxu0 0.0
  %894 = vmatpush1.msra.mxu0 0.0
  %895 = vmatprep.subr.mxu0 0.0
  %896 = vmatpush1.msra.mxu0 0.0
  %897 = vmatprep.subr.mxu0 0.0
  %898 = vmatpush1.msra.mxu0 0.0
  %899 = vmatprep.subr.mxu0 0.0
  %900 = vmatpush1.msra.mxu0 0.0
  %901 = vmatprep.subr.mxu0 0.0
  %902 = vmatpush1.msra.mxu0 0.0
  %903 = vmatprep.subr.mxu0 0.0
  %904 = vmatpush1.msra.mxu0 0.0
  %905 = vmatprep.subr.mxu0 0.0
  %906 = vmatpush1.msra.mxu0 0.0
  %907 = vmatprep.subr.mxu0 0.0
  %908 = vmatpush1.msra.mxu0 0.0
  %909 = vmatprep.subr.mxu0 0.0
  %910 = vmatpush1.msra.mxu0 0.0
  %911 = vmatprep.subr.mxu0 0.0
  %912 = vmatpush1.msra.mxu0 0.0
  %913 = vmatprep.subr.mxu0 0.0
  %914 = vmatpush1.msra.mxu0 0.0
  %915 = vmatprep.mubr.f32.mxu0 0.0
  %916 = vmatmul.mubr.f32.gmra.mrb[0].mxu0 %v131
  %v917 = vpop.f32.mrb[0].mxu0
  %v918 = vadd.f32 0.0, %v917
  %v919 = vpop.f32.mrb[0].mxu0
  %v920 = vadd.f32 0.0, %v919
  %921 = vmatprep.mubr.f32.mxu0 0.0
  %922 = vmatmul.mubr.f32.gmra.mrb[0].mxu0 %v134
  %v923 = vpop.f32.mrb[0].mxu0
  %v924 = vadd.f32 0.0, %v923
  %v925 = vpop.f32.mrb[0].mxu0
  %v926 = vadd.f32 0.0, %v925
  %927 = vmatprep.mubr.f32.mxu0 0.0
  %928 = vmatmul.mubr.f32.gmra.mrb[0].mxu0 %v137
  %v929 = vpop.f32.mrb[0].mxu0
  %v930 = vadd.f32 0.0, %v929
  %v931 = vpop.f32.mrb[0].mxu0
  %v932 = vadd.f32 0.0, %v931
  %933 = vmatprep.mubr.f32.mxu0 0.0
  %934 = vmatmul.mubr.f32.gmra.mrb[0].mxu0 %v140
  %v935 = vpop.f32.mrb[0].mxu0
  %v936 = vadd.f32 0.0, %v935
  %v937 = vpop.f32.mrb[0].mxu0
  %v938 = vadd.f32 0.0, %v937
  %939 = vmatprep.mubr.f32.mxu0 0.0
  %940 = vmatmul.mubr.f32.gmra.mrb[0].mxu0 %v143
  %v941 = vpop.f32.mrb[0].mxu0
  %v942 = vadd.f32 0.0, %v941
  %v943 = vpop.f32.mrb[0].mxu0
  %v944 = vadd.f32 0.0, %v943
  %945 = vmatprep.mubr.f32.mxu0 0.0
  %946 = vmatmul.mubr.f32.gmra.mrb[0].mxu0 %v146
  %v947 = vpop.f32.mrb[0].mxu0
  %v948 = vadd.f32 0.0, %v947
  %v949 = vpop.f32.mrb[0].mxu0
  %v950 = vadd.f32 0.0, %v949
  %951 = vmatprep.mubr.f32.mxu0 0.0
  %952 = vmatmul.mubr.f32.gmra.mrb[0].mxu0 %v149
  %v953 = vpop.f32.mrb[0].mxu0
  %v954 = vadd.f32 0.0, %v953
  %v955 = vpop.f32.mrb[0].mxu0
  %v956 = vadd.f32 0.0, %v955
  %957 = vmatprep.mubr.f32.mxu0 0.0
  %958 = vmatmul.mubr.f32.gmra.mrb[0].mxu0 %v152
  %v959 = vpop.f32.mrb[0].mxu0
  %v960 = vadd.f32 0.0, %v959
  %v961 = vpop.f32.mrb[0].mxu0
  %v962 = vadd.f32 0.0, %v961
  %963 = vmatprep.mubr.f32.mxu0 0.0
  %964 = vmatmul.mubr.f32.gmra.mrb[0].mxu0 %v155
  %v965 = vpop.f32.mrb[0].mxu0
  %v966 = vadd.f32 0.0, %v965
  %v967 = vpop.f32.mrb[0].mxu0
  %v968 = vadd.f32 0.0, %v967
  %969 = vmatprep.mubr.f32.mxu0 0.0
  %970 = vmatmul.mubr.f32.gmra.mrb[0].mxu0 %v158
  %v971 = vpop.f32.mrb[0].mxu0
  %v972 = vadd.f32 0.0, %v971
  %v973 = vpop.f32.mrb[0].mxu0
  %v974 = vadd.f32 0.0, %v973
  %975 = vmatprep.mubr.f32.mxu0 0.0
  %976 = vmatmul.mubr.f32.gmra.mrb[0].mxu0 %v161
  %v977 = vpop.f32.mrb[0].mxu0
  %v978 = vadd.f32 0.0, %v977
  %v979 = vpop.f32.mrb[0].mxu0
  %v980 = vadd.f32 0.0, %v979
  %981 = vmatprep.mubr.f32.mxu0 0.0
  %982 = vmatmul.mubr.f32.gmra.mrb[0].mxu0 %v164
  %v983 = vpop.f32.mrb[0].mxu0
  %v984 = vadd.f32 0.0, %v983
  %v985 = vpop.f32.mrb[0].mxu0
  %v986 = vadd.f32 0.0, %v985
  %987 = vdwg.mxu0
  %988 = vmatprep.subr.mxu0 %v42
  %989 = vmatpush1.msra.mxu0 %v41
  %990 = vmatprep.subr.mxu0 %v67
  %991 = vmatpush1.msra.mxu0 %v66
  %992 = vmatprep.subr.mxu0 %v92
  %993 = vmatpush1.msra.mxu0 %v91
  %994 = vmatprep.subr.mxu0 %v117
  %995 = vmatpush1.msra.mxu0 %v116
  %996 = vmatprep.subr.mxu0 0.0
  %997 = vmatpush1.msra.mxu0 0.0
  %998 = vmatprep.subr.mxu0 0.0
  %999 = vmatpush1.msra.mxu0 0.0
  %1000 = vmatprep.subr.mxu0 0.0
  %1001 = vmatpush1.msra.mxu0 0.0
  %1002 = vmatprep.subr.mxu0 0.0
  %1003 = vmatpush1.msra.mxu0 0.0
  %1004 = vmatprep.subr.mxu0 0.0
  %1005 = vmatpush1.msra.mxu0 0.0
  %1006 = vmatprep.subr.mxu0 0.0
  %1007 = vmatpush1.msra.mxu0 0.0
  %1008 = vmatprep.subr.mxu0 0.0
  %1009 = vmatpush1.msra.mxu0 0.0
  %1010 = vmatprep.subr.mxu0 0.0
  %1011 = vmatpush1.msra.mxu0 0.0
  %1012 = vmatprep.subr.mxu0 0.0
  %1013 = vmatpush1.msra.mxu0 0.0
  %1014 = vmatprep.subr.mxu0 0.0
  %1015 = vmatpush1.msra.mxu0 0.0
  %1016 = vmatprep.subr.mxu0 0.0
  %1017 = vmatpush1.msra.mxu0 0.0
  %1018 = vmatprep.subr.mxu0 0.0
  %1019 = vmatpush1.msra.mxu0 0.0
  %1020 = vmatprep.subr.mxu0 0.0
  %1021 = vmatpush1.msra.mxu0 0.0
  %1022 = vmatprep.subr.mxu0 0.0
  %1023 = vmatpush1.msra.mxu0 0.0
  %1024 = vmatprep.subr.mxu0 0.0
  %1025 = vmatpush1.msra.mxu0 0.0
  %1026 = vmatprep.subr.mxu0 0.0
  %1027 = vmatpush1.msra.mxu0 0.0
  %1028 = vmatprep.subr.mxu0 0.0
  %1029 = vmatpush1.msra.mxu0 0.0
  %1030 = vmatprep.subr.mxu0 0.0
  %1031 = vmatpush1.msra.mxu0 0.0
  %1032 = vmatprep.subr.mxu0 0.0
  %1033 = vmatpush1.msra.mxu0 0.0
  %1034 = vmatprep.subr.mxu0 0.0
  %1035 = vmatpush1.msra.mxu0 0.0
  %1036 = vmatprep.subr.mxu0 0.0
  %1037 = vmatpush1.msra.mxu0 0.0
  %1038 = vmatprep.subr.mxu0 0.0
  %1039 = vmatpush1.msra.mxu0 0.0
  %1040 = vmatprep.subr.mxu0 0.0
  %1041 = vmatpush1.msra.mxu0 0.0
  %1042 = vmatprep.subr.mxu0 0.0
  %1043 = vmatpush1.msra.mxu0 0.0
  %1044 = vmatprep.subr.mxu0 0.0
  %1045 = vmatpush1.msra.mxu0 0.0
  %1046 = vmatprep.subr.mxu0 0.0
  %1047 = vmatpush1.msra.mxu0 0.0
  %1048 = vmatprep.subr.mxu0 0.0
  %1049 = vmatpush1.msra.mxu0 0.0
  %1050 = vmatprep.subr.mxu0 0.0
  %1051 = vmatpush1.msra.mxu0 0.0
  %1052 = vmatprep.mubr.f32.mxu0 0.0
  %1053 = vmatmul.mubr.f32.gmra.mrb[0].mxu0 %v131
  %v1054 = vpop.f32.mrb[0].mxu0
  %v1055 = vadd.f32 0.0, %v1054
  %v1056 = vpop.f32.mrb[0].mxu0
  %v1057 = vadd.f32 0.0, %v1056
  %1058 = vmatprep.mubr.f32.mxu0 0.0
  %1059 = vmatmul.mubr.f32.gmra.mrb[0].mxu0 %v134
  %v1060 = vpop.f32.mrb[0].mxu0
  %v1061 = vadd.f32 0.0, %v1060
  %v1062 = vpop.f32.mrb[0].mxu0
  %v1063 = vadd.f32 0.0, %v1062
  %1064 = vmatprep.mubr.f32.mxu0 0.0
  %1065 = vmatmul.mubr.f32.gmra.mrb[0].mxu0 %v137
  %v1066 = vpop.f32.mrb[0].mxu0
  %v1067 = vadd.f32 0.0, %v1066
  %v1068 = vpop.f32.mrb[0].mxu0
  %v1069 = vadd.f32 0.0, %v1068
  %1070 = vmatprep.mubr.f32.mxu0 0.0
  %1071 = vmatmul.mubr.f32.gmra.mrb[0].mxu0 %v140
  %v1072 = vpop.f32.mrb[0].mxu0
  %v1073 = vadd.f32 0.0, %v1072
  %v1074 = vpop.f32.mrb[0].mxu0
  %v1075 = vadd.f32 0.0, %v1074
  %1076 = vmatprep.mubr.f32.mxu0 0.0
  %1077 = vmatmul.mubr.f32.gmra.mrb[0].mxu0 %v143
  %v1078 = vpop.f32.mrb[0].mxu0
  %v1079 = vadd.f32 0.0, %v1078
  %v1080 = vpop.f32.mrb[0].mxu0
  %v1081 = vadd.f32 0.0, %v1080
  %1082 = vmatprep.mubr.f32.mxu0 0.0
  %1083 = vmatmul.mubr.f32.gmra.mrb[0].mxu0 %v146
  %v1084 = vpop.f32.mrb[0].mxu0
  %v1085 = vadd.f32 0.0, %v1084
  %v1086 = vpop.f32.mrb[0].mxu0
  %v1087 = vadd.f32 0.0, %v1086
  %1088 = vmatprep.mubr.f32.mxu0 0.0
  %1089 = vmatmul.mubr.f32.gmra.mrb[0].mxu0 %v149
  %v1090 = vpop.f32.mrb[0].mxu0
  %v1091 = vadd.f32 0.0, %v1090
  %v1092 = vpop.f32.mrb[0].mxu0
  %v1093 = vadd.f32 0.0, %v1092
  %1094 = vmatprep.mubr.f32.mxu0 0.0
  %1095 = vmatmul.mubr.f32.gmra.mrb[0].mxu0 %v152
  %v1096 = vpop.f32.mrb[0].mxu0
  %v1097 = vadd.f32 0.0, %v1096
  %v1098 = vpop.f32.mrb[0].mxu0
  %v1099 = vadd.f32 0.0, %v1098
  %1100 = vmatprep.mubr.f32.mxu0 0.0
  %1101 = vmatmul.mubr.f32.gmra.mrb[0].mxu0 %v155
  %v1102 = vpop.f32.mrb[0].mxu0
  %v1103 = vadd.f32 0.0, %v1102
  %v1104 = vpop.f32.mrb[0].mxu0
  %v1105 = vadd.f32 0.0, %v1104
  %1106 = vmatprep.mubr.f32.mxu0 0.0
  %1107 = vmatmul.mubr.f32.gmra.mrb[0].mxu0 %v158
  %v1108 = vpop.f32.mrb[0].mxu0
  %v1109 = vadd.f32 0.0, %v1108
  %v1110 = vpop.f32.mrb[0].mxu0
  %v1111 = vadd.f32 0.0, %v1110
  %1112 = vmatprep.mubr.f32.mxu0 0.0
  %1113 = vmatmul.mubr.f32.gmra.mrb[0].mxu0 %v161
  %v1114 = vpop.f32.mrb[0].mxu0
  %v1115 = vadd.f32 0.0, %v1114
  %v1116 = vpop.f32.mrb[0].mxu0
  %v1117 = vadd.f32 0.0, %v1116
  %1118 = vmatprep.mubr.f32.mxu0 0.0
  %1119 = vmatmul.mubr.f32.gmra.mrb[0].mxu0 %v164
  %v1120 = vpop.f32.mrb[0].mxu0
  %v1121 = vadd.f32 0.0, %v1120
  %v1122 = vpop.f32.mrb[0].mxu0
  %v1123 = vadd.f32 0.0, %v1122
  %1124 = vdwg.mxu0
  %1125 = vmatprep.subr.mxu0 %v44
  %1126 = vmatpush1.msra.mxu0 %v43
  %1127 = vmatprep.subr.mxu0 %v69
  %1128 = vmatpush1.msra.mxu0 %v68
  %1129 = vmatprep.subr.mxu0 %v94
  %1130 = vmatpush1.msra.mxu0 %v93
  %1131 = vmatprep.subr.mxu0 %v119
  %1132 = vmatpush1.msra.mxu0 %v118
  %1133 = vmatprep.subr.mxu0 0.0
  %1134 = vmatpush1.msra.mxu0 0.0
  %1135 = vmatprep.subr.mxu0 0.0
  %1136 = vmatpush1.msra.mxu0 0.0
  %1137 = vmatprep.subr.mxu0 0.0
  %1138 = vmatpush1.msra.mxu0 0.0
  %1139 = vmatprep.subr.mxu0 0.0
  %1140 = vmatpush1.msra.mxu0 0.0
  %1141 = vmatprep.subr.mxu0 0.0
  %1142 = vmatpush1.msra.mxu0 0.0
  %1143 = vmatprep.subr.mxu0 0.0
  %1144 = vmatpush1.msra.mxu0 0.0
  %1145 = vmatprep.subr.mxu0 0.0
  %1146 = vmatpush1.msra.mxu0 0.0
  %1147 = vmatprep.subr.mxu0 0.0
  %1148 = vmatpush1.msra.mxu0 0.0
  %1149 = vmatprep.subr.mxu0 0.0
  %1150 = vmatpush1.msra.mxu0 0.0
  %1151 = vmatprep.subr.mxu0 0.0
  %1152 = vmatpush1.msra.mxu0 0.0
  %1153 = vmatprep.subr.mxu0 0.0
  %1154 = vmatpush1.msra.mxu0 0.0
  %1155 = vmatprep.subr.mxu0 0.0
  %1156 = vmatpush1.msra.mxu0 0.0
  %1157 = vmatprep.subr.mxu0 0.0
  %1158 = vmatpush1.msra.mxu0 0.0
  %1159 = vmatprep.subr.mxu0 0.0
  %1160 = vmatpush1.msra.mxu0 0.0
  %1161 = vmatprep.subr.mxu0 0.0
  %1162 = vmatpush1.msra.mxu0 0.0
  %1163 = vmatprep.subr.mxu0 0.0
  %1164 = vmatpush1.msra.mxu0 0.0
  %1165 = vmatprep.subr.mxu0 0.0
  %1166 = vmatpush1.msra.mxu0 0.0
  %1167 = vmatprep.subr.mxu0 0.0
  %1168 = vmatpush1.msra.mxu0 0.0
  %1169 = vmatprep.subr.mxu0 0.0
  %1170 = vmatpush1.msra.mxu0 0.0
  %1171 = vmatprep.subr.mxu0 0.0
  %1172 = vmatpush1.msra.mxu0 0.0
  %1173 = vmatprep.subr.mxu0 0.0
  %1174 = vmatpush1.msra.mxu0 0.0
  %1175 = vmatprep.subr.mxu0 0.0
  %1176 = vmatpush1.msra.mxu0 0.0
  %1177 = vmatprep.subr.mxu0 0.0
  %1178 = vmatpush1.msra.mxu0 0.0
  %1179 = vmatprep.subr.mxu0 0.0
  %1180 = vmatpush1.msra.mxu0 0.0
  %1181 = vmatprep.subr.mxu0 0.0
  %1182 = vmatpush1.msra.mxu0 0.0
  %1183 = vmatprep.subr.mxu0 0.0
  %1184 = vmatpush1.msra.mxu0 0.0
  %1185 = vmatprep.subr.mxu0 0.0
  %1186 = vmatpush1.msra.mxu0 0.0
  %1187 = vmatprep.subr.mxu0 0.0
  %1188 = vmatpush1.msra.mxu0 0.0
  %1189 = vmatprep.mubr.f32.mxu0 0.0
  %1190 = vmatmul.mubr.f32.gmra.mrb[0].mxu0 %v131
  %v1191 = vpop.f32.mrb[0].mxu0
  %v1192 = vadd.f32 0.0, %v1191
  %v1193 = vpop.f32.mrb[0].mxu0
  %v1194 = vadd.f32 0.0, %v1193
  %1195 = vmatprep.mubr.f32.mxu0 0.0
  %1196 = vmatmul.mubr.f32.gmra.mrb[0].mxu0 %v134
  %v1197 = vpop.f32.mrb[0].mxu0
  %v1198 = vadd.f32 0.0, %v1197
  %v1199 = vpop.f32.mrb[0].mxu0
  %v1200 = vadd.f32 0.0, %v1199
  %1201 = vmatprep.mubr.f32.mxu0 0.0
  %1202 = vmatmul.mubr.f32.gmra.mrb[0].mxu0 %v137
  %v1203 = vpop.f32.mrb[0].mxu0
  %v1204 = vadd.f32 0.0, %v1203
  %v1205 = vpop.f32.mrb[0].mxu0
  %v1206 = vadd.f32 0.0, %v1205
  %1207 = vmatprep.mubr.f32.mxu0 0.0
  %1208 = vmatmul.mubr.f32.gmra.mrb[0].mxu0 %v140
  %v1209 = vpop.f32.mrb[0].mxu0
  %v1210 = vadd.f32 0.0, %v1209
  %v1211 = vpop.f32.mrb[0].mxu0
  %v1212 = vadd.f32 0.0, %v1211
  %1213 = vmatprep.mubr.f32.mxu0 0.0
  %1214 = vmatmul.mubr.f32.gmra.mrb[0].mxu0 %v143
  %v1215 = vpop.f32.mrb[0].mxu0
  %v1216 = vadd.f32 0.0, %v1215
  %v1217 = vpop.f32.mrb[0].mxu0
  %v1218 = vadd.f32 0.0, %v1217
  %1219 = vmatprep.mubr.f32.mxu0 0.0
  %1220 = vmatmul.mubr.f32.gmra.mrb[0].mxu0 %v146
  %v1221 = vpop.f32.mrb[0].mxu0
  %v1222 = vadd.f32 0.0, %v1221
  %v1223 = vpop.f32.mrb[0].mxu0
  %v1224 = vadd.f32 0.0, %v1223
  %1225 = vmatprep.mubr.f32.mxu0 0.0
  %1226 = vmatmul.mubr.f32.gmra.mrb[0].mxu0 %v149
  %v1227 = vpop.f32.mrb[0].mxu0
  %v1228 = vadd.f32 0.0, %v1227
  %v1229 = vpop.f32.mrb[0].mxu0
  %v1230 = vadd.f32 0.0, %v1229
  %1231 = vmatprep.mubr.f32.mxu0 0.0
  %1232 = vmatmul.mubr.f32.gmra.mrb[0].mxu0 %v152
  %v1233 = vpop.f32.mrb[0].mxu0
  %v1234 = vadd.f32 0.0, %v1233
  %v1235 = vpop.f32.mrb[0].mxu0
  %v1236 = vadd.f32 0.0, %v1235
  %1237 = vmatprep.mubr.f32.mxu0 0.0
  %1238 = vmatmul.mubr.f32.gmra.mrb[0].mxu0 %v155
  %v1239 = vpop.f32.mrb[0].mxu0
  %v1240 = vadd.f32 0.0, %v1239
  %v1241 = vpop.f32.mrb[0].mxu0
  %v1242 = vadd.f32 0.0, %v1241
  %1243 = vmatprep.mubr.f32.mxu0 0.0
  %1244 = vmatmul.mubr.f32.gmra.mrb[0].mxu0 %v158
  %v1245 = vpop.f32.mrb[0].mxu0
  %v1246 = vadd.f32 0.0, %v1245
  %v1247 = vpop.f32.mrb[0].mxu0
  %v1248 = vadd.f32 0.0, %v1247
  %1249 = vmatprep.mubr.f32.mxu0 0.0
  %1250 = vmatmul.mubr.f32.gmra.mrb[0].mxu0 %v161
  %v1251 = vpop.f32.mrb[0].mxu0
  %v1252 = vadd.f32 0.0, %v1251
  %v1253 = vpop.f32.mrb[0].mxu0
  %v1254 = vadd.f32 0.0, %v1253
  %1255 = vmatprep.mubr.f32.mxu0 0.0
  %1256 = vmatmul.mubr.f32.gmra.mrb[0].mxu0 %v164
  %v1257 = vpop.f32.mrb[0].mxu0
  %v1258 = vadd.f32 0.0, %v1257
  %v1259 = vpop.f32.mrb[0].mxu0
  %v1260 = vadd.f32 0.0, %v1259
  %1261 = vdwg.mxu0
  %1262 = vmatprep.subr.mxu0 %v46
  %1263 = vmatpush1.msra.mxu0 %v45
  %1264 = vmatprep.subr.mxu0 %v71
  %1265 = vmatpush1.msra.mxu0 %v70
  %1266 = vmatprep.subr.mxu0 %v96
  %1267 = vmatpush1.msra.mxu0 %v95
  %1268 = vmatprep.subr.mxu0 %v121
  %1269 = vmatpush1.msra.mxu0 %v120
  %1270 = vmatprep.subr.mxu0 0.0
  %1271 = vmatpush1.msra.mxu0 0.0
  %1272 = vmatprep.subr.mxu0 0.0
  %1273 = vmatpush1.msra.mxu0 0.0
  %1274 = vmatprep.subr.mxu0 0.0
  %1275 = vmatpush1.msra.mxu0 0.0
  %1276 = vmatprep.subr.mxu0 0.0
  %1277 = vmatpush1.msra.mxu0 0.0
  %1278 = vmatprep.subr.mxu0 0.0
  %1279 = vmatpush1.msra.mxu0 0.0
  %1280 = vmatprep.subr.mxu0 0.0
  %1281 = vmatpush1.msra.mxu0 0.0
  %1282 = vmatprep.subr.mxu0 0.0
  %1283 = vmatpush1.msra.mxu0 0.0
  %1284 = vmatprep.subr.mxu0 0.0
  %1285 = vmatpush1.msra.mxu0 0.0
  %1286 = vmatprep.subr.mxu0 0.0
  %1287 = vmatpush1.msra.mxu0 0.0
  %1288 = vmatprep.subr.mxu0 0.0
  %1289 = vmatpush1.msra.mxu0 0.0
  %1290 = vmatprep.subr.mxu0 0.0
  %1291 = vmatpush1.msra.mxu0 0.0
  %1292 = vmatprep.subr.mxu0 0.0
  %1293 = vmatpush1.msra.mxu0 0.0
  %1294 = vmatprep.subr.mxu0 0.0
  %1295 = vmatpush1.msra.mxu0 0.0
  %1296 = vmatprep.subr.mxu0 0.0
  %1297 = vmatpush1.msra.mxu0 0.0
  %1298 = vmatprep.subr.mxu0 0.0
  %1299 = vmatpush1.msra.mxu0 0.0
  %1300 = vmatprep.subr.mxu0 0.0
  %1301 = vmatpush1.msra.mxu0 0.0
  %1302 = vmatprep.subr.mxu0 0.0
  %1303 = vmatpush1.msra.mxu0 0.0
  %1304 = vmatprep.subr.mxu0 0.0
  %1305 = vmatpush1.msra.mxu0 0.0
  %1306 = vmatprep.subr.mxu0 0.0
  %1307 = vmatpush1.msra.mxu0 0.0
  %1308 = vmatprep.subr.mxu0 0.0
  %1309 = vmatpush1.msra.mxu0 0.0
  %1310 = vmatprep.subr.mxu0 0.0
  %1311 = vmatpush1.msra.mxu0 0.0
  %1312 = vmatprep.subr.mxu0 0.0
  %1313 = vmatpush1.msra.mxu0 0.0
  %1314 = vmatprep.subr.mxu0 0.0
  %1315 = vmatpush1.msra.mxu0 0.0
  %1316 = vmatprep.subr.mxu0 0.0
  %1317 = vmatpush1.msra.mxu0 0.0
  %1318 = vmatprep.subr.mxu0 0.0
  %1319 = vmatpush1.msra.mxu0 0.0
  %1320 = vmatprep.subr.mxu0 0.0
  %1321 = vmatpush1.msra.mxu0 0.0
  %1322 = vmatprep.subr.mxu0 0.0
  %1323 = vmatpush1.msra.mxu0 0.0
  %1324 = vmatprep.subr.mxu0 0.0
  %1325 = vmatpush1.msra.mxu0 0.0
  %1326 = vmatprep.mubr.f32.mxu0 0.0
  %1327 = vmatmul.mubr.f32.gmra.mrb[0].mxu0 %v131
  %v1328 = vpop.f32.mrb[0].mxu0
  %v1329 = vadd.f32 0.0, %v1328
  %v1330 = vpop.f32.mrb[0].mxu0
  %v1331 = vadd.f32 0.0, %v1330
  %1332 = vmatprep.mubr.f32.mxu0 0.0
  %1333 = vmatmul.mubr.f32.gmra.mrb[0].mxu0 %v134
  %v1334 = vpop.f32.mrb[0].mxu0
  %v1335 = vadd.f32 0.0, %v1334
  %v1336 = vpop.f32.mrb[0].mxu0
  %v1337 = vadd.f32 0.0, %v1336
  %1338 = vmatprep.mubr.f32.mxu0 0.0
  %1339 = vmatmul.mubr.f32.gmra.mrb[0].mxu0 %v137
  %v1340 = vpop.f32.mrb[0].mxu0
  %v1341 = vadd.f32 0.0, %v1340
  %v1342 = vpop.f32.mrb[0].mxu0
  %v1343 = vadd.f32 0.0, %v1342
  %1344 = vmatprep.mubr.f32.mxu0 0.0
  %1345 = vmatmul.mubr.f32.gmra.mrb[0].mxu0 %v140
  %v1346 = vpop.f32.mrb[0].mxu0
  %v1347 = vadd.f32 0.0, %v1346
  %v1348 = vpop.f32.mrb[0].mxu0
  %v1349 = vadd.f32 0.0, %v1348
  %1350 = vmatprep.mubr.f32.mxu0 0.0
  %1351 = vmatmul.mubr.f32.gmra.mrb[0].mxu0 %v143
  %v1352 = vpop.f32.mrb[0].mxu0
  %v1353 = vadd.f32 0.0, %v1352
  %v1354 = vpop.f32.mrb[0].mxu0
  %v1355 = vadd.f32 0.0, %v1354
  %1356 = vmatprep.mubr.f32.mxu0 0.0
  %1357 = vmatmul.mubr.f32.gmra.mrb[0].mxu0 %v146
  %v1358 = vpop.f32.mrb[0].mxu0
  %v1359 = vadd.f32 0.0, %v1358
  %v1360 = vpop.f32.mrb[0].mxu0
  %v1361 = vadd.f32 0.0, %v1360
  %1362 = vmatprep.mubr.f32.mxu0 0.0
  %1363 = vmatmul.mubr.f32.gmra.mrb[0].mxu0 %v149
  %v1364 = vpop.f32.mrb[0].mxu0
  %v1365 = vadd.f32 0.0, %v1364
  %v1366 = vpop.f32.mrb[0].mxu0
  %v1367 = vadd.f32 0.0, %v1366
  %1368 = vmatprep.mubr.f32.mxu0 0.0
  %1369 = vmatmul.mubr.f32.gmra.mrb[0].mxu0 %v152
  %v1370 = vpop.f32.mrb[0].mxu0
  %v1371 = vadd.f32 0.0, %v1370
  %v1372 = vpop.f32.mrb[0].mxu0
  %v1373 = vadd.f32 0.0, %v1372
  %1374 = vmatprep.mubr.f32.mxu0 0.0
  %1375 = vmatmul.mubr.f32.gmra.mrb[0].mxu0 %v155
  %v1376 = vpop.f32.mrb[0].mxu0
  %v1377 = vadd.f32 0.0, %v1376
  %v1378 = vpop.f32.mrb[0].mxu0
  %v1379 = vadd.f32 0.0, %v1378
  %1380 = vmatprep.mubr.f32.mxu0 0.0
  %1381 = vmatmul.mubr.f32.gmra.mrb[0].mxu0 %v158
  %v1382 = vpop.f32.mrb[0].mxu0
  %v1383 = vadd.f32 0.0, %v1382
  %v1384 = vpop.f32.mrb[0].mxu0
  %v1385 = vadd.f32 0.0, %v1384
  %1386 = vmatprep.mubr.f32.mxu0 0.0
  %1387 = vmatmul.mubr.f32.gmra.mrb[0].mxu0 %v161
  %v1388 = vpop.f32.mrb[0].mxu0
  %v1389 = vadd.f32 0.0, %v1388
  %v1390 = vpop.f32.mrb[0].mxu0
  %v1391 = vadd.f32 0.0, %v1390
  %1392 = vmatprep.mubr.f32.mxu0 0.0
  %1393 = vmatmul.mubr.f32.gmra.mrb[0].mxu0 %v164
  %v1394 = vpop.f32.mrb[0].mxu0
  %v1395 = vadd.f32 0.0, %v1394
  %v1396 = vpop.f32.mrb[0].mxu0
  %v1397 = vadd.f32 0.0, %v1396
  %1398 = vdwg.mxu0
  %1399 = vmatprep.subr.mxu0 %v48
  %1400 = vmatpush1.msra.mxu0 %v47
  %1401 = vmatprep.subr.mxu0 %v73
  %1402 = vmatpush1.msra.mxu0 %v72
  %1403 = vmatprep.subr.mxu0 %v98
  %1404 = vmatpush1.msra.mxu0 %v97
  %1405 = vmatprep.subr.mxu0 %v123
  %1406 = vmatpush1.msra.mxu0 %v122
  %1407 = vmatprep.subr.mxu0 0.0
  %1408 = vmatpush1.msra.mxu0 0.0
  %1409 = vmatprep.subr.mxu0 0.0
  %1410 = vmatpush1.msra.mxu0 0.0
  %1411 = vmatprep.subr.mxu0 0.0
  %1412 = vmatpush1.msra.mxu0 0.0
  %1413 = vmatprep.subr.mxu0 0.0
  %1414 = vmatpush1.msra.mxu0 0.0
  %1415 = vmatprep.subr.mxu0 0.0
  %1416 = vmatpush1.msra.mxu0 0.0
  %1417 = vmatprep.subr.mxu0 0.0
  %1418 = vmatpush1.msra.mxu0 0.0
  %1419 = vmatprep.subr.mxu0 0.0
  %1420 = vmatpush1.msra.mxu0 0.0
  %1421 = vmatprep.subr.mxu0 0.0
  %1422 = vmatpush1.msra.mxu0 0.0
  %1423 = vmatprep.subr.mxu0 0.0
  %1424 = vmatpush1.msra.mxu0 0.0
  %1425 = vmatprep.subr.mxu0 0.0
  %1426 = vmatpush1.msra.mxu0 0.0
  %1427 = vmatprep.subr.mxu0 0.0
  %1428 = vmatpush1.msra.mxu0 0.0
  %1429 = vmatprep.subr.mxu0 0.0
  %1430 = vmatpush1.msra.mxu0 0.0
  %1431 = vmatprep.subr.mxu0 0.0
  %1432 = vmatpush1.msra.mxu0 0.0
  %1433 = vmatprep.subr.mxu0 0.0
  %1434 = vmatpush1.msra.mxu0 0.0
  %1435 = vmatprep.subr.mxu0 0.0
  %1436 = vmatpush1.msra.mxu0 0.0
  %1437 = vmatprep.subr.mxu0 0.0
  %1438 = vmatpush1.msra.mxu0 0.0
  %1439 = vmatprep.subr.mxu0 0.0
  %1440 = vmatpush1.msra.mxu0 0.0
  %1441 = vmatprep.subr.mxu0 0.0
  %1442 = vmatpush1.msra.mxu0 0.0
  %1443 = vmatprep.subr.mxu0 0.0
  %1444 = vmatpush1.msra.mxu0 0.0
  %1445 = vmatprep.subr.mxu0 0.0
  %1446 = vmatpush1.msra.mxu0 0.0
  %1447 = vmatprep.subr.mxu0 0.0
  %1448 = vmatpush1.msra.mxu0 0.0
  %1449 = vmatprep.subr.mxu0 0.0
  %1450 = vmatpush1.msra.mxu0 0.0
  %1451 = vmatprep.subr.mxu0 0.0
  %1452 = vmatpush1.msra.mxu0 0.0
  %1453 = vmatprep.subr.mxu0 0.0
  %1454 = vmatpush1.msra.mxu0 0.0
  %1455 = vmatprep.subr.mxu0 0.0
  %1456 = vmatpush1.msra.mxu0 0.0
  %1457 = vmatprep.subr.mxu0 0.0
  %1458 = vmatpush1.msra.mxu0 0.0
  %1459 = vmatprep.subr.mxu0 0.0
  %1460 = vmatpush1.msra.mxu0 0.0
  %1461 = vmatprep.subr.mxu0 0.0
  %1462 = vmatpush1.msra.mxu0 0.0
  %1463 = vmatprep.mubr.f32.mxu0 0.0
  %1464 = vmatmul.mubr.f32.gmra.mrb[0].mxu0 %v131
  %v1465 = vpop.f32.mrb[0].mxu0
  %v1466 = vadd.f32 0.0, %v1465
  %v1467 = vpop.f32.mrb[0].mxu0
  %v1468 = vadd.f32 0.0, %v1467
  %1469 = vmatprep.mubr.f32.mxu0 0.0
  %1470 = vmatmul.mubr.f32.gmra.mrb[0].mxu0 %v134
  %v1471 = vpop.f32.mrb[0].mxu0
  %v1472 = vadd.f32 0.0, %v1471
  %v1473 = vpop.f32.mrb[0].mxu0
  %v1474 = vadd.f32 0.0, %v1473
  %1475 = vmatprep.mubr.f32.mxu0 0.0
  %1476 = vmatmul.mubr.f32.gmra.mrb[0].mxu0 %v137
  %v1477 = vpop.f32.mrb[0].mxu0
  %v1478 = vadd.f32 0.0, %v1477
  %v1479 = vpop.f32.mrb[0].mxu0
  %v1480 = vadd.f32 0.0, %v1479
  %1481 = vmatprep.mubr.f32.mxu0 0.0
  %1482 = vmatmul.mubr.f32.gmra.mrb[0].mxu0 %v140
  %v1483 = vpop.f32.mrb[0].mxu0
  %v1484 = vadd.f32 0.0, %v1483
  %v1485 = vpop.f32.mrb[0].mxu0
  %v1486 = vadd.f32 0.0, %v1485
  %1487 = vmatprep.mubr.f32.mxu0 0.0
  %1488 = vmatmul.mubr.f32.gmra.mrb[0].mxu0 %v143
  %v1489 = vpop.f32.mrb[0].mxu0
  %v1490 = vadd.f32 0.0, %v1489
  %v1491 = vpop.f32.mrb[0].mxu0
  %v1492 = vadd.f32 0.0, %v1491
  %1493 = vmatprep.mubr.f32.mxu0 0.0
  %1494 = vmatmul.mubr.f32.gmra.mrb[0].mxu0 %v146
  %v1495 = vpop.f32.mrb[0].mxu0
  %v1496 = vadd.f32 0.0, %v1495
  %v1497 = vpop.f32.mrb[0].mxu0
  %v1498 = vadd.f32 0.0, %v1497
  %1499 = vmatprep.mubr.f32.mxu0 0.0
  %1500 = vmatmul.mubr.f32.gmra.mrb[0].mxu0 %v149
  %v1501 = vpop.f32.mrb[0].mxu0
  %v1502 = vadd.f32 0.0, %v1501
  %v1503 = vpop.f32.mrb[0].mxu0
  %v1504 = vadd.f32 0.0, %v1503
  %1505 = vmatprep.mubr.f32.mxu0 0.0
  %1506 = vmatmul.mubr.f32.gmra.mrb[0].mxu0 %v152
  %v1507 = vpop.f32.mrb[0].mxu0
  %v1508 = vadd.f32 0.0, %v1507
  %v1509 = vpop.f32.mrb[0].mxu0
  %v1510 = vadd.f32 0.0, %v1509
  %1511 = vmatprep.mubr.f32.mxu0 0.0
  %1512 = vmatmul.mubr.f32.gmra.mrb[0].mxu0 %v155
  %v1513 = vpop.f32.mrb[0].mxu0
  %v1514 = vadd.f32 0.0, %v1513
  %v1515 = vpop.f32.mrb[0].mxu0
  %v1516 = vadd.f32 0.0, %v1515
  %1517 = vmatprep.mubr.f32.mxu0 0.0
  %1518 = vmatmul.mubr.f32.gmra.mrb[0].mxu0 %v158
  %v1519 = vpop.f32.mrb[0].mxu0
  %v1520 = vadd.f32 0.0, %v1519
  %v1521 = vpop.f32.mrb[0].mxu0
  %v1522 = vadd.f32 0.0, %v1521
  %1523 = vmatprep.mubr.f32.mxu0 0.0
  %1524 = vmatmul.mubr.f32.gmra.mrb[0].mxu0 %v161
  %v1525 = vpop.f32.mrb[0].mxu0
  %v1526 = vadd.f32 0.0, %v1525
  %v1527 = vpop.f32.mrb[0].mxu0
  %v1528 = vadd.f32 0.0, %v1527
  %1529 = vmatprep.mubr.f32.mxu0 0.0
  %1530 = vmatmul.mubr.f32.gmra.mrb[0].mxu0 %v164
  %v1531 = vpop.f32.mrb[0].mxu0
  %v1532 = vadd.f32 0.0, %v1531
  %v1533 = vpop.f32.mrb[0].mxu0
  %v1534 = vadd.f32 0.0, %v1533
  %1535 = vdwg.mxu0
  %1536 = vmatprep.subr.mxu0 %v50
  %1537 = vmatpush1.msra.mxu0 %v49
  %1538 = vmatprep.subr.mxu0 %v75
  %1539 = vmatpush1.msra.mxu0 %v74
  %1540 = vmatprep.subr.mxu0 %v100
  %1541 = vmatpush1.msra.mxu0 %v99
  %1542 = vmatprep.subr.mxu0 %v125
  %1543 = vmatpush1.msra.mxu0 %v124
  %1544 = vmatprep.subr.mxu0 0.0
  %1545 = vmatpush1.msra.mxu0 0.0
  %1546 = vmatprep.subr.mxu0 0.0
  %1547 = vmatpush1.msra.mxu0 0.0
  %1548 = vmatprep.subr.mxu0 0.0
  %1549 = vmatpush1.msra.mxu0 0.0
  %1550 = vmatprep.subr.mxu0 0.0
  %1551 = vmatpush1.msra.mxu0 0.0
  %1552 = vmatprep.subr.mxu0 0.0
  %1553 = vmatpush1.msra.mxu0 0.0
  %1554 = vmatprep.subr.mxu0 0.0
  %1555 = vmatpush1.msra.mxu0 0.0
  %1556 = vmatprep.subr.mxu0 0.0
  %1557 = vmatpush1.msra.mxu0 0.0
  %1558 = vmatprep.subr.mxu0 0.0
  %1559 = vmatpush1.msra.mxu0 0.0
  %1560 = vmatprep.subr.mxu0 0.0
  %1561 = vmatpush1.msra.mxu0 0.0
  %1562 = vmatprep.subr.mxu0 0.0
  %1563 = vmatpush1.msra.mxu0 0.0
  %1564 = vmatprep.subr.mxu0 0.0
  %1565 = vmatpush1.msra.mxu0 0.0
  %1566 = vmatprep.subr.mxu0 0.0
  %1567 = vmatpush1.msra.mxu0 0.0
  %1568 = vmatprep.subr.mxu0 0.0
  %1569 = vmatpush1.msra.mxu0 0.0
  %1570 = vmatprep.subr.mxu0 0.0
  %1571 = vmatpush1.msra.mxu0 0.0
  %1572 = vmatprep.subr.mxu0 0.0
  %1573 = vmatpush1.msra.mxu0 0.0
  %1574 = vmatprep.subr.mxu0 0.0
  %1575 = vmatpush1.msra.mxu0 0.0
  %1576 = vmatprep.subr.mxu0 0.0
  %1577 = vmatpush1.msra.mxu0 0.0
  %1578 = vmatprep.subr.mxu0 0.0
  %1579 = vmatpush1.msra.mxu0 0.0
  %1580 = vmatprep.subr.mxu0 0.0
  %1581 = vmatpush1.msra.mxu0 0.0
  %1582 = vmatprep.subr.mxu0 0.0
  %1583 = vmatpush1.msra.mxu0 0.0
  %1584 = vmatprep.subr.mxu0 0.0
  %1585 = vmatpush1.msra.mxu0 0.0
  %1586 = vmatprep.subr.mxu0 0.0
  %1587 = vmatpush1.msra.mxu0 0.0
  %1588 = vmatprep.subr.mxu0 0.0
  %1589 = vmatpush1.msra.mxu0 0.0
  %1590 = vmatprep.subr.mxu0 0.0
  %1591 = vmatpush1.msra.mxu0 0.0
  %1592 = vmatprep.subr.mxu0 0.0
  %1593 = vmatpush1.msra.mxu0 0.0
  %1594 = vmatprep.subr.mxu0 0.0
  %1595 = vmatpush1.msra.mxu0 0.0
  %1596 = vmatprep.subr.mxu0 0.0
  %1597 = vmatpush1.msra.mxu0 0.0
  %1598 = vmatprep.subr.mxu0 0.0
  %1599 = vmatpush1.msra.mxu0 0.0
  %1600 = vmatprep.mubr.f32.mxu0 0.0
  %1601 = vmatmul.mubr.f32.gmra.mrb[0].mxu0 %v131
  %v1602 = vpop.f32.mrb[0].mxu0
  %v1603 = vadd.f32 0.0, %v1602
  %v1604 = vpop.f32.mrb[0].mxu0
  %v1605 = vadd.f32 0.0, %v1604
  %1606 = vmatprep.mubr.f32.mxu0 0.0
  %1607 = vmatmul.mubr.f32.gmra.mrb[0].mxu0 %v134
  %v1608 = vpop.f32.mrb[0].mxu0
  %v1609 = vadd.f32 0.0, %v1608
  %v1610 = vpop.f32.mrb[0].mxu0
  %v1611 = vadd.f32 0.0, %v1610
  %1612 = vmatprep.mubr.f32.mxu0 0.0
  %1613 = vmatmul.mubr.f32.gmra.mrb[0].mxu0 %v137
  %v1614 = vpop.f32.mrb[0].mxu0
  %v1615 = vadd.f32 0.0, %v1614
  %v1616 = vpop.f32.mrb[0].mxu0
  %v1617 = vadd.f32 0.0, %v1616
  %1618 = vmatprep.mubr.f32.mxu0 0.0
  %1619 = vmatmul.mubr.f32.gmra.mrb[0].mxu0 %v140
  %v1620 = vpop.f32.mrb[0].mxu0
  %v1621 = vadd.f32 0.0, %v1620
  %v1622 = vpop.f32.mrb[0].mxu0
  %v1623 = vadd.f32 0.0, %v1622
  %1624 = vmatprep.mubr.f32.mxu0 0.0
  %1625 = vmatmul.mubr.f32.gmra.mrb[0].mxu0 %v143
  %v1626 = vpop.f32.mrb[0].mxu0
  %v1627 = vadd.f32 0.0, %v1626
  %v1628 = vpop.f32.mrb[0].mxu0
  %v1629 = vadd.f32 0.0, %v1628
  %1630 = vmatprep.mubr.f32.mxu0 0.0
  %1631 = vmatmul.mubr.f32.gmra.mrb[0].mxu0 %v146
  %v1632 = vpop.f32.mrb[0].mxu0
  %v1633 = vadd.f32 0.0, %v1632
  %v1634 = vpop.f32.mrb[0].mxu0
  %v1635 = vadd.f32 0.0, %v1634
  %1636 = vmatprep.mubr.f32.mxu0 0.0
  %1637 = vmatmul.mubr.f32.gmra.mrb[0].mxu0 %v149
  %v1638 = vpop.f32.mrb[0].mxu0
  %v1639 = vadd.f32 0.0, %v1638
  %v1640 = vpop.f32.mrb[0].mxu0
  %v1641 = vadd.f32 0.0, %v1640
  %1642 = vmatprep.mubr.f32.mxu0 0.0
  %1643 = vmatmul.mubr.f32.gmra.mrb[0].mxu0 %v152
  %v1644 = vpop.f32.mrb[0].mxu0
  %v1645 = vadd.f32 0.0, %v1644
  %v1646 = vpop.f32.mrb[0].mxu0
  %v1647 = vadd.f32 0.0, %v1646
  %1648 = vmatprep.mubr.f32.mxu0 0.0
  %1649 = vmatmul.mubr.f32.gmra.mrb[0].mxu0 %v155
  %v1650 = vpop.f32.mrb[0].mxu0
  %v1651 = vadd.f32 0.0, %v1650
  %v1652 = vpop.f32.mrb[0].mxu0
  %v1653 = vadd.f32 0.0, %v1652
  %1654 = vmatprep.mubr.f32.mxu0 0.0
  %1655 = vmatmul.mubr.f32.gmra.mrb[0].mxu0 %v158
  %v1656 = vpop.f32.mrb[0].mxu0
  %v1657 = vadd.f32 0.0, %v1656
  %v1658 = vpop.f32.mrb[0].mxu0
  %v1659 = vadd.f32 0.0, %v1658
  %1660 = vmatprep.mubr.f32.mxu0 0.0
  %1661 = vmatmul.mubr.f32.gmra.mrb[0].mxu0 %v161
  %v1662 = vpop.f32.mrb[0].mxu0
  %v1663 = vadd.f32 0.0, %v1662
  %v1664 = vpop.f32.mrb[0].mxu0
  %v1665 = vadd.f32 0.0, %v1664
  %1666 = vmatprep.mubr.f32.mxu0 0.0
  %1667 = vmatmul.mubr.f32.gmra.mrb[0].mxu0 %v164
  %v1668 = vpop.f32.mrb[0].mxu0
  %v1669 = vadd.f32 0.0, %v1668
  %v1670 = vpop.f32.mrb[0].mxu0
  %v1671 = vadd.f32 0.0, %v1670
  %1672 = vdwg.mxu0
  %1673 = vmatprep.subr.mxu0 %v52
  %1674 = vmatpush1.msra.mxu0 %v51
  %1675 = vmatprep.subr.mxu0 %v77
  %1676 = vmatpush1.msra.mxu0 %v76
  %1677 = vmatprep.subr.mxu0 %v102
  %1678 = vmatpush1.msra.mxu0 %v101
  %1679 = vmatprep.subr.mxu0 %v127
  %1680 = vmatpush1.msra.mxu0 %v126
  %1681 = vmatprep.subr.mxu0 0.0
  %1682 = vmatpush1.msra.mxu0 0.0
  %1683 = vmatprep.subr.mxu0 0.0
  %1684 = vmatpush1.msra.mxu0 0.0
  %1685 = vmatprep.subr.mxu0 0.0
  %1686 = vmatpush1.msra.mxu0 0.0
  %1687 = vmatprep.subr.mxu0 0.0
  %1688 = vmatpush1.msra.mxu0 0.0
  %1689 = vmatprep.subr.mxu0 0.0
  %1690 = vmatpush1.msra.mxu0 0.0
  %1691 = vmatprep.subr.mxu0 0.0
  %1692 = vmatpush1.msra.mxu0 0.0
  %1693 = vmatprep.subr.mxu0 0.0
  %1694 = vmatpush1.msra.mxu0 0.0
  %1695 = vmatprep.subr.mxu0 0.0
  %1696 = vmatpush1.msra.mxu0 0.0
  %1697 = vmatprep.subr.mxu0 0.0
  %1698 = vmatpush1.msra.mxu0 0.0
  %1699 = vmatprep.subr.mxu0 0.0
  %1700 = vmatpush1.msra.mxu0 0.0
  %1701 = vmatprep.subr.mxu0 0.0
  %1702 = vmatpush1.msra.mxu0 0.0
  %1703 = vmatprep.subr.mxu0 0.0
  %1704 = vmatpush1.msra.mxu0 0.0
  %1705 = vmatprep.subr.mxu0 0.0
  %1706 = vmatpush1.msra.mxu0 0.0
  %1707 = vmatprep.subr.mxu0 0.0
  %1708 = vmatpush1.msra.mxu0 0.0
  %1709 = vmatprep.subr.mxu0 0.0
  %1710 = vmatpush1.msra.mxu0 0.0
  %1711 = vmatprep.subr.mxu0 0.0
  %1712 = vmatpush1.msra.mxu0 0.0
  %1713 = vmatprep.subr.mxu0 0.0
  %1714 = vmatpush1.msra.mxu0 0.0
  %1715 = vmatprep.subr.mxu0 0.0
  %1716 = vmatpush1.msra.mxu0 0.0
  %1717 = vmatprep.subr.mxu0 0.0
  %1718 = vmatpush1.msra.mxu0 0.0
  %1719 = vmatprep.subr.mxu0 0.0
  %1720 = vmatpush1.msra.mxu0 0.0
  %1721 = vmatprep.subr.mxu0 0.0
  %1722 = vmatpush1.msra.mxu0 0.0
  %1723 = vmatprep.subr.mxu0 0.0
  %1724 = vmatpush1.msra.mxu0 0.0
  %1725 = vmatprep.subr.mxu0 0.0
  %1726 = vmatpush1.msra.mxu0 0.0
  %1727 = vmatprep.subr.mxu0 0.0
  %1728 = vmatpush1.msra.mxu0 0.0
  %1729 = vmatprep.subr.mxu0 0.0
  %1730 = vmatpush1.msra.mxu0 0.0
  %1731 = vmatprep.subr.mxu0 0.0
  %1732 = vmatpush1.msra.mxu0 0.0
  %1733 = vmatprep.subr.mxu0 0.0
  %1734 = vmatpush1.msra.mxu0 0.0
  %1735 = vmatprep.subr.mxu0 0.0
  %1736 = vmatpush1.msra.mxu0 0.0
  %1737 = vmatprep.mubr.f32.mxu0 0.0
  %1738 = vmatmul.mubr.f32.gmra.mrb[0].mxu0 %v131
  %v1739 = vpop.f32.mrb[0].mxu0
  %v1740 = vadd.f32 0.0, %v1739
  %v1741 = vpop.f32.mrb[0].mxu0
  %v1742 = vadd.f32 0.0, %v1741
  %1743 = vmatprep.mubr.f32.mxu0 0.0
  %1744 = vmatmul.mubr.f32.gmra.mrb[0].mxu0 %v134
  %v1745 = vpop.f32.mrb[0].mxu0
  %v1746 = vadd.f32 0.0, %v1745
  %v1747 = vpop.f32.mrb[0].mxu0
  %v1748 = vadd.f32 0.0, %v1747
  %1749 = vmatprep.mubr.f32.mxu0 0.0
  %1750 = vmatmul.mubr.f32.gmra.mrb[0].mxu0 %v137
  %v1751 = vpop.f32.mrb[0].mxu0
  %v1752 = vadd.f32 0.0, %v1751
  %v1753 = vpop.f32.mrb[0].mxu0
  %v1754 = vadd.f32 0.0, %v1753
  %1755 = vmatprep.mubr.f32.mxu0 0.0
  %1756 = vmatmul.mubr.f32.gmra.mrb[0].mxu0 %v140
  %v1757 = vpop.f32.mrb[0].mxu0
  %v1758 = vadd.f32 0.0, %v1757
  %v1759 = vpop.f32.mrb[0].mxu0
  %v1760 = vadd.f32 0.0, %v1759
  %1761 = vmatprep.mubr.f32.mxu0 0.0
  %1762 = vmatmul.mubr.f32.gmra.mrb[0].mxu0 %v143
  %v1763 = vpop.f32.mrb[0].mxu0
  %v1764 = vadd.f32 0.0, %v1763
  %v1765 = vpop.f32.mrb[0].mxu0
  %v1766 = vadd.f32 0.0, %v1765
  %1767 = vmatprep.mubr.f32.mxu0 0.0
  %1768 = vmatmul.mubr.f32.gmra.mrb[0].mxu0 %v146
  %v1769 = vpop.f32.mrb[0].mxu0
  %v1770 = vadd.f32 0.0, %v1769
  %v1771 = vpop.f32.mrb[0].mxu0
  %v1772 = vadd.f32 0.0, %v1771
  %1773 = vmatprep.mubr.f32.mxu0 0.0
  %1774 = vmatmul.mubr.f32.gmra.mrb[0].mxu0 %v149
  %v1775 = vpop.f32.mrb[0].mxu0
  %v1776 = vadd.f32 0.0, %v1775
  %v1777 = vpop.f32.mrb[0].mxu0
  %v1778 = vadd.f32 0.0, %v1777
  %1779 = vmatprep.mubr.f32.mxu0 0.0
  %1780 = vmatmul.mubr.f32.gmra.mrb[0].mxu0 %v152
  %v1781 = vpop.f32.mrb[0].mxu0
  %v1782 = vadd.f32 0.0, %v1781
  %v1783 = vpop.f32.mrb[0].mxu0
  %v1784 = vadd.f32 0.0, %v1783
  %1785 = vmatprep.mubr.f32.mxu0 0.0
  %1786 = vmatmul.mubr.f32.gmra.mrb[0].mxu0 %v155
  %v1787 = vpop.f32.mrb[0].mxu0
  %v1788 = vadd.f32 0.0, %v1787
  %v1789 = vpop.f32.mrb[0].mxu0
  %v1790 = vadd.f32 0.0, %v1789
  %1791 = vmatprep.mubr.f32.mxu0 0.0
  %1792 = vmatmul.mubr.f32.gmra.mrb[0].mxu0 %v158
  %v1793 = vpop.f32.mrb[0].mxu0
  %v1794 = vadd.f32 0.0, %v1793
  %v1795 = vpop.f32.mrb[0].mxu0
  %v1796 = vadd.f32 0.0, %v1795
  %1797 = vmatprep.mubr.f32.mxu0 0.0
  %1798 = vmatmul.mubr.f32.gmra.mrb[0].mxu0 %v161
  %v1799 = vpop.f32.mrb[0].mxu0
  %v1800 = vadd.f32 0.0, %v1799
  %v1801 = vpop.f32.mrb[0].mxu0
  %v1802 = vadd.f32 0.0, %v1801
  %1803 = vmatprep.mubr.f32.mxu0 0.0
  %1804 = vmatmul.mubr.f32.gmra.mrb[0].mxu0 %v164
  %v1805 = vpop.f32.mrb[0].mxu0
  %v1806 = vadd.f32 0.0, %v1805
  %v1807 = vpop.f32.mrb[0].mxu0
  %v1808 = vadd.f32 0.0, %v1807
  %1809 = vdwg.mxu0
  %1810 = vmatprep.subr.mxu0 0.0
  %1811 = vmatpush1.msra.mxu0 %v53
  %1812 = vmatprep.subr.mxu0 0.0
  %1813 = vmatpush1.msra.mxu0 %v78
  %1814 = vmatprep.subr.mxu0 0.0
  %1815 = vmatpush1.msra.mxu0 %v103
  %1816 = vmatprep.subr.mxu0 0.0
  %1817 = vmatpush1.msra.mxu0 %v128
  %1818 = vmatprep.subr.mxu0 0.0
  %1819 = vmatpush1.msra.mxu0 0.0
  %1820 = vmatprep.subr.mxu0 0.0
  %1821 = vmatpush1.msra.mxu0 0.0
  %1822 = vmatprep.subr.mxu0 0.0
  %1823 = vmatpush1.msra.mxu0 0.0
  %1824 = vmatprep.subr.mxu0 0.0
  %1825 = vmatpush1.msra.mxu0 0.0
  %1826 = vmatprep.subr.mxu0 0.0
  %1827 = vmatpush1.msra.mxu0 0.0
  %1828 = vmatprep.subr.mxu0 0.0
  %1829 = vmatpush1.msra.mxu0 0.0
  %1830 = vmatprep.subr.mxu0 0.0
  %1831 = vmatpush1.msra.mxu0 0.0
  %1832 = vmatprep.subr.mxu0 0.0
  %1833 = vmatpush1.msra.mxu0 0.0
  %1834 = vmatprep.subr.mxu0 0.0
  %1835 = vmatpush1.msra.mxu0 0.0
  %1836 = vmatprep.subr.mxu0 0.0
  %1837 = vmatpush1.msra.mxu0 0.0
  %1838 = vmatprep.subr.mxu0 0.0
  %1839 = vmatpush1.msra.mxu0 0.0
  %1840 = vmatprep.subr.mxu0 0.0
  %1841 = vmatpush1.msra.mxu0 0.0
  %1842 = vmatprep.subr.mxu0 0.0
  %1843 = vmatpush1.msra.mxu0 0.0
  %1844 = vmatprep.subr.mxu0 0.0
  %1845 = vmatpush1.msra.mxu0 0.0
  %1846 = vmatprep.subr.mxu0 0.0
  %1847 = vmatpush1.msra.mxu0 0.0
  %1848 = vmatprep.subr.mxu0 0.0
  %1849 = vmatpush1.msra.mxu0 0.0
  %1850 = vmatprep.subr.mxu0 0.0
  %1851 = vmatpush1.msra.mxu0 0.0
  %1852 = vmatprep.subr.mxu0 0.0
  %1853 = vmatpush1.msra.mxu0 0.0
  %1854 = vmatprep.subr.mxu0 0.0
  %1855 = vmatpush1.msra.mxu0 0.0
  %1856 = vmatprep.subr.mxu0 0.0
  %1857 = vmatpush1.msra.mxu0 0.0
  %1858 = vmatprep.subr.mxu0 0.0
  %1859 = vmatpush1.msra.mxu0 0.0
  %1860 = vmatprep.subr.mxu0 0.0
  %1861 = vmatpush1.msra.mxu0 0.0
  %1862 = vmatprep.subr.mxu0 0.0
  %1863 = vmatpush1.msra.mxu0 0.0
  %1864 = vmatprep.subr.mxu0 0.0
  %1865 = vmatpush1.msra.mxu0 0.0
  %1866 = vmatprep.subr.mxu0 0.0
  %1867 = vmatpush1.msra.mxu0 0.0
  %1868 = vmatprep.subr.mxu0 0.0
  %1869 = vmatpush1.msra.mxu0 0.0
  %1870 = vmatprep.subr.mxu0 0.0
  %1871 = vmatpush1.msra.mxu0 0.0
  %1872 = vmatprep.subr.mxu0 0.0
  %1873 = vmatpush1.msra.mxu0 0.0
  %1874 = vmatprep.mubr.f32.mxu0 0.0
  %1875 = vmatmul.mubr.f32.gmra.mrb[0].mxu0 %v131
  %v1876 = vpop.f32.mrb[0].mxu0
  %v1877 = vadd.f32 0.0, %v1876
  %v1878 = vpop.f32.mrb[0].mxu0
  %1879 = vmatprep.mubr.f32.mxu0 0.0
  %1880 = vmatmul.mubr.f32.gmra.mrb[0].mxu0 %v134
  %v1881 = vpop.f32.mrb[0].mxu0
  %v1882 = vadd.f32 0.0, %v1881
  %v1883 = vpop.f32.mrb[0].mxu0
  %1884 = vmatprep.mubr.f32.mxu0 0.0
  %1885 = vmatmul.mubr.f32.gmra.mrb[0].mxu0 %v137
  %v1886 = vpop.f32.mrb[0].mxu0
  %v1887 = vadd.f32 0.0, %v1886
  %v1888 = vpop.f32.mrb[0].mxu0
  %1889 = vmatprep.mubr.f32.mxu0 0.0
  %1890 = vmatmul.mubr.f32.gmra.mrb[0].mxu0 %v140
  %v1891 = vpop.f32.mrb[0].mxu0
  %v1892 = vadd.f32 0.0, %v1891
  %v1893 = vpop.f32.mrb[0].mxu0
  %1894 = vmatprep.mubr.f32.mxu0 0.0
  %1895 = vmatmul.mubr.f32.gmra.mrb[0].mxu0 %v143
  %v1896 = vpop.f32.mrb[0].mxu0
  %v1897 = vadd.f32 0.0, %v1896
  %v1898 = vpop.f32.mrb[0].mxu0
  %1899 = vmatprep.mubr.f32.mxu0 0.0
  %1900 = vmatmul.mubr.f32.gmra.mrb[0].mxu0 %v146
  %v1901 = vpop.f32.mrb[0].mxu0
  %v1902 = vadd.f32 0.0, %v1901
  %v1903 = vpop.f32.mrb[0].mxu0
  %1904 = vmatprep.mubr.f32.mxu0 0.0
  %1905 = vmatmul.mubr.f32.gmra.mrb[0].mxu0 %v149
  %v1906 = vpop.f32.mrb[0].mxu0
  %v1907 = vadd.f32 0.0, %v1906
  %v1908 = vpop.f32.mrb[0].mxu0
  %1909 = vmatprep.mubr.f32.mxu0 0.0
  %1910 = vmatmul.mubr.f32.gmra.mrb[0].mxu0 %v152
  %v1911 = vpop.f32.mrb[0].mxu0
  %v1912 = vadd.f32 0.0, %v1911
  %v1913 = vpop.f32.mrb[0].mxu0
  %1914 = vmatprep.mubr.f32.mxu0 0.0
  %1915 = vmatmul.mubr.f32.gmra.mrb[0].mxu0 %v155
  %v1916 = vpop.f32.mrb[0].mxu0
  %v1917 = vadd.f32 0.0, %v1916
  %v1918 = vpop.f32.mrb[0].mxu0
  %1919 = vmatprep.mubr.f32.mxu0 0.0
  %1920 = vmatmul.mubr.f32.gmra.mrb[0].mxu0 %v158
  %v1921 = vpop.f32.mrb[0].mxu0
  %v1922 = vadd.f32 0.0, %v1921
  %v1923 = vpop.f32.mrb[0].mxu0
  %1924 = vmatprep.mubr.f32.mxu0 0.0
  %1925 = vmatmul.mubr.f32.gmra.mrb[0].mxu0 %v161
  %v1926 = vpop.f32.mrb[0].mxu0
  %v1927 = vadd.f32 0.0, %v1926
  %v1928 = vpop.f32.mrb[0].mxu0
  %1929 = vmatprep.mubr.f32.mxu0 0.0
  %1930 = vmatmul.mubr.f32.gmra.mrb[0].mxu0 %v164
  %v1931 = vpop.f32.mrb[0].mxu0
  %v1932 = vadd.f32 0.0, %v1931
  %v1933 = vpop.f32.mrb[0].mxu0
  %1934 = vdwg.mxu0
  %1935 = vst [vmem:[%s4] sm:$0xff] %v233
  %1936 = vst [vmem:[%s4 + $0x8] sm:$0xff] %v235
  %1937 = vst [vmem:[%s4 + $0x10] sm:$0xff] %v370
  %1938 = vst [vmem:[%s4 + $0x18] sm:$0xff] %v372
  %1939 = vst [vmem:[%s4 + $0x20] sm:$0xff] %v507
  %1940 = vst [vmem:[%s4 + $0x28] sm:$0xff] %v509
  %1941 = vst [vmem:[%s4 + $0x30] sm:$0xff] %v644
  %1942 = vst [vmem:[%s4 + $0x38] sm:$0xff] %v646
  %1943 = vst [vmem:[%s4 + $0x40] sm:$0xff] %v781
  %1944 = vst [vmem:[%s4 + $0x48] sm:$0xff] %v783
  %1945 = vst [vmem:[%s4 + $0x50] sm:$0xff] %v918
  %1946 = vst [vmem:[%s4 + $0x58] sm:$0xff] %v920
  %1947 = vst [vmem:[%s4 + $0x60] sm:$0xff] %v1055
  %1948 = vst [vmem:[%s4 + $0x68] sm:$0xff] %v1057
  %1949 = vst [vmem:[%s4 + $0x70] sm:$0xff] %v1192
  %1950 = vst [vmem:[%s4 + $0x78] sm:$0xff] %v1194
  %1951 = vst [vmem:[%s4 + $0x80] sm:$0xff] %v1329
  %1952 = vst [vmem:[%s4 + $0x88] sm:$0xff] %v1331
  %1953 = vst [vmem:[%s4 + $0x90] sm:$0xff] %v1466
  %1954 = vst [vmem:[%s4 + $0x98] sm:$0xff] %v1468
  %1955 = vst [vmem:[%s4 + $0xa0] sm:$0xff] %v1603
  %1956 = vst [vmem:[%s4 + $0xa8] sm:$0xff] %v1605
  %1957 = vst [vmem:[%s4 + $0xb0] sm:$0xff] %v1740
  %1958 = vst [vmem:[%s4 + $0xb8] sm:$0xff] %v1742
  %vm1959 = vcmask 523264
  %1960 = vst.msk [vmem:[%s4 + $0xc0] sm:$0xff] %vm1959, %v1877
  %1961 = vst [vmem:[%s4 + $0xc8] sm:$0xff] %v239
  %1962 = vst [vmem:[%s4 + $0xd0] sm:$0xff] %v241
  %1963 = vst [vmem:[%s4 + $0xd8] sm:$0xff] %v376
  %1964 = vst [vmem:[%s4 + $0xe0] sm:$0xff] %v378
  %1965 = vst [vmem:[%s4 + $0xe8] sm:$0xff] %v513
  %1966 = vst [vmem:[%s4 + $0xf0] sm:$0xff] %v515
  %1967 = vst [vmem:[%s4 + $0xf8] sm:$0xff] %v650
  %1968 = vst [vmem:[%s4 + $0x100] sm:$0xff] %v652
  %1969 = vst [vmem:[%s4 + $0x108] sm:$0xff] %v787
  %1970 = vst [vmem:[%s4 + $0x110] sm:$0xff] %v789
  %1971 = vst [vmem:[%s4 + $0x118] sm:$0xff] %v924
  %1972 = vst [vmem:[%s4 + $0x120] sm:$0xff] %v926
  %1973 = vst [vmem:[%s4 + $0x128] sm:$0xff] %v1061
  %1974 = vst [vmem:[%s4 + $0x130] sm:$0xff] %v1063
  %1975 = vst [vmem:[%s4 + $0x138] sm:$0xff] %v1198
  %1976 = vst [vmem:[%s4 + $0x140] sm:$0xff] %v1200
  %1977 = vst [vmem:[%s4 + $0x148] sm:$0xff] %v1335
  %1978 = vst [vmem:[%s4 + $0x150] sm:$0xff] %v1337
  %1979 = vst [vmem:[%s4 + $0x158] sm:$0xff] %v1472
  %1980 = vst [vmem:[%s4 + $0x160] sm:$0xff] %v1474
  %1981 = vst [vmem:[%s4 + $0x168] sm:$0xff] %v1609
  %1982 = vst [vmem:[%s4 + $0x170] sm:$0xff] %v1611
  %1983 = vst [vmem:[%s4 + $0x178] sm:$0xff] %v1746
  %1984 = vst [vmem:[%s4 + $0x180] sm:$0xff] %v1748
  %1985 = vst.msk [vmem:[%s4 + $0x188] sm:$0xff] %vm1959, %v1882
  %1986 = vst [vmem:[%s4 + $0x190] sm:$0xff] %v245
  %1987 = vst [vmem:[%s4 + $0x198] sm:$0xff] %v247
  %1988 = vst [vmem:[%s4 + $0x1a0] sm:$0xff] %v382
  %1989 = vst [vmem:[%s4 + $0x1a8] sm:$0xff] %v384
  %1990 = vst [vmem:[%s4 + $0x1b0] sm:$0xff] %v519
  %1991 = vst [vmem:[%s4 + $0x1b8] sm:$0xff] %v521
  %1992 = vst [vmem:[%s4 + $0x1c0] sm:$0xff] %v656
  %1993 = vst [vmem:[%s4 + $0x1c8] sm:$0xff] %v658
  %1994 = vst [vmem:[%s4 + $0x1d0] sm:$0xff] %v793
  %1995 = vst [vmem:[%s4 + $0x1d8] sm:$0xff] %v795
  %1996 = vst [vmem:[%s4 + $0x1e0] sm:$0xff] %v930
  %1997 = vst [vmem:[%s4 + $0x1e8] sm:$0xff] %v932
  %1998 = vst [vmem:[%s4 + $0x1f0] sm:$0xff] %v1067
  %1999 = vst [vmem:[%s4 + $0x1f8] sm:$0xff] %v1069
  %2000 = vst [vmem:[%s4 + $0x200] sm:$0xff] %v1204
  %2001 = vst [vmem:[%s4 + $0x208] sm:$0xff] %v1206
  %2002 = vst [vmem:[%s4 + $0x210] sm:$0xff] %v1341
  %2003 = vst [vmem:[%s4 + $0x218] sm:$0xff] %v1343
  %2004 = vst [vmem:[%s4 + $0x220] sm:$0xff] %v1478
  %2005 = vst [vmem:[%s4 + $0x228] sm:$0xff] %v1480
  %2006 = vst [vmem:[%s4 + $0x230] sm:$0xff] %v1615
  %2007 = vst [vmem:[%s4 + $0x238] sm:$0xff] %v1617
  %2008 = vst [vmem:[%s4 + $0x240] sm:$0xff] %v1752
  %2009 = vst [vmem:[%s4 + $0x248] sm:$0xff] %v1754
  %2010 = vst.msk [vmem:[%s4 + $0x250] sm:$0xff] %vm1959, %v1887
  %2011 = vst [vmem:[%s4 + $0x258] sm:$0xff] %v251
  %2012 = vst [vmem:[%s4 + $0x260] sm:$0xff] %v253
  %2013 = vst [vmem:[%s4 + $0x268] sm:$0xff] %v388
  %2014 = vst [vmem:[%s4 + $0x270] sm:$0xff] %v390
  %2015 = vst [vmem:[%s4 + $0x278] sm:$0xff] %v525
  %2016 = vst [vmem:[%s4 + $0x280] sm:$0xff] %v527
  %2017 = vst [vmem:[%s4 + $0x288] sm:$0xff] %v662
  %2018 = vst [vmem:[%s4 + $0x290] sm:$0xff] %v664
  %2019 = vst [vmem:[%s4 + $0x298] sm:$0xff] %v799
  %2020 = vst [vmem:[%s4 + $0x2a0] sm:$0xff] %v801
  %2021 = vst [vmem:[%s4 + $0x2a8] sm:$0xff] %v936
  %2022 = vst [vmem:[%s4 + $0x2b0] sm:$0xff] %v938
  %2023 = vst [vmem:[%s4 + $0x2b8] sm:$0xff] %v1073
  %2024 = vst [vmem:[%s4 + $0x2c0] sm:$0xff] %v1075
  %2025 = vst [vmem:[%s4 + $0x2c8] sm:$0xff] %v1210
  %2026 = vst [vmem:[%s4 + $0x2d0] sm:$0xff] %v1212
  %2027 = vst [vmem:[%s4 + $0x2d8] sm:$0xff] %v1347
  %2028 = vst [vmem:[%s4 + $0x2e0] sm:$0xff] %v1349
  %2029 = vst [vmem:[%s4 + $0x2e8] sm:$0xff] %v1484
  %2030 = vst [vmem:[%s4 + $0x2f0] sm:$0xff] %v1486
  %2031 = vst [vmem:[%s4 + $0x2f8] sm:$0xff] %v1621
  %2032 = vst [vmem:[%s4 + $0x300] sm:$0xff] %v1623
  %2033 = vst [vmem:[%s4 + $0x308] sm:$0xff] %v1758
  %2034 = vst [vmem:[%s4 + $0x310] sm:$0xff] %v1760
  %2035 = vst.msk [vmem:[%s4 + $0x318] sm:$0xff] %vm1959, %v1892
  %2036 = vst [vmem:[%s4 + $0x320] sm:$0xff] %v257
  %2037 = vst [vmem:[%s4 + $0x328] sm:$0xff] %v259
  %2038 = vst [vmem:[%s4 + $0x330] sm:$0xff] %v394
  %2039 = vst [vmem:[%s4 + $0x338] sm:$0xff] %v396
  %2040 = vst [vmem:[%s4 + $0x340] sm:$0xff] %v531
  %2041 = vst [vmem:[%s4 + $0x348] sm:$0xff] %v533
  %2042 = vst [vmem:[%s4 + $0x350] sm:$0xff] %v668
  %2043 = vst [vmem:[%s4 + $0x358] sm:$0xff] %v670
  %2044 = vst [vmem:[%s4 + $0x360] sm:$0xff] %v805
  %2045 = vst [vmem:[%s4 + $0x368] sm:$0xff] %v807
  %2046 = vst [vmem:[%s4 + $0x370] sm:$0xff] %v942
  %2047 = vst [vmem:[%s4 + $0x378] sm:$0xff] %v944
  %2048 = vst [vmem:[%s4 + $0x380] sm:$0xff] %v1079
  %2049 = vst [vmem:[%s4 + $0x388] sm:$0xff] %v1081
  %2050 = vst [vmem:[%s4 + $0x390] sm:$0xff] %v1216
  %2051 = vst [vmem:[%s4 + $0x398] sm:$0xff] %v1218
  %2052 = vst [vmem:[%s4 + $0x3a0] sm:$0xff] %v1353
  %2053 = vst [vmem:[%s4 + $0x3a8] sm:$0xff] %v1355
  %2054 = vst [vmem:[%s4 + $0x3b0] sm:$0xff] %v1490
  %2055 = vst [vmem:[%s4 + $0x3b8] sm:$0xff] %v1492
  %2056 = vst [vmem:[%s4 + $0x3c0] sm:$0xff] %v1627
  %2057 = vst [vmem:[%s4 + $0x3c8] sm:$0xff] %v1629
  %2058 = vst [vmem:[%s4 + $0x3d0] sm:$0xff] %v1764
  %2059 = vst [vmem:[%s4 + $0x3d8] sm:$0xff] %v1766
  %2060 = vst.msk [vmem:[%s4 + $0x3e0] sm:$0xff] %vm1959, %v1897
  %2061 = vst [vmem:[%s4 + $0x3e8] sm:$0xff] %v263
  %2062 = vst [vmem:[%s4 + $0x3f0] sm:$0xff] %v265
  %2063 = vst [vmem:[%s4 + $0x3f8] sm:$0xff] %v400
  %2064 = vst [vmem:[%s4 + $0x400] sm:$0xff] %v402
  %2065 = vst [vmem:[%s4 + $0x408] sm:$0xff] %v537
  %2066 = vst [vmem:[%s4 + $0x410] sm:$0xff] %v539
  %2067 = vst [vmem:[%s4 + $0x418] sm:$0xff] %v674
  %2068 = vst [vmem:[%s4 + $0x420] sm:$0xff] %v676
  %2069 = vst [vmem:[%s4 + $0x428] sm:$0xff] %v811
  %2070 = vst [vmem:[%s4 + $0x430] sm:$0xff] %v813
  %2071 = vst [vmem:[%s4 + $0x438] sm:$0xff] %v948
  %2072 = vst [vmem:[%s4 + $0x440] sm:$0xff] %v950
  %2073 = vst [vmem:[%s4 + $0x448] sm:$0xff] %v1085
  %2074 = vst [vmem:[%s4 + $0x450] sm:$0xff] %v1087
  %2075 = vst [vmem:[%s4 + $0x458] sm:$0xff] %v1222
  %2076 = vst [vmem:[%s4 + $0x460] sm:$0xff] %v1224
  %2077 = vst [vmem:[%s4 + $0x468] sm:$0xff] %v1359
  %2078 = vst [vmem:[%s4 + $0x470] sm:$0xff] %v1361
  %2079 = vst [vmem:[%s4 + $0x478] sm:$0xff] %v1496
  %2080 = vst [vmem:[%s4 + $0x480] sm:$0xff] %v1498
  %2081 = vst [vmem:[%s4 + $0x488] sm:$0xff] %v1633
  %2082 = vst [vmem:[%s4 + $0x490] sm:$0xff] %v1635
  %2083 = vst [vmem:[%s4 + $0x498] sm:$0xff] %v1770
  %2084 = vst [vmem:[%s4 + $0x4a0] sm:$0xff] %v1772
  %2085 = vst.msk [vmem:[%s4 + $0x4a8] sm:$0xff] %vm1959, %v1902
  %2086 = vst [vmem:[%s4 + $0x4b0] sm:$0xff] %v269
  %2087 = vst [vmem:[%s4 + $0x4b8] sm:$0xff] %v271
  %2088 = vst [vmem:[%s4 + $0x4c0] sm:$0xff] %v406
  %2089 = vst [vmem:[%s4 + $0x4c8] sm:$0xff] %v408
  %2090 = vst [vmem:[%s4 + $0x4d0] sm:$0xff] %v543
  %2091 = vst [vmem:[%s4 + $0x4d8] sm:$0xff] %v545
  %2092 = vst [vmem:[%s4 + $0x4e0] sm:$0xff] %v680
  %2093 = vst [vmem:[%s4 + $0x4e8] sm:$0xff] %v682
  %2094 = vst [vmem:[%s4 + $0x4f0] sm:$0xff] %v817
  %2095 = vst [vmem:[%s4 + $0x4f8] sm:$0xff] %v819
  %2096 = vst [vmem:[%s4 + $0x500] sm:$0xff] %v954
  %2097 = vst [vmem:[%s4 + $0x508] sm:$0xff] %v956
  %2098 = vst [vmem:[%s4 + $0x510] sm:$0xff] %v1091
  %2099 = vst [vmem:[%s4 + $0x518] sm:$0xff] %v1093
  %2100 = vst [vmem:[%s4 + $0x520] sm:$0xff] %v1228
  %2101 = vst [vmem:[%s4 + $0x528] sm:$0xff] %v1230
  %2102 = vst [vmem:[%s4 + $0x530] sm:$0xff] %v1365
  %2103 = vst [vmem:[%s4 + $0x538] sm:$0xff] %v1367
  %2104 = vst [vmem:[%s4 + $0x540] sm:$0xff] %v1502
  %2105 = vst [vmem:[%s4 + $0x548] sm:$0xff] %v1504
  %2106 = vst [vmem:[%s4 + $0x550] sm:$0xff] %v1639
  %2107 = vst [vmem:[%s4 + $0x558] sm:$0xff] %v1641
  %2108 = vst [vmem:[%s4 + $0x560] sm:$0xff] %v1776
  %2109 = vst [vmem:[%s4 + $0x568] sm:$0xff] %v1778
  %2110 = vst.msk [vmem:[%s4 + $0x570] sm:$0xff] %vm1959, %v1907
  %2111 = vst [vmem:[%s4 + $0x578] sm:$0xff] %v275
  %2112 = vst [vmem:[%s4 + $0x580] sm:$0xff] %v277
  %2113 = vst [vmem:[%s4 + $0x588] sm:$0xff] %v412
  %2114 = vst [vmem:[%s4 + $0x590] sm:$0xff] %v414
  %2115 = vst [vmem:[%s4 + $0x598] sm:$0xff] %v549
  %2116 = vst [vmem:[%s4 + $0x5a0] sm:$0xff] %v551
  %2117 = vst [vmem:[%s4 + $0x5a8] sm:$0xff] %v686
  %2118 = vst [vmem:[%s4 + $0x5b0] sm:$0xff] %v688
  %2119 = vst [vmem:[%s4 + $0x5b8] sm:$0xff] %v823
  %2120 = vst [vmem:[%s4 + $0x5c0] sm:$0xff] %v825
  %2121 = vst [vmem:[%s4 + $0x5c8] sm:$0xff] %v960
  %2122 = vst [vmem:[%s4 + $0x5d0] sm:$0xff] %v962
  %2123 = vst [vmem:[%s4 + $0x5d8] sm:$0xff] %v1097
  %2124 = vst [vmem:[%s4 + $0x5e0] sm:$0xff] %v1099
  %2125 = vst [vmem:[%s4 + $0x5e8] sm:$0xff] %v1234
  %2126 = vst [vmem:[%s4 + $0x5f0] sm:$0xff] %v1236
  %2127 = vst [vmem:[%s4 + $0x5f8] sm:$0xff] %v1371
  %2128 = vst [vmem:[%s4 + $0x600] sm:$0xff] %v1373
  %2129 = vst [vmem:[%s4 + $0x608] sm:$0xff] %v1508
  %2130 = vst [vmem:[%s4 + $0x610] sm:$0xff] %v1510
  %2131 = vst [vmem:[%s4 + $0x618] sm:$0xff] %v1645
  %2132 = vst [vmem:[%s4 + $0x620] sm:$0xff] %v1647
  %2133 = vst [vmem:[%s4 + $0x628] sm:$0xff] %v1782
  %2134 = vst [vmem:[%s4 + $0x630] sm:$0xff] %v1784
  %2135 = vst.msk [vmem:[%s4 + $0x638] sm:$0xff] %vm1959, %v1912
  %2136 = vst [vmem:[%s4 + $0x640] sm:$0xff] %v281
  %2137 = vst [vmem:[%s4 + $0x648] sm:$0xff] %v283
  %2138 = vst [vmem:[%s4 + $0x650] sm:$0xff] %v418
  %2139 = vst [vmem:[%s4 + $0x658] sm:$0xff] %v420
  %2140 = vst [vmem:[%s4 + $0x660] sm:$0xff] %v555
  %2141 = vst [vmem:[%s4 + $0x668] sm:$0xff] %v557
  %2142 = vst [vmem:[%s4 + $0x670] sm:$0xff] %v692
  %2143 = vst [vmem:[%s4 + $0x678] sm:$0xff] %v694
  %2144 = vst [vmem:[%s4 + $0x680] sm:$0xff] %v829
  %2145 = vst [vmem:[%s4 + $0x688] sm:$0xff] %v831
  %2146 = vst [vmem:[%s4 + $0x690] sm:$0xff] %v966
  %2147 = vst [vmem:[%s4 + $0x698] sm:$0xff] %v968
  %2148 = vst [vmem:[%s4 + $0x6a0] sm:$0xff] %v1103
  %2149 = vst [vmem:[%s4 + $0x6a8] sm:$0xff] %v1105
  %2150 = vst [vmem:[%s4 + $0x6b0] sm:$0xff] %v1240
  %2151 = vst [vmem:[%s4 + $0x6b8] sm:$0xff] %v1242
  %2152 = vst [vmem:[%s4 + $0x6c0] sm:$0xff] %v1377
  %2153 = vst [vmem:[%s4 + $0x6c8] sm:$0xff] %v1379
  %2154 = vst [vmem:[%s4 + $0x6d0] sm:$0xff] %v1514
  %2155 = vst [vmem:[%s4 + $0x6d8] sm:$0xff] %v1516
  %2156 = vst [vmem:[%s4 + $0x6e0] sm:$0xff] %v1651
  %2157 = vst [vmem:[%s4 + $0x6e8] sm:$0xff] %v1653
  %2158 = vst [vmem:[%s4 + $0x6f0] sm:$0xff] %v1788
  %2159 = vst [vmem:[%s4 + $0x6f8] sm:$0xff] %v1790
  %2160 = vst.msk [vmem:[%s4 + $0x700] sm:$0xff] %vm1959, %v1917
  %2161 = vst [vmem:[%s4 + $0x708] sm:$0xff] %v287
  %2162 = vst [vmem:[%s4 + $0x710] sm:$0xff] %v289
  %2163 = vst [vmem:[%s4 + $0x718] sm:$0xff] %v424
  %2164 = vst [vmem:[%s4 + $0x720] sm:$0xff] %v426
  %2165 = vst [vmem:[%s4 + $0x728] sm:$0xff] %v561
  %2166 = vst [vmem:[%s4 + $0x730] sm:$0xff] %v563
  %2167 = vst [vmem:[%s4 + $0x738] sm:$0xff] %v698
  %2168 = vst [vmem:[%s4 + $0x740] sm:$0xff] %v700
  %2169 = vst [vmem:[%s4 + $0x748] sm:$0xff] %v835
  %2170 = vst [vmem:[%s4 + $0x750] sm:$0xff] %v837
  %2171 = vst [vmem:[%s4 + $0x758] sm:$0xff] %v972
  %2172 = vst [vmem:[%s4 + $0x760] sm:$0xff] %v974
  %2173 = vst [vmem:[%s4 + $0x768] sm:$0xff] %v1109
  %2174 = vst [vmem:[%s4 + $0x770] sm:$0xff] %v1111
  %2175 = vst [vmem:[%s4 + $0x778] sm:$0xff] %v1246
  %2176 = vst [vmem:[%s4 + $0x780] sm:$0xff] %v1248
  %2177 = vst [vmem:[%s4 + $0x788] sm:$0xff] %v1383
  %2178 = vst [vmem:[%s4 + $0x790] sm:$0xff] %v1385
  %2179 = vst [vmem:[%s4 + $0x798] sm:$0xff] %v1520
  %2180 = vst [vmem:[%s4 + $0x7a0] sm:$0xff] %v1522
  %2181 = vst [vmem:[%s4 + $0x7a8] sm:$0xff] %v1657
  %2182 = vst [vmem:[%s4 + $0x7b0] sm:$0xff] %v1659
  %2183 = vst [vmem:[%s4 + $0x7b8] sm:$0xff] %v1794
  %2184 = vst [vmem:[%s4 + $0x7c0] sm:$0xff] %v1796
  %2185 = vst.msk [vmem:[%s4 + $0x7c8] sm:$0xff] %vm1959, %v1922
  %2186 = vst [vmem:[%s4 + $0x7d0] sm:$0xff] %v293
  %2187 = vst [vmem:[%s4 + $0x7d8] sm:$0xff] %v295
  %2188 = vst [vmem:[%s4 + $0x7e0] sm:$0xff] %v430
  %2189 = vst [vmem:[%s4 + $0x7e8] sm:$0xff] %v432
  %2190 = vst [vmem:[%s4 + $0x7f0] sm:$0xff] %v567
  %2191 = vst [vmem:[%s4 + $0x7f8] sm:$0xff] %v569
  %2192 = vst [vmem:[%s4 + $0x800] sm:$0xff] %v704
  %2193 = vst [vmem:[%s4 + $0x808] sm:$0xff] %v706
  %2194 = vst [vmem:[%s4 + $0x810] sm:$0xff] %v841
  %2195 = vst [vmem:[%s4 + $0x818] sm:$0xff] %v843
  %2196 = vst [vmem:[%s4 + $0x820] sm:$0xff] %v978
  %2197 = vst [vmem:[%s4 + $0x828] sm:$0xff] %v980
  %2198 = vst [vmem:[%s4 + $0x830] sm:$0xff] %v1115
  %2199 = vst [vmem:[%s4 + $0x838] sm:$0xff] %v1117
  %2200 = vst [vmem:[%s4 + $0x840] sm:$0xff] %v1252
  %2201 = vst [vmem:[%s4 + $0x848] sm:$0xff] %v1254
  %2202 = vst [vmem:[%s4 + $0x850] sm:$0xff] %v1389
  %2203 = vst [vmem:[%s4 + $0x858] sm:$0xff] %v1391
  %2204 = vst [vmem:[%s4 + $0x860] sm:$0xff] %v1526
  %2205 = vst [vmem:[%s4 + $0x868] sm:$0xff] %v1528
  %2206 = vst [vmem:[%s4 + $0x870] sm:$0xff] %v1663
  %2207 = vst [vmem:[%s4 + $0x878] sm:$0xff] %v1665
  %2208 = vst [vmem:[%s4 + $0x880] sm:$0xff] %v1800
  %2209 = vst [vmem:[%s4 + $0x888] sm:$0xff] %v1802
  %2210 = vst.msk [vmem:[%s4 + $0x890] sm:$0xff] %vm1959, %v1927
  %2211 = vst [vmem:[%s4 + $0x898] sm:$0xff] %v299
  %2212 = vst [vmem:[%s4 + $0x8a0] sm:$0xff] %v301
  %2213 = vst [vmem:[%s4 + $0x8a8] sm:$0xff] %v436
  %2214 = vst [vmem:[%s4 + $0x8b0] sm:$0xff] %v438
  %2215 = vst [vmem:[%s4 + $0x8b8] sm:$0xff] %v573
  %2216 = vst [vmem:[%s4 + $0x8c0] sm:$0xff] %v575
  %2217 = vst [vmem:[%s4 + $0x8c8] sm:$0xff] %v710
  %2218 = vst [vmem:[%s4 + $0x8d0] sm:$0xff] %v712
  %2219 = vst [vmem:[%s4 + $0x8d8] sm:$0xff] %v847
  %2220 = vst [vmem:[%s4 + $0x8e0] sm:$0xff] %v849
  %2221 = vst [vmem:[%s4 + $0x8e8] sm:$0xff] %v984
  %2222 = vst [vmem:[%s4 + $0x8f0] sm:$0xff] %v986
  %2223 = vst [vmem:[%s4 + $0x8f8] sm:$0xff] %v1121
  %2224 = vst [vmem:[%s4 + $0x900] sm:$0xff] %v1123
  %2225 = vst [vmem:[%s4 + $0x908] sm:$0xff] %v1258
  %2226 = vst [vmem:[%s4 + $0x910] sm:$0xff] %v1260
  %2227 = vst [vmem:[%s4 + $0x918] sm:$0xff] %v1395
  %2228 = vst [vmem:[%s4 + $0x920] sm:$0xff] %v1397
  %2229 = vst [vmem:[%s4 + $0x928] sm:$0xff] %v1532
  %2230 = vst [vmem:[%s4 + $0x930] sm:$0xff] %v1534
  %2231 = vst [vmem:[%s4 + $0x938] sm:$0xff] %v1669
  %2232 = vst [vmem:[%s4 + $0x940] sm:$0xff] %v1671
  %2233 = vst [vmem:[%s4 + $0x948] sm:$0xff] %v1806
  %2234 = vst [vmem:[%s4 + $0x950] sm:$0xff] %v1808
  %2235 = vst.msk [vmem:[%s4 + $0x958] sm:$0xff] %vm1959, %v1932
  %v2236 = vadd.f32 %v233, %v235
  %v2237 = vadd.f32 %v2236, %v370
  %v2238 = vadd.f32 %v2237, %v372
  %v2239 = vadd.f32 %v2238, %v507
  %v2240 = vadd.f32 %v2239, %v509
  %v2241 = vadd.f32 %v2240, %v644
  %v2242 = vadd.f32 %v2241, %v646
  %v2243 = vadd.f32 %v2242, %v781
  %v2244 = vadd.f32 %v2243, %v783
  %v2245 = vadd.f32 %v2244, %v918
  %v2246 = vadd.f32 %v2245, %v920
  %v2247 = vadd.f32 %v2246, %v1055
  %v2248 = vadd.f32 %v2247, %v1057
  %v2249 = vadd.f32 %v2248, %v1192
  %v2250 = vadd.f32 %v2249, %v1194
  %v2251 = vadd.f32 %v2250, %v1329
  %v2252 = vadd.f32 %v2251, %v1331
  %v2253 = vadd.f32 %v2252, %v1466
  %v2254 = vadd.f32 %v2253, %v1468
  %v2255 = vadd.f32 %v2254, %v1603
  %v2256 = vadd.f32 %v2255, %v1605
  %v2257 = vadd.f32 %v2256, %v1740
  %v2258 = vadd.f32 %v2257, %v1742
  %v2259 = vsel %vm1959, %v1877, 0.0
  %v2260 = vadd.f32 %v2258, %v2259
  %2261 = vadd.xlane.f32.xlu0 %v2260
  %v2262 = vpop.xlane.xlu0 %2261
  %v2263 = vadd.f32 %v239, %v241
  %v2264 = vadd.f32 %v2263, %v376
  %v2265 = vadd.f32 %v2264, %v378
  %v2266 = vadd.f32 %v2265, %v513
  %v2267 = vadd.f32 %v2266, %v515
  %v2268 = vadd.f32 %v2267, %v650
  %v2269 = vadd.f32 %v2268, %v652
  %v2270 = vadd.f32 %v2269, %v787
  %v2271 = vadd.f32 %v2270, %v789
  %v2272 = vadd.f32 %v2271, %v924
  %v2273 = vadd.f32 %v2272, %v926
  %v2274 = vadd.f32 %v2273, %v1061
  %v2275 = vadd.f32 %v2274, %v1063
  %v2276 = vadd.f32 %v2275, %v1198
  %v2277 = vadd.f32 %v2276, %v1200
  %v2278 = vadd.f32 %v2277, %v1335
  %v2279 = vadd.f32 %v2278, %v1337
  %v2280 = vadd.f32 %v2279, %v1472
  %v2281 = vadd.f32 %v2280, %v1474
  %v2282 = vadd.f32 %v2281, %v1609
  %v2283 = vadd.f32 %v2282, %v1611
  %v2284 = vadd.f32 %v2283, %v1746
  %v2285 = vadd.f32 %v2284, %v1748
  %v2286 = vsel %vm1959, %v1882, 0.0
  %v2287 = vadd.f32 %v2285, %v2286
  %2288 = vadd.xlane.f32.xlu0 %v2287
  %v2289 = vpop.xlane.xlu0 %2288
  %v2290 = vadd.f32 %v245, %v247
  %v2291 = vadd.f32 %v2290, %v382
  %v2292 = vadd.f32 %v2291, %v384
  %v2293 = vadd.f32 %v2292, %v519
  %v2294 = vadd.f32 %v2293, %v521
  %v2295 = vadd.f32 %v2294, %v656
  %v2296 = vadd.f32 %v2295, %v658
  %v2297 = vadd.f32 %v2296, %v793
  %v2298 = vadd.f32 %v2297, %v795
  %v2299 = vadd.f32 %v2298, %v930
  %v2300 = vadd.f32 %v2299, %v932
  %v2301 = vadd.f32 %v2300, %v1067
  %v2302 = vadd.f32 %v2301, %v1069
  %v2303 = vadd.f32 %v2302, %v1204
  %v2304 = vadd.f32 %v2303, %v1206
  %v2305 = vadd.f32 %v2304, %v1341
  %v2306 = vadd.f32 %v2305, %v1343
  %v2307 = vadd.f32 %v2306, %v1478
  %v2308 = vadd.f32 %v2307, %v1480
  %v2309 = vadd.f32 %v2308, %v1615
  %v2310 = vadd.f32 %v2309, %v1617
  %v2311 = vadd.f32 %v2310, %v1752
  %v2312 = vadd.f32 %v2311, %v1754
  %v2313 = vsel %vm1959, %v1887, 0.0
  %v2314 = vadd.f32 %v2312, %v2313
  %2315 = vadd.xlane.f32.xlu0 %v2314
  %v2316 = vpop.xlane.xlu0 %2315
  %v2317 = vadd.f32 %v251, %v253
  %v2318 = vadd.f32 %v2317, %v388
  %v2319 = vadd.f32 %v2318, %v390
  %v2320 = vadd.f32 %v2319, %v525
  %v2321 = vadd.f32 %v2320, %v527
  %v2322 = vadd.f32 %v2321, %v662
  %v2323 = vadd.f32 %v2322, %v664
  %v2324 = vadd.f32 %v2323, %v799
  %v2325 = vadd.f32 %v2324, %v801
  %v2326 = vadd.f32 %v2325, %v936
  %v2327 = vadd.f32 %v2326, %v938
  %v2328 = vadd.f32 %v2327, %v1073
  %v2329 = vadd.f32 %v2328, %v1075
  %v2330 = vadd.f32 %v2329, %v1210
  %v2331 = vadd.f32 %v2330, %v1212
  %v2332 = vadd.f32 %v2331, %v1347
  %v2333 = vadd.f32 %v2332, %v1349
  %v2334 = vadd.f32 %v2333, %v1484
  %v2335 = vadd.f32 %v2334, %v1486
  %v2336 = vadd.f32 %v2335, %v1621
  %v2337 = vadd.f32 %v2336, %v1623
  %v2338 = vadd.f32 %v2337, %v1758
  %v2339 = vadd.f32 %v2338, %v1760
  %v2340 = vsel %vm1959, %v1892, 0.0
  %v2341 = vadd.f32 %v2339, %v2340
  %2342 = vadd.xlane.f32.xlu0 %v2341
  %v2343 = vpop.xlane.xlu0 %2342
  %v2344 = vadd.f32 %v257, %v259
  %v2345 = vadd.f32 %v2344, %v394
  %v2346 = vadd.f32 %v2345, %v396
  %v2347 = vadd.f32 %v2346, %v531
  %v2348 = vadd.f32 %v2347, %v533
  %v2349 = vadd.f32 %v2348, %v668
  %v2350 = vadd.f32 %v2349, %v670
  %v2351 = vadd.f32 %v2350, %v805
  %v2352 = vadd.f32 %v2351, %v807
  %v2353 = vadd.f32 %v2352, %v942
  %v2354 = vadd.f32 %v2353, %v944
  %v2355 = vadd.f32 %v2354, %v1079
  %v2356 = vadd.f32 %v2355, %v1081
  %v2357 = vadd.f32 %v2356, %v1216
  %v2358 = vadd.f32 %v2357, %v1218
  %v2359 = vadd.f32 %v2358, %v1353
  %v2360 = vadd.f32 %v2359, %v1355
  %v2361 = vadd.f32 %v2360, %v1490
  %v2362 = vadd.f32 %v2361, %v1492
  %v2363 = vadd.f32 %v2362, %v1627
  %v2364 = vadd.f32 %v2363, %v1629
  %v2365 = vadd.f32 %v2364, %v1764
  %v2366 = vadd.f32 %v2365, %v1766
  %v2367 = vsel %vm1959, %v1897, 0.0
  %v2368 = vadd.f32 %v2366, %v2367
  %2369 = vadd.xlane.f32.xlu0 %v2368
  %v2370 = vpop.xlane.xlu0 %2369
  %v2371 = vadd.f32 %v263, %v265
  %v2372 = vadd.f32 %v2371, %v400
  %v2373 = vadd.f32 %v2372, %v402
  %v2374 = vadd.f32 %v2373, %v537
  %v2375 = vadd.f32 %v2374, %v539
  %v2376 = vadd.f32 %v2375, %v674
  %v2377 = vadd.f32 %v2376, %v676
  %v2378 = vadd.f32 %v2377, %v811
  %v2379 = vadd.f32 %v2378, %v813
  %v2380 = vadd.f32 %v2379, %v948
  %v2381 = vadd.f32 %v2380, %v950
  %v2382 = vadd.f32 %v2381, %v1085
  %v2383 = vadd.f32 %v2382, %v1087
  %v2384 = vadd.f32 %v2383, %v1222
  %v2385 = vadd.f32 %v2384, %v1224
  %v2386 = vadd.f32 %v2385, %v1359
  %v2387 = vadd.f32 %v2386, %v1361
  %v2388 = vadd.f32 %v2387, %v1496
  %v2389 = vadd.f32 %v2388, %v1498
  %v2390 = vadd.f32 %v2389, %v1633
  %v2391 = vadd.f32 %v2390, %v1635
  %v2392 = vadd.f32 %v2391, %v1770
  %v2393 = vadd.f32 %v2392, %v1772
  %v2394 = vsel %vm1959, %v1902, 0.0
  %v2395 = vadd.f32 %v2393, %v2394
  %2396 = vadd.xlane.f32.xlu0 %v2395
  %v2397 = vpop.xlane.xlu0 %2396
  %v2398 = vadd.f32 %v269, %v271
  %v2399 = vadd.f32 %v2398, %v406
  %v2400 = vadd.f32 %v2399, %v408
  %v2401 = vadd.f32 %v2400, %v543
  %v2402 = vadd.f32 %v2401, %v545
  %v2403 = vadd.f32 %v2402, %v680
  %v2404 = vadd.f32 %v2403, %v682
  %v2405 = vadd.f32 %v2404, %v817
  %v2406 = vadd.f32 %v2405, %v819
  %v2407 = vadd.f32 %v2406, %v954
  %v2408 = vadd.f32 %v2407, %v956
  %v2409 = vadd.f32 %v2408, %v1091
  %v2410 = vadd.f32 %v2409, %v1093
  %v2411 = vadd.f32 %v2410, %v1228
  %v2412 = vadd.f32 %v2411, %v1230
  %v2413 = vadd.f32 %v2412, %v1365
  %v2414 = vadd.f32 %v2413, %v1367
  %v2415 = vadd.f32 %v2414, %v1502
  %v2416 = vadd.f32 %v2415, %v1504
  %v2417 = vadd.f32 %v2416, %v1639
  %v2418 = vadd.f32 %v2417, %v1641
  %v2419 = vadd.f32 %v2418, %v1776
  %v2420 = vadd.f32 %v2419, %v1778
  %v2421 = vsel %vm1959, %v1907, 0.0
  %v2422 = vadd.f32 %v2420, %v2421
  %2423 = vadd.xlane.f32.xlu0 %v2422
  %v2424 = vpop.xlane.xlu0 %2423
  %v2425 = vadd.f32 %v275, %v277
  %v2426 = vadd.f32 %v2425, %v412
  %v2427 = vadd.f32 %v2426, %v414
  %v2428 = vadd.f32 %v2427, %v549
  %v2429 = vadd.f32 %v2428, %v551
  %v2430 = vadd.f32 %v2429, %v686
  %v2431 = vadd.f32 %v2430, %v688
  %v2432 = vadd.f32 %v2431, %v823
  %v2433 = vadd.f32 %v2432, %v825
  %v2434 = vadd.f32 %v2433, %v960
  %v2435 = vadd.f32 %v2434, %v962
  %v2436 = vadd.f32 %v2435, %v1097
  %v2437 = vadd.f32 %v2436, %v1099
  %v2438 = vadd.f32 %v2437, %v1234
  %v2439 = vadd.f32 %v2438, %v1236
  %v2440 = vadd.f32 %v2439, %v1371
  %v2441 = vadd.f32 %v2440, %v1373
  %v2442 = vadd.f32 %v2441, %v1508
  %v2443 = vadd.f32 %v2442, %v1510
  %v2444 = vadd.f32 %v2443, %v1645
  %v2445 = vadd.f32 %v2444, %v1647
  %v2446 = vadd.f32 %v2445, %v1782
  %v2447 = vadd.f32 %v2446, %v1784
  %v2448 = vsel %vm1959, %v1912, 0.0
  %v2449 = vadd.f32 %v2447, %v2448
  %2450 = vadd.xlane.f32.xlu0 %v2449
  %v2451 = vpop.xlane.xlu0 %2450
  %v2452 = vadd.f32 %v281, %v283
  %v2453 = vadd.f32 %v2452, %v418
  %v2454 = vadd.f32 %v2453, %v420
  %v2455 = vadd.f32 %v2454, %v555
  %v2456 = vadd.f32 %v2455, %v557
  %v2457 = vadd.f32 %v2456, %v692
  %v2458 = vadd.f32 %v2457, %v694
  %v2459 = vadd.f32 %v2458, %v829
  %v2460 = vadd.f32 %v2459, %v831
  %v2461 = vadd.f32 %v2460, %v966
  %v2462 = vadd.f32 %v2461, %v968
  %v2463 = vadd.f32 %v2462, %v1103
  %v2464 = vadd.f32 %v2463, %v1105
  %v2465 = vadd.f32 %v2464, %v1240
  %v2466 = vadd.f32 %v2465, %v1242
  %v2467 = vadd.f32 %v2466, %v1377
  %v2468 = vadd.f32 %v2467, %v1379
  %v2469 = vadd.f32 %v2468, %v1514
  %v2470 = vadd.f32 %v2469, %v1516
  %v2471 = vadd.f32 %v2470, %v1651
  %v2472 = vadd.f32 %v2471, %v1653
  %v2473 = vadd.f32 %v2472, %v1788
  %v2474 = vadd.f32 %v2473, %v1790
  %v2475 = vsel %vm1959, %v1917, 0.0
  %v2476 = vadd.f32 %v2474, %v2475
  %2477 = vadd.xlane.f32.xlu0 %v2476
  %v2478 = vpop.xlane.xlu0 %2477
  %v2479 = vadd.f32 %v287, %v289
  %v2480 = vadd.f32 %v2479, %v424
  %v2481 = vadd.f32 %v2480, %v426
  %v2482 = vadd.f32 %v2481, %v561
  %v2483 = vadd.f32 %v2482, %v563
  %v2484 = vadd.f32 %v2483, %v698
  %v2485 = vadd.f32 %v2484, %v700
  %v2486 = vadd.f32 %v2485, %v835
  %v2487 = vadd.f32 %v2486, %v837
  %v2488 = vadd.f32 %v2487, %v972
  %v2489 = vadd.f32 %v2488, %v974
  %v2490 = vadd.f32 %v2489, %v1109
  %v2491 = vadd.f32 %v2490, %v1111
  %v2492 = vadd.f32 %v2491, %v1246
  %v2493 = vadd.f32 %v2492, %v1248
  %v2494 = vadd.f32 %v2493, %v1383
  %v2495 = vadd.f32 %v2494, %v1385
  %v2496 = vadd.f32 %v2495, %v1520
  %v2497 = vadd.f32 %v2496, %v1522
  %v2498 = vadd.f32 %v2497, %v1657
  %v2499 = vadd.f32 %v2498, %v1659
  %v2500 = vadd.f32 %v2499, %v1794
  %v2501 = vadd.f32 %v2500, %v1796
  %v2502 = vsel %vm1959, %v1922, 0.0
  %v2503 = vadd.f32 %v2501, %v2502
  %2504 = vadd.xlane.f32.xlu0 %v2503
  %v2505 = vpop.xlane.xlu0 %2504
  %v2506 = vadd.f32 %v293, %v295
  %v2507 = vadd.f32 %v2506, %v430
  %v2508 = vadd.f32 %v2507, %v432
  %v2509 = vadd.f32 %v2508, %v567
  %v2510 = vadd.f32 %v2509, %v569
  %v2511 = vadd.f32 %v2510, %v704
  %v2512 = vadd.f32 %v2511, %v706
  %v2513 = vadd.f32 %v2512, %v841
  %v2514 = vadd.f32 %v2513, %v843
  %v2515 = vadd.f32 %v2514, %v978
  %v2516 = vadd.f32 %v2515, %v980
  %v2517 = vadd.f32 %v2516, %v1115
  %v2518 = vadd.f32 %v2517, %v1117
  %v2519 = vadd.f32 %v2518, %v1252
  %v2520 = vadd.f32 %v2519, %v1254
  %v2521 = vadd.f32 %v2520, %v1389
  %v2522 = vadd.f32 %v2521, %v1391
  %v2523 = vadd.f32 %v2522, %v1526
  %v2524 = vadd.f32 %v2523, %v1528
  %v2525 = vadd.f32 %v2524, %v1663
  %v2526 = vadd.f32 %v2525, %v1665
  %v2527 = vadd.f32 %v2526, %v1800
  %v2528 = vadd.f32 %v2527, %v1802
  %v2529 = vsel %vm1959, %v1927, 0.0
  %v2530 = vadd.f32 %v2528, %v2529
  %2531 = vadd.xlane.f32.xlu0 %v2530
  %v2532 = vpop.xlane.xlu0 %2531
  %v2533 = vadd.f32 %v299, %v301
  %v2534 = vadd.f32 %v2533, %v436
  %v2535 = vadd.f32 %v2534, %v438
  %v2536 = vadd.f32 %v2535, %v573
  %v2537 = vadd.f32 %v2536, %v575
  %v2538 = vadd.f32 %v2537, %v710
  %v2539 = vadd.f32 %v2538, %v712
  %v2540 = vadd.f32 %v2539, %v847
  %v2541 = vadd.f32 %v2540, %v849
  %v2542 = vadd.f32 %v2541, %v984
  %v2543 = vadd.f32 %v2542, %v986
  %v2544 = vadd.f32 %v2543, %v1121
  %v2545 = vadd.f32 %v2544, %v1123
  %v2546 = vadd.f32 %v2545, %v1258
  %v2547 = vadd.f32 %v2546, %v1260
  %v2548 = vadd.f32 %v2547, %v1395
  %v2549 = vadd.f32 %v2548, %v1397
  %v2550 = vadd.f32 %v2549, %v1532
  %v2551 = vadd.f32 %v2550, %v1534
  %v2552 = vadd.f32 %v2551, %v1669
  %v2553 = vadd.f32 %v2552, %v1671
  %v2554 = vadd.f32 %v2553, %v1806
  %v2555 = vadd.f32 %v2554, %v1808
  %v2556 = vsel %vm1959, %v1932, 0.0
  %v2557 = vadd.f32 %v2555, %v2556
  %2558 = vadd.xlane.f32.xlu0 %v2557
  %v2559 = vpop.xlane.xlu0 %2558
  %v2560 = vadd.f32 %v2262, 0.0
  %v2561 = vadd.f32 %v2289, 0.0
  %v2562 = vadd.f32 %v2316, 0.0
  %v2563 = vadd.f32 %v2343, 0.0
  %v2564 = vadd.f32 %v2370, 0.0
  %v2565 = vadd.f32 %v2397, 0.0
  %v2566 = vadd.f32 %v2424, 0.0
  %v2567 = vadd.f32 %v2451, 0.0
  %v2568 = vadd.f32 %v2478, 0.0
  %v2569 = vadd.f32 %v2505, 0.0
  %v2570 = vadd.f32 %v2532, 0.0
  %v2571 = vadd.f32 %v2559, 0.0
  %v2572 = vmul.f32 %v233, %v233
  %v2573 = vmul.f32 %v235, %v235
  %v2574 = vmul.f32 %v370, %v370
  %v2575 = vmul.f32 %v372, %v372
  %v2576 = vmul.f32 %v507, %v507
  %v2577 = vmul.f32 %v509, %v509
  %v2578 = vmul.f32 %v644, %v644
  %v2579 = vmul.f32 %v646, %v646
  %v2580 = vmul.f32 %v781, %v781
  %v2581 = vmul.f32 %v783, %v783
  %v2582 = vmul.f32 %v918, %v918
  %v2583 = vmul.f32 %v920, %v920
  %v2584 = vmul.f32 %v1055, %v1055
  %v2585 = vmul.f32 %v1057, %v1057
  %v2586 = vmul.f32 %v1192, %v1192
  %v2587 = vmul.f32 %v1194, %v1194
  %v2588 = vmul.f32 %v1329, %v1329
  %v2589 = vmul.f32 %v1331, %v1331
  %v2590 = vmul.f32 %v1466, %v1466
  %v2591 = vmul.f32 %v1468, %v1468
  %v2592 = vmul.f32 %v1603, %v1603
  %v2593 = vmul.f32 %v1605, %v1605
  %v2594 = vmul.f32 %v1740, %v1740
  %v2595 = vmul.f32 %v1742, %v1742
  %v2596 = vmul.f32 %v1877, %v1877
  %v2597 = vmul.f32 %v239, %v239
  %v2598 = vmul.f32 %v241, %v241
  %v2599 = vmul.f32 %v376, %v376
  %v2600 = vmul.f32 %v378, %v378
  %v2601 = vmul.f32 %v513, %v513
  %v2602 = vmul.f32 %v515, %v515
  %v2603 = vmul.f32 %v650, %v650
  %v2604 = vmul.f32 %v652, %v652
  %v2605 = vmul.f32 %v787, %v787
  %v2606 = vmul.f32 %v789, %v789
  %v2607 = vmul.f32 %v924, %v924
  %v2608 = vmul.f32 %v926, %v926
  %v2609 = vmul.f32 %v1061, %v1061
  %v2610 = vmul.f32 %v1063, %v1063
  %v2611 = vmul.f32 %v1198, %v1198
  %v2612 = vmul.f32 %v1200, %v1200
  %v2613 = vmul.f32 %v1335, %v1335
  %v2614 = vmul.f32 %v1337, %v1337
  %v2615 = vmul.f32 %v1472, %v1472
  %v2616 = vmul.f32 %v1474, %v1474
  %v2617 = vmul.f32 %v1609, %v1609
  %v2618 = vmul.f32 %v1611, %v1611
  %v2619 = vmul.f32 %v1746, %v1746
  %v2620 = vmul.f32 %v1748, %v1748
  %v2621 = vmul.f32 %v1882, %v1882
  %v2622 = vmul.f32 %v245, %v245
  %v2623 = vmul.f32 %v247, %v247
  %v2624 = vmul.f32 %v382, %v382
  %v2625 = vmul.f32 %v384, %v384
  %v2626 = vmul.f32 %v519, %v519
  %v2627 = vmul.f32 %v521, %v521
  %v2628 = vmul.f32 %v656, %v656
  %v2629 = vmul.f32 %v658, %v658
  %v2630 = vmul.f32 %v793, %v793
  %v2631 = vmul.f32 %v795, %v795
  %v2632 = vmul.f32 %v930, %v930
  %v2633 = vmul.f32 %v932, %v932
  %v2634 = vmul.f32 %v1067, %v1067
  %v2635 = vmul.f32 %v1069, %v1069
  %v2636 = vmul.f32 %v1204, %v1204
  %v2637 = vmul.f32 %v1206, %v1206
  %v2638 = vmul.f32 %v1341, %v1341
  %v2639 = vmul.f32 %v1343, %v1343
  %v2640 = vmul.f32 %v1478, %v1478
  %v2641 = vmul.f32 %v1480, %v1480
  %v2642 = vmul.f32 %v1615, %v1615
  %v2643 = vmul.f32 %v1617, %v1617
  %v2644 = vmul.f32 %v1752, %v1752
  %v2645 = vmul.f32 %v1754, %v1754
  %v2646 = vmul.f32 %v1887, %v1887
  %v2647 = vmul.f32 %v251, %v251
  %v2648 = vmul.f32 %v253, %v253
  %v2649 = vmul.f32 %v388, %v388
  %v2650 = vmul.f32 %v390, %v390
  %v2651 = vmul.f32 %v525, %v525
  %v2652 = vmul.f32 %v527, %v527
  %v2653 = vmul.f32 %v662, %v662
  %v2654 = vmul.f32 %v664, %v664
  %v2655 = vmul.f32 %v799, %v799
  %v2656 = vmul.f32 %v801, %v801
  %v2657 = vmul.f32 %v936, %v936
  %v2658 = vmul.f32 %v938, %v938
  %v2659 = vmul.f32 %v1073, %v1073
  %v2660 = vmul.f32 %v1075, %v1075
  %v2661 = vmul.f32 %v1210, %v1210
  %v2662 = vmul.f32 %v1212, %v1212
  %v2663 = vmul.f32 %v1347, %v1347
  %v2664 = vmul.f32 %v1349, %v1349
  %v2665 = vmul.f32 %v1484, %v1484
  %v2666 = vmul.f32 %v1486, %v1486
  %v2667 = vmul.f32 %v1621, %v1621
  %v2668 = vmul.f32 %v1623, %v1623
  %v2669 = vmul.f32 %v1758, %v1758
  %v2670 = vmul.f32 %v1760, %v1760
  %v2671 = vmul.f32 %v1892, %v1892
  %v2672 = vmul.f32 %v257, %v257
  %v2673 = vmul.f32 %v259, %v259
  %v2674 = vmul.f32 %v394, %v394
  %v2675 = vmul.f32 %v396, %v396
  %v2676 = vmul.f32 %v531, %v531
  %v2677 = vmul.f32 %v533, %v533
  %v2678 = vmul.f32 %v668, %v668
  %v2679 = vmul.f32 %v670, %v670
  %v2680 = vmul.f32 %v805, %v805
  %v2681 = vmul.f32 %v807, %v807
  %v2682 = vmul.f32 %v942, %v942
  %v2683 = vmul.f32 %v944, %v944
  %v2684 = vmul.f32 %v1079, %v1079
  %v2685 = vmul.f32 %v1081, %v1081
  %v2686 = vmul.f32 %v1216, %v1216
  %v2687 = vmul.f32 %v1218, %v1218
  %v2688 = vmul.f32 %v1353, %v1353
  %v2689 = vmul.f32 %v1355, %v1355
  %v2690 = vmul.f32 %v1490, %v1490
  %v2691 = vmul.f32 %v1492, %v1492
  %v2692 = vmul.f32 %v1627, %v1627
  %v2693 = vmul.f32 %v1629, %v1629
  %v2694 = vmul.f32 %v1764, %v1764
  %v2695 = vmul.f32 %v1766, %v1766
  %v2696 = vmul.f32 %v1897, %v1897
  %v2697 = vmul.f32 %v263, %v263
  %v2698 = vmul.f32 %v265, %v265
  %v2699 = vmul.f32 %v400, %v400
  %v2700 = vmul.f32 %v402, %v402
  %v2701 = vmul.f32 %v537, %v537
  %v2702 = vmul.f32 %v539, %v539
  %v2703 = vmul.f32 %v674, %v674
  %v2704 = vmul.f32 %v676, %v676
  %v2705 = vmul.f32 %v811, %v811
  %v2706 = vmul.f32 %v813, %v813
  %v2707 = vmul.f32 %v948, %v948
  %v2708 = vmul.f32 %v950, %v950
  %v2709 = vmul.f32 %v1085, %v1085
  %v2710 = vmul.f32 %v1087, %v1087
  %v2711 = vmul.f32 %v1222, %v1222
  %v2712 = vmul.f32 %v1224, %v1224
  %v2713 = vmul.f32 %v1359, %v1359
  %v2714 = vmul.f32 %v1361, %v1361
  %v2715 = vmul.f32 %v1496, %v1496
  %v2716 = vmul.f32 %v1498, %v1498
  %v2717 = vmul.f32 %v1633, %v1633
  %v2718 = vmul.f32 %v1635, %v1635
  %v2719 = vmul.f32 %v1770, %v1770
  %v2720 = vmul.f32 %v1772, %v1772
  %v2721 = vmul.f32 %v1902, %v1902
  %v2722 = vmul.f32 %v269, %v269
  %v2723 = vmul.f32 %v271, %v271
  %v2724 = vmul.f32 %v406, %v406
  %v2725 = vmul.f32 %v408, %v408
  %v2726 = vmul.f32 %v543, %v543
  %v2727 = vmul.f32 %v545, %v545
  %v2728 = vmul.f32 %v680, %v680
  %v2729 = vmul.f32 %v682, %v682
  %v2730 = vmul.f32 %v817, %v817
  %v2731 = vmul.f32 %v819, %v819
  %v2732 = vmul.f32 %v954, %v954
  %v2733 = vmul.f32 %v956, %v956
  %v2734 = vmul.f32 %v1091, %v1091
  %v2735 = vmul.f32 %v1093, %v1093
  %v2736 = vmul.f32 %v1228, %v1228
  %v2737 = vmul.f32 %v1230, %v1230
  %v2738 = vmul.f32 %v1365, %v1365
  %v2739 = vmul.f32 %v1367, %v1367
  %v2740 = vmul.f32 %v1502, %v1502
  %v2741 = vmul.f32 %v1504, %v1504
  %v2742 = vmul.f32 %v1639, %v1639
  %v2743 = vmul.f32 %v1641, %v1641
  %v2744 = vmul.f32 %v1776, %v1776
  %v2745 = vmul.f32 %v1778, %v1778
  %v2746 = vmul.f32 %v1907, %v1907
  %v2747 = vmul.f32 %v275, %v275
  %v2748 = vmul.f32 %v277, %v277
  %v2749 = vmul.f32 %v412, %v412
  %v2750 = vmul.f32 %v414, %v414
  %v2751 = vmul.f32 %v549, %v549
  %v2752 = vmul.f32 %v551, %v551
  %v2753 = vmul.f32 %v686, %v686
  %v2754 = vmul.f32 %v688, %v688
  %v2755 = vmul.f32 %v823, %v823
  %v2756 = vmul.f32 %v825, %v825
  %v2757 = vmul.f32 %v960, %v960
  %v2758 = vmul.f32 %v962, %v962
  %v2759 = vmul.f32 %v1097, %v1097
  %v2760 = vmul.f32 %v1099, %v1099
  %v2761 = vmul.f32 %v1234, %v1234
  %v2762 = vmul.f32 %v1236, %v1236
  %v2763 = vmul.f32 %v1371, %v1371
  %v2764 = vmul.f32 %v1373, %v1373
  %v2765 = vmul.f32 %v1508, %v1508
  %v2766 = vmul.f32 %v1510, %v1510
  %v2767 = vmul.f32 %v1645, %v1645
  %v2768 = vmul.f32 %v1647, %v1647
  %v2769 = vmul.f32 %v1782, %v1782
  %v2770 = vmul.f32 %v1784, %v1784
  %v2771 = vmul.f32 %v1912, %v1912
  %v2772 = vmul.f32 %v281, %v281
  %v2773 = vmul.f32 %v283, %v283
  %v2774 = vmul.f32 %v418, %v418
  %v2775 = vmul.f32 %v420, %v420
  %v2776 = vmul.f32 %v555, %v555
  %v2777 = vmul.f32 %v557, %v557
  %v2778 = vmul.f32 %v692, %v692
  %v2779 = vmul.f32 %v694, %v694
  %v2780 = vmul.f32 %v829, %v829
  %v2781 = vmul.f32 %v831, %v831
  %v2782 = vmul.f32 %v966, %v966
  %v2783 = vmul.f32 %v968, %v968
  %v2784 = vmul.f32 %v1103, %v1103
  %v2785 = vmul.f32 %v1105, %v1105
  %v2786 = vmul.f32 %v1240, %v1240
  %v2787 = vmul.f32 %v1242, %v1242
  %v2788 = vmul.f32 %v1377, %v1377
  %v2789 = vmul.f32 %v1379, %v1379
  %v2790 = vmul.f32 %v1514, %v1514
  %v2791 = vmul.f32 %v1516, %v1516
  %v2792 = vmul.f32 %v1651, %v1651
  %v2793 = vmul.f32 %v1653, %v1653
  %v2794 = vmul.f32 %v1788, %v1788
  %v2795 = vmul.f32 %v1790, %v1790
  %v2796 = vmul.f32 %v1917, %v1917
  %v2797 = vmul.f32 %v287, %v287
  %v2798 = vmul.f32 %v289, %v289
  %v2799 = vmul.f32 %v424, %v424
  %v2800 = vmul.f32 %v426, %v426
  %v2801 = vmul.f32 %v561, %v561
  %v2802 = vmul.f32 %v563, %v563
  %v2803 = vmul.f32 %v698, %v698
  %v2804 = vmul.f32 %v700, %v700
  %v2805 = vmul.f32 %v835, %v835
  %v2806 = vmul.f32 %v837, %v837
  %v2807 = vmul.f32 %v972, %v972
  %v2808 = vmul.f32 %v974, %v974
  %v2809 = vmul.f32 %v1109, %v1109
  %v2810 = vmul.f32 %v1111, %v1111
  %v2811 = vmul.f32 %v1246, %v1246
  %v2812 = vmul.f32 %v1248, %v1248
  %v2813 = vmul.f32 %v1383, %v1383
  %v2814 = vmul.f32 %v1385, %v1385
  %v2815 = vmul.f32 %v1520, %v1520
  %v2816 = vmul.f32 %v1522, %v1522
  %v2817 = vmul.f32 %v1657, %v1657
  %v2818 = vmul.f32 %v1659, %v1659
  %v2819 = vmul.f32 %v1794, %v1794
  %v2820 = vmul.f32 %v1796, %v1796
  %v2821 = vmul.f32 %v1922, %v1922
  %v2822 = vmul.f32 %v293, %v293
  %v2823 = vmul.f32 %v295, %v295
  %v2824 = vmul.f32 %v430, %v430
  %v2825 = vmul.f32 %v432, %v432
  %v2826 = vmul.f32 %v567, %v567
  %v2827 = vmul.f32 %v569, %v569
  %v2828 = vmul.f32 %v704, %v704
  %v2829 = vmul.f32 %v706, %v706
  %v2830 = vmul.f32 %v841, %v841
  %v2831 = vmul.f32 %v843, %v843
  %v2832 = vmul.f32 %v978, %v978
  %v2833 = vmul.f32 %v980, %v980
  %v2834 = vmul.f32 %v1115, %v1115
  %v2835 = vmul.f32 %v1117, %v1117
  %v2836 = vmul.f32 %v1252, %v1252
  %v2837 = vmul.f32 %v1254, %v1254
  %v2838 = vmul.f32 %v1389, %v1389
  %v2839 = vmul.f32 %v1391, %v1391
  %v2840 = vmul.f32 %v1526, %v1526
  %v2841 = vmul.f32 %v1528, %v1528
  %v2842 = vmul.f32 %v1663, %v1663
  %v2843 = vmul.f32 %v1665, %v1665
  %v2844 = vmul.f32 %v1800, %v1800
  %v2845 = vmul.f32 %v1802, %v1802
  %v2846 = vmul.f32 %v1927, %v1927
  %v2847 = vmul.f32 %v299, %v299
  %v2848 = vmul.f32 %v301, %v301
  %v2849 = vmul.f32 %v436, %v436
  %v2850 = vmul.f32 %v438, %v438
  %v2851 = vmul.f32 %v573, %v573
  %v2852 = vmul.f32 %v575, %v575
  %v2853 = vmul.f32 %v710, %v710
  %v2854 = vmul.f32 %v712, %v712
  %v2855 = vmul.f32 %v847, %v847
  %v2856 = vmul.f32 %v849, %v849
  %v2857 = vmul.f32 %v984, %v984
  %v2858 = vmul.f32 %v986, %v986
  %v2859 = vmul.f32 %v1121, %v1121
  %v2860 = vmul.f32 %v1123, %v1123
  %v2861 = vmul.f32 %v1258, %v1258
  %v2862 = vmul.f32 %v1260, %v1260
  %v2863 = vmul.f32 %v1395, %v1395
  %v2864 = vmul.f32 %v1397, %v1397
  %v2865 = vmul.f32 %v1532, %v1532
  %v2866 = vmul.f32 %v1534, %v1534
  %v2867 = vmul.f32 %v1669, %v1669
  %v2868 = vmul.f32 %v1671, %v1671
  %v2869 = vmul.f32 %v1806, %v1806
  %v2870 = vmul.f32 %v1808, %v1808
  %v2871 = vmul.f32 %v1932, %v1932
  %v2872 = vadd.f32 %v2572, %v2573
  %v2873 = vadd.f32 %v2872, %v2574
  %v2874 = vadd.f32 %v2873, %v2575
  %v2875 = vadd.f32 %v2874, %v2576
  %v2876 = vadd.f32 %v2875, %v2577
  %v2877 = vadd.f32 %v2876, %v2578
  %v2878 = vadd.f32 %v2877, %v2579
  %v2879 = vadd.f32 %v2878, %v2580
  %v2880 = vadd.f32 %v2879, %v2581
  %v2881 = vadd.f32 %v2880, %v2582
  %v2882 = vadd.f32 %v2881, %v2583
  %v2883 = vadd.f32 %v2882, %v2584
  %v2884 = vadd.f32 %v2883, %v2585
  %v2885 = vadd.f32 %v2884, %v2586
  %v2886 = vadd.f32 %v2885, %v2587
  %v2887 = vadd.f32 %v2886, %v2588
  %v2888 = vadd.f32 %v2887, %v2589
  %v2889 = vadd.f32 %v2888, %v2590
  %v2890 = vadd.f32 %v2889, %v2591
  %v2891 = vadd.f32 %v2890, %v2592
  %v2892 = vadd.f32 %v2891, %v2593
  %v2893 = vadd.f32 %v2892, %v2594
  %v2894 = vadd.f32 %v2893, %v2595
  %v2895 = vsel %vm1959, %v2596, 0.0
  %v2896 = vadd.f32 %v2894, %v2895
  %2897 = vadd.xlane.f32.xlu0 %v2896
  %v2898 = vpop.xlane.xlu0 %2897
  %v2899 = vadd.f32 %v2597, %v2598
  %v2900 = vadd.f32 %v2899, %v2599
  %v2901 = vadd.f32 %v2900, %v2600
  %v2902 = vadd.f32 %v2901, %v2601
  %v2903 = vadd.f32 %v2902, %v2602
  %v2904 = vadd.f32 %v2903, %v2603
  %v2905 = vadd.f32 %v2904, %v2604
  %v2906 = vadd.f32 %v2905, %v2605
  %v2907 = vadd.f32 %v2906, %v2606
  %v2908 = vadd.f32 %v2907, %v2607
  %v2909 = vadd.f32 %v2908, %v2608
  %v2910 = vadd.f32 %v2909, %v2609
  %v2911 = vadd.f32 %v2910, %v2610
  %v2912 = vadd.f32 %v2911, %v2611
  %v2913 = vadd.f32 %v2912, %v2612
  %v2914 = vadd.f32 %v2913, %v2613
  %v2915 = vadd.f32 %v2914, %v2614
  %v2916 = vadd.f32 %v2915, %v2615
  %v2917 = vadd.f32 %v2916, %v2616
  %v2918 = vadd.f32 %v2917, %v2617
  %v2919 = vadd.f32 %v2918, %v2618
  %v2920 = vadd.f32 %v2919, %v2619
  %v2921 = vadd.f32 %v2920, %v2620
  %v2922 = vsel %vm1959, %v2621, 0.0
  %v2923 = vadd.f32 %v2921, %v2922
  %2924 = vadd.xlane.f32.xlu0 %v2923
  %v2925 = vpop.xlane.xlu0 %2924
  %v2926 = vadd.f32 %v2622, %v2623
  %v2927 = vadd.f32 %v2926, %v2624
  %v2928 = vadd.f32 %v2927, %v2625
  %v2929 = vadd.f32 %v2928, %v2626
  %v2930 = vadd.f32 %v2929, %v2627
  %v2931 = vadd.f32 %v2930, %v2628
  %v2932 = vadd.f32 %v2931, %v2629
  %v2933 = vadd.f32 %v2932, %v2630
  %v2934 = vadd.f32 %v2933, %v2631
  %v2935 = vadd.f32 %v2934, %v2632
  %v2936 = vadd.f32 %v2935, %v2633
  %v2937 = vadd.f32 %v2936, %v2634
  %v2938 = vadd.f32 %v2937, %v2635
  %v2939 = vadd.f32 %v2938, %v2636
  %v2940 = vadd.f32 %v2939, %v2637
  %v2941 = vadd.f32 %v2940, %v2638
  %v2942 = vadd.f32 %v2941, %v2639
  %v2943 = vadd.f32 %v2942, %v2640
  %v2944 = vadd.f32 %v2943, %v2641
  %v2945 = vadd.f32 %v2944, %v2642
  %v2946 = vadd.f32 %v2945, %v2643
  %v2947 = vadd.f32 %v2946, %v2644
  %v2948 = vadd.f32 %v2947, %v2645
  %v2949 = vsel %vm1959, %v2646, 0.0
  %v2950 = vadd.f32 %v2948, %v2949
  %2951 = vadd.xlane.f32.xlu0 %v2950
  %v2952 = vpop.xlane.xlu0 %2951
  %v2953 = vadd.f32 %v2647, %v2648
  %v2954 = vadd.f32 %v2953, %v2649
  %v2955 = vadd.f32 %v2954, %v2650
  %v2956 = vadd.f32 %v2955, %v2651
  %v2957 = vadd.f32 %v2956, %v2652
  %v2958 = vadd.f32 %v2957, %v2653
  %v2959 = vadd.f32 %v2958, %v2654
  %v2960 = vadd.f32 %v2959, %v2655
  %v2961 = vadd.f32 %v2960, %v2656
  %v2962 = vadd.f32 %v2961, %v2657
  %v2963 = vadd.f32 %v2962, %v2658
  %v2964 = vadd.f32 %v2963, %v2659
  %v2965 = vadd.f32 %v2964, %v2660
  %v2966 = vadd.f32 %v2965, %v2661
  %v2967 = vadd.f32 %v2966, %v2662
  %v2968 = vadd.f32 %v2967, %v2663
  %v2969 = vadd.f32 %v2968, %v2664
  %v2970 = vadd.f32 %v2969, %v2665
  %v2971 = vadd.f32 %v2970, %v2666
  %v2972 = vadd.f32 %v2971, %v2667
  %v2973 = vadd.f32 %v2972, %v2668
  %v2974 = vadd.f32 %v2973, %v2669
  %v2975 = vadd.f32 %v2974, %v2670
  %v2976 = vsel %vm1959, %v2671, 0.0
  %v2977 = vadd.f32 %v2975, %v2976
  %2978 = vadd.xlane.f32.xlu0 %v2977
  %v2979 = vpop.xlane.xlu0 %2978
  %v2980 = vadd.f32 %v2672, %v2673
  %v2981 = vadd.f32 %v2980, %v2674
  %v2982 = vadd.f32 %v2981, %v2675
  %v2983 = vadd.f32 %v2982, %v2676
  %v2984 = vadd.f32 %v2983, %v2677
  %v2985 = vadd.f32 %v2984, %v2678
  %v2986 = vadd.f32 %v2985, %v2679
  %v2987 = vadd.f32 %v2986, %v2680
  %v2988 = vadd.f32 %v2987, %v2681
  %v2989 = vadd.f32 %v2988, %v2682
  %v2990 = vadd.f32 %v2989, %v2683
  %v2991 = vadd.f32 %v2990, %v2684
  %v2992 = vadd.f32 %v2991, %v2685
  %v2993 = vadd.f32 %v2992, %v2686
  %v2994 = vadd.f32 %v2993, %v2687
  %v2995 = vadd.f32 %v2994, %v2688
  %v2996 = vadd.f32 %v2995, %v2689
  %v2997 = vadd.f32 %v2996, %v2690
  %v2998 = vadd.f32 %v2997, %v2691
  %v2999 = vadd.f32 %v2998, %v2692
  %v3000 = vadd.f32 %v2999, %v2693
  %v3001 = vadd.f32 %v3000, %v2694
  %v3002 = vadd.f32 %v3001, %v2695
  %v3003 = vsel %vm1959, %v2696, 0.0
  %v3004 = vadd.f32 %v3002, %v3003
  %3005 = vadd.xlane.f32.xlu0 %v3004
  %v3006 = vpop.xlane.xlu0 %3005
  %v3007 = vadd.f32 %v2697, %v2698
  %v3008 = vadd.f32 %v3007, %v2699
  %v3009 = vadd.f32 %v3008, %v2700
  %v3010 = vadd.f32 %v3009, %v2701
  %v3011 = vadd.f32 %v3010, %v2702
  %v3012 = vadd.f32 %v3011, %v2703
  %v3013 = vadd.f32 %v3012, %v2704
  %v3014 = vadd.f32 %v3013, %v2705
  %v3015 = vadd.f32 %v3014, %v2706
  %v3016 = vadd.f32 %v3015, %v2707
  %v3017 = vadd.f32 %v3016, %v2708
  %v3018 = vadd.f32 %v3017, %v2709
  %v3019 = vadd.f32 %v3018, %v2710
  %v3020 = vadd.f32 %v3019, %v2711
  %v3021 = vadd.f32 %v3020, %v2712
  %v3022 = vadd.f32 %v3021, %v2713
  %v3023 = vadd.f32 %v3022, %v2714
  %v3024 = vadd.f32 %v3023, %v2715
  %v3025 = vadd.f32 %v3024, %v2716
  %v3026 = vadd.f32 %v3025, %v2717
  %v3027 = vadd.f32 %v3026, %v2718
  %v3028 = vadd.f32 %v3027, %v2719
  %v3029 = vadd.f32 %v3028, %v2720
  %v3030 = vsel %vm1959, %v2721, 0.0
  %v3031 = vadd.f32 %v3029, %v3030
  %3032 = vadd.xlane.f32.xlu0 %v3031
  %v3033 = vpop.xlane.xlu0 %3032
  %v3034 = vadd.f32 %v2722, %v2723
  %v3035 = vadd.f32 %v3034, %v2724
  %v3036 = vadd.f32 %v3035, %v2725
  %v3037 = vadd.f32 %v3036, %v2726
  %v3038 = vadd.f32 %v3037, %v2727
  %v3039 = vadd.f32 %v3038, %v2728
  %v3040 = vadd.f32 %v3039, %v2729
  %v3041 = vadd.f32 %v3040, %v2730
  %v3042 = vadd.f32 %v3041, %v2731
  %v3043 = vadd.f32 %v3042, %v2732
  %v3044 = vadd.f32 %v3043, %v2733
  %v3045 = vadd.f32 %v3044, %v2734
  %v3046 = vadd.f32 %v3045, %v2735
  %v3047 = vadd.f32 %v3046, %v2736
  %v3048 = vadd.f32 %v3047, %v2737
  %v3049 = vadd.f32 %v3048, %v2738
  %v3050 = vadd.f32 %v3049, %v2739
  %v3051 = vadd.f32 %v3050, %v2740
  %v3052 = vadd.f32 %v3051, %v2741
  %v3053 = vadd.f32 %v3052, %v2742
  %v3054 = vadd.f32 %v3053, %v2743
  %v3055 = vadd.f32 %v3054, %v2744
  %v3056 = vadd.f32 %v3055, %v2745
  %v3057 = vsel %vm1959, %v2746, 0.0
  %v3058 = vadd.f32 %v3056, %v3057
  %3059 = vadd.xlane.f32.xlu0 %v3058
  %v3060 = vpop.xlane.xlu0 %3059
  %v3061 = vadd.f32 %v2747, %v2748
  %v3062 = vadd.f32 %v3061, %v2749
  %v3063 = vadd.f32 %v3062, %v2750
  %v3064 = vadd.f32 %v3063, %v2751
  %v3065 = vadd.f32 %v3064, %v2752
  %v3066 = vadd.f32 %v3065, %v2753
  %v3067 = vadd.f32 %v3066, %v2754
  %v3068 = vadd.f32 %v3067, %v2755
  %v3069 = vadd.f32 %v3068, %v2756
  %v3070 = vadd.f32 %v3069, %v2757
  %v3071 = vadd.f32 %v3070, %v2758
  %v3072 = vadd.f32 %v3071, %v2759
  %v3073 = vadd.f32 %v3072, %v2760
  %v3074 = vadd.f32 %v3073, %v2761
  %v3075 = vadd.f32 %v3074, %v2762
  %v3076 = vadd.f32 %v3075, %v2763
  %v3077 = vadd.f32 %v3076, %v2764
  %v3078 = vadd.f32 %v3077, %v2765
  %v3079 = vadd.f32 %v3078, %v2766
  %v3080 = vadd.f32 %v3079, %v2767
  %v3081 = vadd.f32 %v3080, %v2768
  %v3082 = vadd.f32 %v3081, %v2769
  %v3083 = vadd.f32 %v3082, %v2770
  %v3084 = vsel %vm1959, %v2771, 0.0
  %v3085 = vadd.f32 %v3083, %v3084
  %3086 = vadd.xlane.f32.xlu0 %v3085
  %v3087 = vpop.xlane.xlu0 %3086
  %v3088 = vadd.f32 %v2772, %v2773
  %v3089 = vadd.f32 %v3088, %v2774
  %v3090 = vadd.f32 %v3089, %v2775
  %v3091 = vadd.f32 %v3090, %v2776
  %v3092 = vadd.f32 %v3091, %v2777
  %v3093 = vadd.f32 %v3092, %v2778
  %v3094 = vadd.f32 %v3093, %v2779
  %v3095 = vadd.f32 %v3094, %v2780
  %v3096 = vadd.f32 %v3095, %v2781
  %v3097 = vadd.f32 %v3096, %v2782
  %v3098 = vadd.f32 %v3097, %v2783
  %v3099 = vadd.f32 %v3098, %v2784
  %v3100 = vadd.f32 %v3099, %v2785
  %v3101 = vadd.f32 %v3100, %v2786
  %v3102 = vadd.f32 %v3101, %v2787
  %v3103 = vadd.f32 %v3102, %v2788
  %v3104 = vadd.f32 %v3103, %v2789
  %v3105 = vadd.f32 %v3104, %v2790
  %v3106 = vadd.f32 %v3105, %v2791
  %v3107 = vadd.f32 %v3106, %v2792
  %v3108 = vadd.f32 %v3107, %v2793
  %v3109 = vadd.f32 %v3108, %v2794
  %v3110 = vadd.f32 %v3109, %v2795
  %v3111 = vsel %vm1959, %v2796, 0.0
  %v3112 = vadd.f32 %v3110, %v3111
  %3113 = vadd.xlane.f32.xlu0 %v3112
  %v3114 = vpop.xlane.xlu0 %3113
  %v3115 = vadd.f32 %v2797, %v2798
  %v3116 = vadd.f32 %v3115, %v2799
  %v3117 = vadd.f32 %v3116, %v2800
  %v3118 = vadd.f32 %v3117, %v2801
  %v3119 = vadd.f32 %v3118, %v2802
  %v3120 = vadd.f32 %v3119, %v2803
  %v3121 = vadd.f32 %v3120, %v2804
  %v3122 = vadd.f32 %v3121, %v2805
  %v3123 = vadd.f32 %v3122, %v2806
  %v3124 = vadd.f32 %v3123, %v2807
  %v3125 = vadd.f32 %v3124, %v2808
  %v3126 = vadd.f32 %v3125, %v2809
  %v3127 = vadd.f32 %v3126, %v2810
  %v3128 = vadd.f32 %v3127, %v2811
  %v3129 = vadd.f32 %v3128, %v2812
  %v3130 = vadd.f32 %v3129, %v2813
  %v3131 = vadd.f32 %v3130, %v2814
  %v3132 = vadd.f32 %v3131, %v2815
  %v3133 = vadd.f32 %v3132, %v2816
  %v3134 = vadd.f32 %v3133, %v2817
  %v3135 = vadd.f32 %v3134, %v2818
  %v3136 = vadd.f32 %v3135, %v2819
  %v3137 = vadd.f32 %v3136, %v2820
  %v3138 = vsel %vm1959, %v2821, 0.0
  %v3139 = vadd.f32 %v3137, %v3138
  %3140 = vadd.xlane.f32.xlu0 %v3139
  %v3141 = vpop.xlane.xlu0 %3140
  %v3142 = vadd.f32 %v2822, %v2823
  %v3143 = vadd.f32 %v3142, %v2824
  %v3144 = vadd.f32 %v3143, %v2825
  %v3145 = vadd.f32 %v3144, %v2826
  %v3146 = vadd.f32 %v3145, %v2827
  %v3147 = vadd.f32 %v3146, %v2828
  %v3148 = vadd.f32 %v3147, %v2829
  %v3149 = vadd.f32 %v3148, %v2830
  %v3150 = vadd.f32 %v3149, %v2831
  %v3151 = vadd.f32 %v3150, %v2832
  %v3152 = vadd.f32 %v3151, %v2833
  %v3153 = vadd.f32 %v3152, %v2834
  %v3154 = vadd.f32 %v3153, %v2835
  %v3155 = vadd.f32 %v3154, %v2836
  %v3156 = vadd.f32 %v3155, %v2837
  %v3157 = vadd.f32 %v3156, %v2838
  %v3158 = vadd.f32 %v3157, %v2839
  %v3159 = vadd.f32 %v3158, %v2840
  %v3160 = vadd.f32 %v3159, %v2841
  %v3161 = vadd.f32 %v3160, %v2842
  %v3162 = vadd.f32 %v3161, %v2843
  %v3163 = vadd.f32 %v3162, %v2844
  %v3164 = vadd.f32 %v3163, %v2845
  %v3165 = vsel %vm1959, %v2846, 0.0
  %v3166 = vadd.f32 %v3164, %v3165
  %3167 = vadd.xlane.f32.xlu0 %v3166
  %v3168 = vpop.xlane.xlu0 %3167
  %v3169 = vadd.f32 %v2847, %v2848
  %v3170 = vadd.f32 %v3169, %v2849
  %v3171 = vadd.f32 %v3170, %v2850
  %v3172 = vadd.f32 %v3171, %v2851
  %v3173 = vadd.f32 %v3172, %v2852
  %v3174 = vadd.f32 %v3173, %v2853
  %v3175 = vadd.f32 %v3174, %v2854
  %v3176 = vadd.f32 %v3175, %v2855
  %v3177 = vadd.f32 %v3176, %v2856
  %v3178 = vadd.f32 %v3177, %v2857
  %v3179 = vadd.f32 %v3178, %v2858
  %v3180 = vadd.f32 %v3179, %v2859
  %v3181 = vadd.f32 %v3180, %v2860
  %v3182 = vadd.f32 %v3181, %v2861
  %v3183 = vadd.f32 %v3182, %v2862
  %v3184 = vadd.f32 %v3183, %v2863
  %v3185 = vadd.f32 %v3184, %v2864
  %v3186 = vadd.f32 %v3185, %v2865
  %v3187 = vadd.f32 %v3186, %v2866
  %v3188 = vadd.f32 %v3187, %v2867
  %v3189 = vadd.f32 %v3188, %v2868
  %v3190 = vadd.f32 %v3189, %v2869
  %v3191 = vadd.f32 %v3190, %v2870
  %v3192 = vsel %vm1959, %v2871, 0.0
  %v3193 = vadd.f32 %v3191, %v3192
  %3194 = vadd.xlane.f32.xlu0 %v3193
  %v3195 = vpop.xlane.xlu0 %3194
  %v3196 = vadd.f32 %v2898, 0.0
  %v3197 = vadd.f32 %v2925, 0.0
  %v3198 = vadd.f32 %v2952, 0.0
  %v3199 = vadd.f32 %v2979, 0.0
  %v3200 = vadd.f32 %v3006, 0.0
  %v3201 = vadd.f32 %v3033, 0.0
  %v3202 = vadd.f32 %v3060, 0.0
  %v3203 = vadd.f32 %v3087, 0.0
  %v3204 = vadd.f32 %v3114, 0.0
  %v3205 = vadd.f32 %v3141, 0.0
  %v3206 = vadd.f32 %v3168, 0.0
  %v3207 = vadd.f32 %v3195, 0.0
  %v3208 = vmul.f32 %v2560, 0.00031887754
  %v3209 = vmul.f32 %v2561, 0.00031887754
  %v3210 = vmul.f32 %v2562, 0.00031887754
  %v3211 = vmul.f32 %v2563, 0.00031887754
  %v3212 = vmul.f32 %v2564, 0.00031887754
  %v3213 = vmul.f32 %v2565, 0.00031887754
  %v3214 = vmul.f32 %v2566, 0.00031887754
  %v3215 = vmul.f32 %v2567, 0.00031887754
  %v3216 = vmul.f32 %v2568, 0.00031887754
  %v3217 = vmul.f32 %v2569, 0.00031887754
  %v3218 = vmul.f32 %v2570, 0.00031887754
  %v3219 = vmul.f32 %v2571, 0.00031887754
  %v3220 = vmul.f32 %v3196, 0.00031887754
  %v3221 = vmul.f32 %v3197, 0.00031887754
  %v3222 = vmul.f32 %v3198, 0.00031887754
  %v3223 = vmul.f32 %v3199, 0.00031887754
  %v3224 = vmul.f32 %v3200, 0.00031887754
  %v3225 = vmul.f32 %v3201, 0.00031887754
  %v3226 = vmul.f32 %v3202, 0.00031887754
  %v3227 = vmul.f32 %v3203, 0.00031887754
  %v3228 = vmul.f32 %v3204, 0.00031887754
  %v3229 = vmul.f32 %v3205, 0.00031887754
  %v3230 = vmul.f32 %v3206, 0.00031887754
  %v3231 = vmul.f32 %v3207, 0.00031887754
  %v3232 = vmul.f32 %v3208, %v3208
  %v3233 = vmul.f32 %v3209, %v3209
  %v3234 = vmul.f32 %v3210, %v3210
  %v3235 = vmul.f32 %v3211, %v3211
  %v3236 = vmul.f32 %v3212, %v3212
  %v3237 = vmul.f32 %v3213, %v3213
  %v3238 = vmul.f32 %v3214, %v3214
  %v3239 = vmul.f32 %v3215, %v3215
  %v3240 = vmul.f32 %v3216, %v3216
  %v3241 = vmul.f32 %v3217, %v3217
  %v3242 = vmul.f32 %v3218, %v3218
  %v3243 = vmul.f32 %v3219, %v3219
  %v3244 = vsub.f32 %v3220, %v3232
  %v3245 = vsub.f32 %v3221, %v3233
  %v3246 = vsub.f32 %v3222, %v3234
  %v3247 = vsub.f32 %v3223, %v3235
  %v3248 = vsub.f32 %v3224, %v3236
  %v3249 = vsub.f32 %v3225, %v3237
  %v3250 = vsub.f32 %v3226, %v3238
  %v3251 = vsub.f32 %v3227, %v3239
  %v3252 = vsub.f32 %v3228, %v3240
  %v3253 = vsub.f32 %v3229, %v3241
  %v3254 = vsub.f32 %v3230, %v3242
  %v3255 = vsub.f32 %v3231, %v3243
  %v3256 = vmax.f32 %v3244, 0.0
  %v3257 = vmax.f32 %v3245, 0.0
  %v3258 = vmax.f32 %v3246, 0.0
  %v3259 = vmax.f32 %v3247, 0.0
  %v3260 = vmax.f32 %v3248, 0.0
  %v3261 = vmax.f32 %v3249, 0.0
  %v3262 = vmax.f32 %v3250, 0.0
  %v3263 = vmax.f32 %v3251, 0.0
  %v3264 = vmax.f32 %v3252, 0.0
  %v3265 = vmax.f32 %v3253, 0.0
  %v3266 = vmax.f32 %v3254, 0.0
  %v3267 = vmax.f32 %v3255, 0.0
  %v3268 = vld [vmem:[%s2] sm:$0xff]
  %v3269 = vld [vmem:[%s2 + $0x8] sm:$0xff]
  %v3270 = vld [vmem:[%s2 + $0x10] sm:$0xff]
  %v3271 = vld [vmem:[%s2 + $0x18] sm:$0xff]
  %v3272 = vld [vmem:[%s2 + $0x20] sm:$0xff]
  %v3273 = vld [vmem:[%s2 + $0x28] sm:$0xff]
  %v3274 = vld [vmem:[%s2 + $0x30] sm:$0xff]
  %v3275 = vld [vmem:[%s2 + $0x38] sm:$0xff]
  %v3276 = vld [vmem:[%s2 + $0x40] sm:$0xff]
  %v3277 = vld [vmem:[%s2 + $0x48] sm:$0xff]
  %v3278 = vld [vmem:[%s2 + $0x50] sm:$0xff]
  %v3279 = vld [vmem:[%s2 + $0x58] sm:$0xff]
  %v3280 = vadd.f32 %v3256, 1e-05
  %v3281 = vadd.f32 %v3257, 1e-05
  %v3282 = vadd.f32 %v3258, 1e-05
  %v3283 = vadd.f32 %v3259, 1e-05
  %v3284 = vadd.f32 %v3260, 1e-05
  %v3285 = vadd.f32 %v3261, 1e-05
  %v3286 = vadd.f32 %v3262, 1e-05
  %v3287 = vadd.f32 %v3263, 1e-05
  %v3288 = vadd.f32 %v3264, 1e-05
  %v3289 = vadd.f32 %v3265, 1e-05
  %v3290 = vadd.f32 %v3266, 1e-05
  %v3291 = vadd.f32 %v3267, 1e-05
  %v3292 = vrsqrt.pop %v3280
  %v3293 = vrsqrt.pop %v3281
  %v3294 = vrsqrt.pop %v3282
  %v3295 = vrsqrt.pop %v3283
  %v3296 = vrsqrt.pop %v3284
  %v3297 = vrsqrt.pop %v3285
  %v3298 = vrsqrt.pop %v3286
  %v3299 = vrsqrt.pop %v3287
  %v3300 = vrsqrt.pop %v3288
  %v3301 = vrsqrt.pop %v3289
  %v3302 = vrsqrt.pop %v3290
  %v3303 = vrsqrt.pop %v3291
  %v3304 = vmul.f32 %v3268, %v3292
  %v3305 = vmul.f32 %v3269, %v3293
  %v3306 = vmul.f32 %v3270, %v3294
  %v3307 = vmul.f32 %v3271, %v3295
  %v3308 = vmul.f32 %v3272, %v3296
  %v3309 = vmul.f32 %v3273, %v3297
  %v3310 = vmul.f32 %v3274, %v3298
  %v3311 = vmul.f32 %v3275, %v3299
  %v3312 = vmul.f32 %v3276, %v3300
  %v3313 = vmul.f32 %v3277, %v3301
  %v3314 = vmul.f32 %v3278, %v3302
  %v3315 = vmul.f32 %v3279, %v3303
  %v3316 = vld [vmem:[%s3] sm:$0xff]
  %v3317 = vld [vmem:[%s3 + $0x8] sm:$0xff]
  %v3318 = vld [vmem:[%s3 + $0x10] sm:$0xff]
  %v3319 = vld [vmem:[%s3 + $0x18] sm:$0xff]
  %v3320 = vld [vmem:[%s3 + $0x20] sm:$0xff]
  %v3321 = vld [vmem:[%s3 + $0x28] sm:$0xff]
  %v3322 = vld [vmem:[%s3 + $0x30] sm:$0xff]
  %v3323 = vld [vmem:[%s3 + $0x38] sm:$0xff]
  %v3324 = vld [vmem:[%s3 + $0x40] sm:$0xff]
  %v3325 = vld [vmem:[%s3 + $0x48] sm:$0xff]
  %v3326 = vld [vmem:[%s3 + $0x50] sm:$0xff]
  %v3327 = vld [vmem:[%s3 + $0x58] sm:$0xff]
  %v3328 = vmul.f32 %v3208, %v3304
  %v3329 = vmul.f32 %v3209, %v3305
  %v3330 = vmul.f32 %v3210, %v3306
  %v3331 = vmul.f32 %v3211, %v3307
  %v3332 = vmul.f32 %v3212, %v3308
  %v3333 = vmul.f32 %v3213, %v3309
  %v3334 = vmul.f32 %v3214, %v3310
  %v3335 = vmul.f32 %v3215, %v3311
  %v3336 = vmul.f32 %v3216, %v3312
  %v3337 = vmul.f32 %v3217, %v3313
  %v3338 = vmul.f32 %v3218, %v3314
  %v3339 = vmul.f32 %v3219, %v3315
  %v3340 = vsub.f32 %v3316, %v3328
  %v3341 = vsub.f32 %v3317, %v3329
  %v3342 = vsub.f32 %v3318, %v3330
  %v3343 = vsub.f32 %v3319, %v3331
  %v3344 = vsub.f32 %v3320, %v3332
  %v3345 = vsub.f32 %v3321, %v3333
  %v3346 = vsub.f32 %v3322, %v3334
  %v3347 = vsub.f32 %v3323, %v3335
  %v3348 = vsub.f32 %v3324, %v3336
  %v3349 = vsub.f32 %v3325, %v3337
  %v3350 = vsub.f32 %v3326, %v3338
  %v3351 = vsub.f32 %v3327, %v3339
  %v3352 = vld [vmem:[%s4] sm:$0xff]
  %v3353 = vld [vmem:[%s4 + $0x8] sm:$0xff]
  %v3354 = vld [vmem:[%s4 + $0x10] sm:$0xff]
  %v3355 = vld [vmem:[%s4 + $0x18] sm:$0xff]
  %v3356 = vld [vmem:[%s4 + $0x20] sm:$0xff]
  %v3357 = vld [vmem:[%s4 + $0x28] sm:$0xff]
  %v3358 = vld [vmem:[%s4 + $0x30] sm:$0xff]
  %v3359 = vld [vmem:[%s4 + $0x38] sm:$0xff]
  %v3360 = vld [vmem:[%s4 + $0x40] sm:$0xff]
  %v3361 = vld [vmem:[%s4 + $0x48] sm:$0xff]
  %v3362 = vld [vmem:[%s4 + $0x50] sm:$0xff]
  %v3363 = vld [vmem:[%s4 + $0x58] sm:$0xff]
  %v3364 = vld [vmem:[%s4 + $0x60] sm:$0xff]
  %v3365 = vld [vmem:[%s4 + $0x68] sm:$0xff]
  %v3366 = vld [vmem:[%s4 + $0x70] sm:$0xff]
  %v3367 = vld [vmem:[%s4 + $0x78] sm:$0xff]
  %v3368 = vld [vmem:[%s4 + $0x80] sm:$0xff]
  %v3369 = vld [vmem:[%s4 + $0x88] sm:$0xff]
  %v3370 = vld [vmem:[%s4 + $0x90] sm:$0xff]
  %v3371 = vld [vmem:[%s4 + $0x98] sm:$0xff]
  %v3372 = vld [vmem:[%s4 + $0xa0] sm:$0xff]
  %v3373 = vld [vmem:[%s4 + $0xa8] sm:$0xff]
  %v3374 = vld [vmem:[%s4 + $0xb0] sm:$0xff]
  %v3375 = vld [vmem:[%s4 + $0xb8] sm:$0xff]
  %v3376 = vld [vmem:[%s4 + $0xc0] sm:$0xff]
  %v3377 = vld [vmem:[%s4 + $0xc8] sm:$0xff]
  %v3378 = vld [vmem:[%s4 + $0xd0] sm:$0xff]
  %v3379 = vld [vmem:[%s4 + $0xd8] sm:$0xff]
  %v3380 = vld [vmem:[%s4 + $0xe0] sm:$0xff]
  %v3381 = vld [vmem:[%s4 + $0xe8] sm:$0xff]
  %v3382 = vld [vmem:[%s4 + $0xf0] sm:$0xff]
  %v3383 = vld [vmem:[%s4 + $0xf8] sm:$0xff]
  %v3384 = vld [vmem:[%s4 + $0x100] sm:$0xff]
  %v3385 = vld [vmem:[%s4 + $0x108] sm:$0xff]
  %v3386 = vld [vmem:[%s4 + $0x110] sm:$0xff]
  %v3387 = vld [vmem:[%s4 + $0x118] sm:$0xff]
  %v3388 = vld [vmem:[%s4 + $0x120] sm:$0xff]
  %v3389 = vld [vmem:[%s4 + $0x128] sm:$0xff]
  %v3390 = vld [vmem:[%s4 + $0x130] sm:$0xff]
  %v3391 = vld [vmem:[%s4 + $0x138] sm:$0xff]
  %v3392 = vld [vmem:[%s4 + $0x140] sm:$0xff]
  %v3393 = vld [vmem:[%s4 + $0x148] sm:$0xff]
  %v3394 = vld [vmem:[%s4 + $0x150] sm:$0xff]
  %v3395 = vld [vmem:[%s4 + $0x158] sm:$0xff]
  %v3396 = vld [vmem:[%s4 + $0x160] sm:$0xff]
  %v3397 = vld [vmem:[%s4 + $0x168] sm:$0xff]
  %v3398 = vld [vmem:[%s4 + $0x170] sm:$0xff]
  %v3399 = vld [vmem:[%s4 + $0x178] sm:$0xff]
  %v3400 = vld [vmem:[%s4 + $0x180] sm:$0xff]
  %v3401 = vld [vmem:[%s4 + $0x188] sm:$0xff]
  %v3402 = vld [vmem:[%s4 + $0x190] sm:$0xff]
  %v3403 = vld [vmem:[%s4 + $0x198] sm:$0xff]
  %v3404 = vld [vmem:[%s4 + $0x1a0] sm:$0xff]
  %v3405 = vld [vmem:[%s4 + $0x1a8] sm:$0xff]
  %v3406 = vld [vmem:[%s4 + $0x1b0] sm:$0xff]
  %v3407 = vld [vmem:[%s4 + $0x1b8] sm:$0xff]
  %v3408 = vld [vmem:[%s4 + $0x1c0] sm:$0xff]
  %v3409 = vld [vmem:[%s4 + $0x1c8] sm:$0xff]
  %v3410 = vld [vmem:[%s4 + $0x1d0] sm:$0xff]
  %v3411 = vld [vmem:[%s4 + $0x1d8] sm:$0xff]
  %v3412 = vld [vmem:[%s4 + $0x1e0] sm:$0xff]
  %v3413 = vld [vmem:[%s4 + $0x1e8] sm:$0xff]
  %v3414 = vld [vmem:[%s4 + $0x1f0] sm:$0xff]
  %v3415 = vld [vmem:[%s4 + $0x1f8] sm:$0xff]
  %v3416 = vld [vmem:[%s4 + $0x200] sm:$0xff]
  %v3417 = vld [vmem:[%s4 + $0x208] sm:$0xff]
  %v3418 = vld [vmem:[%s4 + $0x210] sm:$0xff]
  %v3419 = vld [vmem:[%s4 + $0x218] sm:$0xff]
  %v3420 = vld [vmem:[%s4 + $0x220] sm:$0xff]
  %v3421 = vld [vmem:[%s4 + $0x228] sm:$0xff]
  %v3422 = vld [vmem:[%s4 + $0x230] sm:$0xff]
  %v3423 = vld [vmem:[%s4 + $0x238] sm:$0xff]
  %v3424 = vld [vmem:[%s4 + $0x240] sm:$0xff]
  %v3425 = vld [vmem:[%s4 + $0x248] sm:$0xff]
  %v3426 = vld [vmem:[%s4 + $0x250] sm:$0xff]
  %v3427 = vld [vmem:[%s4 + $0x258] sm:$0xff]
  %v3428 = vld [vmem:[%s4 + $0x260] sm:$0xff]
  %v3429 = vld [vmem:[%s4 + $0x268] sm:$0xff]
  %v3430 = vld [vmem:[%s4 + $0x270] sm:$0xff]
  %v3431 = vld [vmem:[%s4 + $0x278] sm:$0xff]
  %v3432 = vld [vmem:[%s4 + $0x280] sm:$0xff]
  %v3433 = vld [vmem:[%s4 + $0x288] sm:$0xff]
  %v3434 = vld [vmem:[%s4 + $0x290] sm:$0xff]
  %v3435 = vld [vmem:[%s4 + $0x298] sm:$0xff]
  %v3436 = vld [vmem:[%s4 + $0x2a0] sm:$0xff]
  %v3437 = vld [vmem:[%s4 + $0x2a8] sm:$0xff]
  %v3438 = vld [vmem:[%s4 + $0x2b0] sm:$0xff]
  %v3439 = vld [vmem:[%s4 + $0x2b8] sm:$0xff]
  %v3440 = vld [vmem:[%s4 + $0x2c0] sm:$0xff]
  %v3441 = vld [vmem:[%s4 + $0x2c8] sm:$0xff]
  %v3442 = vld [vmem:[%s4 + $0x2d0] sm:$0xff]
  %v3443 = vld [vmem:[%s4 + $0x2d8] sm:$0xff]
  %v3444 = vld [vmem:[%s4 + $0x2e0] sm:$0xff]
  %v3445 = vld [vmem:[%s4 + $0x2e8] sm:$0xff]
  %v3446 = vld [vmem:[%s4 + $0x2f0] sm:$0xff]
  %v3447 = vld [vmem:[%s4 + $0x2f8] sm:$0xff]
  %v3448 = vld [vmem:[%s4 + $0x300] sm:$0xff]
  %v3449 = vld [vmem:[%s4 + $0x308] sm:$0xff]
  %v3450 = vld [vmem:[%s4 + $0x310] sm:$0xff]
  %v3451 = vld [vmem:[%s4 + $0x318] sm:$0xff]
  %v3452 = vld [vmem:[%s4 + $0x320] sm:$0xff]
  %v3453 = vld [vmem:[%s4 + $0x328] sm:$0xff]
  %v3454 = vld [vmem:[%s4 + $0x330] sm:$0xff]
  %v3455 = vld [vmem:[%s4 + $0x338] sm:$0xff]
  %v3456 = vld [vmem:[%s4 + $0x340] sm:$0xff]
  %v3457 = vld [vmem:[%s4 + $0x348] sm:$0xff]
  %v3458 = vld [vmem:[%s4 + $0x350] sm:$0xff]
  %v3459 = vld [vmem:[%s4 + $0x358] sm:$0xff]
  %v3460 = vld [vmem:[%s4 + $0x360] sm:$0xff]
  %v3461 = vld [vmem:[%s4 + $0x368] sm:$0xff]
  %v3462 = vld [vmem:[%s4 + $0x370] sm:$0xff]
  %v3463 = vld [vmem:[%s4 + $0x378] sm:$0xff]
  %v3464 = vld [vmem:[%s4 + $0x380] sm:$0xff]
  %v3465 = vld [vmem:[%s4 + $0x388] sm:$0xff]
  %v3466 = vld [vmem:[%s4 + $0x390] sm:$0xff]
  %v3467 = vld [vmem:[%s4 + $0x398] sm:$0xff]
  %v3468 = vld [vmem:[%s4 + $0x3a0] sm:$0xff]
  %v3469 = vld [vmem:[%s4 + $0x3a8] sm:$0xff]
  %v3470 = vld [vmem:[%s4 + $0x3b0] sm:$0xff]
  %v3471 = vld [vmem:[%s4 + $0x3b8] sm:$0xff]
  %v3472 = vld [vmem:[%s4 + $0x3c0] sm:$0xff]
  %v3473 = vld [vmem:[%s4 + $0x3c8] sm:$0xff]
  %v3474 = vld [vmem:[%s4 + $0x3d0] sm:$0xff]
  %v3475 = vld [vmem:[%s4 + $0x3d8] sm:$0xff]
  %v3476 = vld [vmem:[%s4 + $0x3e0] sm:$0xff]
  %v3477 = vld [vmem:[%s4 + $0x3e8] sm:$0xff]
  %v3478 = vld [vmem:[%s4 + $0x3f0] sm:$0xff]
  %v3479 = vld [vmem:[%s4 + $0x3f8] sm:$0xff]
  %v3480 = vld [vmem:[%s4 + $0x400] sm:$0xff]
  %v3481 = vld [vmem:[%s4 + $0x408] sm:$0xff]
  %v3482 = vld [vmem:[%s4 + $0x410] sm:$0xff]
  %v3483 = vld [vmem:[%s4 + $0x418] sm:$0xff]
  %v3484 = vld [vmem:[%s4 + $0x420] sm:$0xff]
  %v3485 = vld [vmem:[%s4 + $0x428] sm:$0xff]
  %v3486 = vld [vmem:[%s4 + $0x430] sm:$0xff]
  %v3487 = vld [vmem:[%s4 + $0x438] sm:$0xff]
  %v3488 = vld [vmem:[%s4 + $0x440] sm:$0xff]
  %v3489 = vld [vmem:[%s4 + $0x448] sm:$0xff]
  %v3490 = vld [vmem:[%s4 + $0x450] sm:$0xff]
  %v3491 = vld [vmem:[%s4 + $0x458] sm:$0xff]
  %v3492 = vld [vmem:[%s4 + $0x460] sm:$0xff]
  %v3493 = vld [vmem:[%s4 + $0x468] sm:$0xff]
  %v3494 = vld [vmem:[%s4 + $0x470] sm:$0xff]
  %v3495 = vld [vmem:[%s4 + $0x478] sm:$0xff]
  %v3496 = vld [vmem:[%s4 + $0x480] sm:$0xff]
  %v3497 = vld [vmem:[%s4 + $0x488] sm:$0xff]
  %v3498 = vld [vmem:[%s4 + $0x490] sm:$0xff]
  %v3499 = vld [vmem:[%s4 + $0x498] sm:$0xff]
  %v3500 = vld [vmem:[%s4 + $0x4a0] sm:$0xff]
  %v3501 = vld [vmem:[%s4 + $0x4a8] sm:$0xff]
  %v3502 = vld [vmem:[%s4 + $0x4b0] sm:$0xff]
  %v3503 = vld [vmem:[%s4 + $0x4b8] sm:$0xff]
  %v3504 = vld [vmem:[%s4 + $0x4c0] sm:$0xff]
  %v3505 = vld [vmem:[%s4 + $0x4c8] sm:$0xff]
  %v3506 = vld [vmem:[%s4 + $0x4d0] sm:$0xff]
  %v3507 = vld [vmem:[%s4 + $0x4d8] sm:$0xff]
  %v3508 = vld [vmem:[%s4 + $0x4e0] sm:$0xff]
  %v3509 = vld [vmem:[%s4 + $0x4e8] sm:$0xff]
  %v3510 = vld [vmem:[%s4 + $0x4f0] sm:$0xff]
  %v3511 = vld [vmem:[%s4 + $0x4f8] sm:$0xff]
  %v3512 = vld [vmem:[%s4 + $0x500] sm:$0xff]
  %v3513 = vld [vmem:[%s4 + $0x508] sm:$0xff]
  %v3514 = vld [vmem:[%s4 + $0x510] sm:$0xff]
  %v3515 = vld [vmem:[%s4 + $0x518] sm:$0xff]
  %v3516 = vld [vmem:[%s4 + $0x520] sm:$0xff]
  %v3517 = vld [vmem:[%s4 + $0x528] sm:$0xff]
  %v3518 = vld [vmem:[%s4 + $0x530] sm:$0xff]
  %v3519 = vld [vmem:[%s4 + $0x538] sm:$0xff]
  %v3520 = vld [vmem:[%s4 + $0x540] sm:$0xff]
  %v3521 = vld [vmem:[%s4 + $0x548] sm:$0xff]
  %v3522 = vld [vmem:[%s4 + $0x550] sm:$0xff]
  %v3523 = vld [vmem:[%s4 + $0x558] sm:$0xff]
  %v3524 = vld [vmem:[%s4 + $0x560] sm:$0xff]
  %v3525 = vld [vmem:[%s4 + $0x568] sm:$0xff]
  %v3526 = vld [vmem:[%s4 + $0x570] sm:$0xff]
  %v3527 = vld [vmem:[%s4 + $0x578] sm:$0xff]
  %v3528 = vld [vmem:[%s4 + $0x580] sm:$0xff]
  %v3529 = vld [vmem:[%s4 + $0x588] sm:$0xff]
  %v3530 = vld [vmem:[%s4 + $0x590] sm:$0xff]
  %v3531 = vld [vmem:[%s4 + $0x598] sm:$0xff]
  %v3532 = vld [vmem:[%s4 + $0x5a0] sm:$0xff]
  %v3533 = vld [vmem:[%s4 + $0x5a8] sm:$0xff]
  %v3534 = vld [vmem:[%s4 + $0x5b0] sm:$0xff]
  %v3535 = vld [vmem:[%s4 + $0x5b8] sm:$0xff]
  %v3536 = vld [vmem:[%s4 + $0x5c0] sm:$0xff]
  %v3537 = vld [vmem:[%s4 + $0x5c8] sm:$0xff]
  %v3538 = vld [vmem:[%s4 + $0x5d0] sm:$0xff]
  %v3539 = vld [vmem:[%s4 + $0x5d8] sm:$0xff]
  %v3540 = vld [vmem:[%s4 + $0x5e0] sm:$0xff]
  %v3541 = vld [vmem:[%s4 + $0x5e8] sm:$0xff]
  %v3542 = vld [vmem:[%s4 + $0x5f0] sm:$0xff]
  %v3543 = vld [vmem:[%s4 + $0x5f8] sm:$0xff]
  %v3544 = vld [vmem:[%s4 + $0x600] sm:$0xff]
  %v3545 = vld [vmem:[%s4 + $0x608] sm:$0xff]
  %v3546 = vld [vmem:[%s4 + $0x610] sm:$0xff]
  %v3547 = vld [vmem:[%s4 + $0x618] sm:$0xff]
  %v3548 = vld [vmem:[%s4 + $0x620] sm:$0xff]
  %v3549 = vld [vmem:[%s4 + $0x628] sm:$0xff]
  %v3550 = vld [vmem:[%s4 + $0x630] sm:$0xff]
  %v3551 = vld [vmem:[%s4 + $0x638] sm:$0xff]
  %v3552 = vld [vmem:[%s4 + $0x640] sm:$0xff]
  %v3553 = vld [vmem:[%s4 + $0x648] sm:$0xff]
  %v3554 = vld [vmem:[%s4 + $0x650] sm:$0xff]
  %v3555 = vld [vmem:[%s4 + $0x658] sm:$0xff]
  %v3556 = vld [vmem:[%s4 + $0x660] sm:$0xff]
  %v3557 = vld [vmem:[%s4 + $0x668] sm:$0xff]
  %v3558 = vld [vmem:[%s4 + $0x670] sm:$0xff]
  %v3559 = vld [vmem:[%s4 + $0x678] sm:$0xff]
  %v3560 = vld [vmem:[%s4 + $0x680] sm:$0xff]
  %v3561 = vld [vmem:[%s4 + $0x688] sm:$0xff]
  %v3562 = vld [vmem:[%s4 + $0x690] sm:$0xff]
  %v3563 = vld [vmem:[%s4 + $0x698] sm:$0xff]
  %v3564 = vld [vmem:[%s4 + $0x6a0] sm:$0xff]
  %v3565 = vld [vmem:[%s4 + $0x6a8] sm:$0xff]
  %v3566 = vld [vmem:[%s4 + $0x6b0] sm:$0xff]
  %v3567 = vld [vmem:[%s4 + $0x6b8] sm:$0xff]
  %v3568 = vld [vmem:[%s4 + $0x6c0] sm:$0xff]
  %v3569 = vld [vmem:[%s4 + $0x6c8] sm:$0xff]
  %v3570 = vld [vmem:[%s4 + $0x6d0] sm:$0xff]
  %v3571 = vld [vmem:[%s4 + $0x6d8] sm:$0xff]
  %v3572 = vld [vmem:[%s4 + $0x6e0] sm:$0xff]
  %v3573 = vld [vmem:[%s4 + $0x6e8] sm:$0xff]
  %v3574 = vld [vmem:[%s4 + $0x6f0] sm:$0xff]
  %v3575 = vld [vmem:[%s4 + $0x6f8] sm:$0xff]
  %v3576 = vld [vmem:[%s4 + $0x700] sm:$0xff]
  %v3577 = vld [vmem:[%s4 + $0x708] sm:$0xff]
  %v3578 = vld [vmem:[%s4 + $0x710] sm:$0xff]
  %v3579 = vld [vmem:[%s4 + $0x718] sm:$0xff]
  %v3580 = vld [vmem:[%s4 + $0x720] sm:$0xff]
  %v3581 = vld [vmem:[%s4 + $0x728] sm:$0xff]
  %v3582 = vld [vmem:[%s4 + $0x730] sm:$0xff]
  %v3583 = vld [vmem:[%s4 + $0x738] sm:$0xff]
  %v3584 = vld [vmem:[%s4 + $0x740] sm:$0xff]
  %v3585 = vld [vmem:[%s4 + $0x748] sm:$0xff]
  %v3586 = vld [vmem:[%s4 + $0x750] sm:$0xff]
  %v3587 = vld [vmem:[%s4 + $0x758] sm:$0xff]
  %v3588 = vld [vmem:[%s4 + $0x760] sm:$0xff]
  %v3589 = vld [vmem:[%s4 + $0x768] sm:$0xff]
  %v3590 = vld [vmem:[%s4 + $0x770] sm:$0xff]
  %v3591 = vld [vmem:[%s4 + $0x778] sm:$0xff]
  %v3592 = vld [vmem:[%s4 + $0x780] sm:$0xff]
  %v3593 = vld [vmem:[%s4 + $0x788] sm:$0xff]
  %v3594 = vld [vmem:[%s4 + $0x790] sm:$0xff]
  %v3595 = vld [vmem:[%s4 + $0x798] sm:$0xff]
  %v3596 = vld [vmem:[%s4 + $0x7a0] sm:$0xff]
  %v3597 = vld [vmem:[%s4 + $0x7a8] sm:$0xff]
  %v3598 = vld [vmem:[%s4 + $0x7b0] sm:$0xff]
  %v3599 = vld [vmem:[%s4 + $0x7b8] sm:$0xff]
  %v3600 = vld [vmem:[%s4 + $0x7c0] sm:$0xff]
  %v3601 = vld [vmem:[%s4 + $0x7c8] sm:$0xff]
  %v3602 = vld [vmem:[%s4 + $0x7d0] sm:$0xff]
  %v3603 = vld [vmem:[%s4 + $0x7d8] sm:$0xff]
  %v3604 = vld [vmem:[%s4 + $0x7e0] sm:$0xff]
  %v3605 = vld [vmem:[%s4 + $0x7e8] sm:$0xff]
  %v3606 = vld [vmem:[%s4 + $0x7f0] sm:$0xff]
  %v3607 = vld [vmem:[%s4 + $0x7f8] sm:$0xff]
  %v3608 = vld [vmem:[%s4 + $0x800] sm:$0xff]
  %v3609 = vld [vmem:[%s4 + $0x808] sm:$0xff]
  %v3610 = vld [vmem:[%s4 + $0x810] sm:$0xff]
  %v3611 = vld [vmem:[%s4 + $0x818] sm:$0xff]
  %v3612 = vld [vmem:[%s4 + $0x820] sm:$0xff]
  %v3613 = vld [vmem:[%s4 + $0x828] sm:$0xff]
  %v3614 = vld [vmem:[%s4 + $0x830] sm:$0xff]
  %v3615 = vld [vmem:[%s4 + $0x838] sm:$0xff]
  %v3616 = vld [vmem:[%s4 + $0x840] sm:$0xff]
  %v3617 = vld [vmem:[%s4 + $0x848] sm:$0xff]
  %v3618 = vld [vmem:[%s4 + $0x850] sm:$0xff]
  %v3619 = vld [vmem:[%s4 + $0x858] sm:$0xff]
  %v3620 = vld [vmem:[%s4 + $0x860] sm:$0xff]
  %v3621 = vld [vmem:[%s4 + $0x868] sm:$0xff]
  %v3622 = vld [vmem:[%s4 + $0x870] sm:$0xff]
  %v3623 = vld [vmem:[%s4 + $0x878] sm:$0xff]
  %v3624 = vld [vmem:[%s4 + $0x880] sm:$0xff]
  %v3625 = vld [vmem:[%s4 + $0x888] sm:$0xff]
  %v3626 = vld [vmem:[%s4 + $0x890] sm:$0xff]
  %v3627 = vld [vmem:[%s4 + $0x898] sm:$0xff]
  %v3628 = vld [vmem:[%s4 + $0x8a0] sm:$0xff]
  %v3629 = vld [vmem:[%s4 + $0x8a8] sm:$0xff]
  %v3630 = vld [vmem:[%s4 + $0x8b0] sm:$0xff]
  %v3631 = vld [vmem:[%s4 + $0x8b8] sm:$0xff]
  %v3632 = vld [vmem:[%s4 + $0x8c0] sm:$0xff]
  %v3633 = vld [vmem:[%s4 + $0x8c8] sm:$0xff]
  %v3634 = vld [vmem:[%s4 + $0x8d0] sm:$0xff]
  %v3635 = vld [vmem:[%s4 + $0x8d8] sm:$0xff]
  %v3636 = vld [vmem:[%s4 + $0x8e0] sm:$0xff]
  %v3637 = vld [vmem:[%s4 + $0x8e8] sm:$0xff]
  %v3638 = vld [vmem:[%s4 + $0x8f0] sm:$0xff]
  %v3639 = vld [vmem:[%s4 + $0x8f8] sm:$0xff]
  %v3640 = vld [vmem:[%s4 + $0x900] sm:$0xff]
  %v3641 = vld [vmem:[%s4 + $0x908] sm:$0xff]
  %v3642 = vld [vmem:[%s4 + $0x910] sm:$0xff]
  %v3643 = vld [vmem:[%s4 + $0x918] sm:$0xff]
  %v3644 = vld [vmem:[%s4 + $0x920] sm:$0xff]
  %v3645 = vld [vmem:[%s4 + $0x928] sm:$0xff]
  %v3646 = vld [vmem:[%s4 + $0x930] sm:$0xff]
  %v3647 = vld [vmem:[%s4 + $0x938] sm:$0xff]
  %v3648 = vld [vmem:[%s4 + $0x940] sm:$0xff]
  %v3649 = vld [vmem:[%s4 + $0x948] sm:$0xff]
  %v3650 = vld [vmem:[%s4 + $0x950] sm:$0xff]
  %v3651 = vld [vmem:[%s4 + $0x958] sm:$0xff]
  %3653 = vset.pattern.permute.xlu0 0
  %3654 = vperm.xlu0 %3653, %v3304
  %v3655 = vpop.permute.xlu0 %3654
  %3658 = vset.pattern.permute.xlu0 0
  %3659 = vperm.xlu0 %3658, %v3305
  %v3660 = vpop.permute.xlu0 %3659
  %3663 = vset.pattern.permute.xlu0 0
  %3664 = vperm.xlu0 %3663, %v3306
  %v3665 = vpop.permute.xlu0 %3664
  %3668 = vset.pattern.permute.xlu0 0
  %3669 = vperm.xlu0 %3668, %v3307
  %v3670 = vpop.permute.xlu0 %3669
  %3673 = vset.pattern.permute.xlu0 0
  %3674 = vperm.xlu0 %3673, %v3308
  %v3675 = vpop.permute.xlu0 %3674
  %3678 = vset.pattern.permute.xlu0 0
  %3679 = vperm.xlu0 %3678, %v3309
  %v3680 = vpop.permute.xlu0 %3679
  %3683 = vset.pattern.permute.xlu0 0
  %3684 = vperm.xlu0 %3683, %v3310
  %v3685 = vpop.permute.xlu0 %3684
  %3688 = vset.pattern.permute.xlu0 0
  %3689 = vperm.xlu0 %3688, %v3311
  %v3690 = vpop.permute.xlu0 %3689
  %3693 = vset.pattern.permute.xlu0 0
  %3694 = vperm.xlu0 %3693, %v3312
  %v3695 = vpop.permute.xlu0 %3694
  %3698 = vset.pattern.permute.xlu0 0
  %3699 = vperm.xlu0 %3698, %v3313
  %v3700 = vpop.permute.xlu0 %3699
  %3703 = vset.pattern.permute.xlu0 0
  %3704 = vperm.xlu0 %3703, %v3314
  %v3705 = vpop.permute.xlu0 %3704
  %3708 = vset.pattern.permute.xlu0 0
  %3709 = vperm.xlu0 %3708, %v3315
  %v3710 = vpop.permute.xlu0 %3709
  %v3712 = vmul.f32 %v3352, %v3655
  %v3713 = vmul.f32 %v3353, %v3655
  %v3714 = vmul.f32 %v3354, %v3655
  %v3715 = vmul.f32 %v3355, %v3655
  %v3716 = vmul.f32 %v3356, %v3655
  %v3717 = vmul.f32 %v3357, %v3655
  %v3718 = vmul.f32 %v3358, %v3655
  %v3719 = vmul.f32 %v3359, %v3655
  %v3720 = vmul.f32 %v3360, %v3655
  %v3721 = vmul.f32 %v3361, %v3655
  %v3722 = vmul.f32 %v3362, %v3655
  %v3723 = vmul.f32 %v3363, %v3655
  %v3724 = vmul.f32 %v3364, %v3655
  %v3725 = vmul.f32 %v3365, %v3655
  %v3726 = vmul.f32 %v3366, %v3655
  %v3727 = vmul.f32 %v3367, %v3655
  %v3728 = vmul.f32 %v3368, %v3655
  %v3729 = vmul.f32 %v3369, %v3655
  %v3730 = vmul.f32 %v3370, %v3655
  %v3731 = vmul.f32 %v3371, %v3655
  %v3732 = vmul.f32 %v3372, %v3655
  %v3733 = vmul.f32 %v3373, %v3655
  %v3734 = vmul.f32 %v3374, %v3655
  %v3735 = vmul.f32 %v3375, %v3655
  %v3736 = vmul.f32 %v3376, %v3655
  %v3737 = vmul.f32 %v3377, %v3660
  %v3738 = vmul.f32 %v3378, %v3660
  %v3739 = vmul.f32 %v3379, %v3660
  %v3740 = vmul.f32 %v3380, %v3660
  %v3741 = vmul.f32 %v3381, %v3660
  %v3742 = vmul.f32 %v3382, %v3660
  %v3743 = vmul.f32 %v3383, %v3660
  %v3744 = vmul.f32 %v3384, %v3660
  %v3745 = vmul.f32 %v3385, %v3660
  %v3746 = vmul.f32 %v3386, %v3660
  %v3747 = vmul.f32 %v3387, %v3660
  %v3748 = vmul.f32 %v3388, %v3660
  %v3749 = vmul.f32 %v3389, %v3660
  %v3750 = vmul.f32 %v3390, %v3660
  %v3751 = vmul.f32 %v3391, %v3660
  %v3752 = vmul.f32 %v3392, %v3660
  %v3753 = vmul.f32 %v3393, %v3660
  %v3754 = vmul.f32 %v3394, %v3660
  %v3755 = vmul.f32 %v3395, %v3660
  %v3756 = vmul.f32 %v3396, %v3660
  %v3757 = vmul.f32 %v3397, %v3660
  %v3758 = vmul.f32 %v3398, %v3660
  %v3759 = vmul.f32 %v3399, %v3660
  %v3760 = vmul.f32 %v3400, %v3660
  %v3761 = vmul.f32 %v3401, %v3660
  %v3762 = vmul.f32 %v3402, %v3665
  %v3763 = vmul.f32 %v3403, %v3665
  %v3764 = vmul.f32 %v3404, %v3665
  %v3765 = vmul.f32 %v3405, %v3665
  %v3766 = vmul.f32 %v3406, %v3665
  %v3767 = vmul.f32 %v3407, %v3665
  %v3768 = vmul.f32 %v3408, %v3665
  %v3769 = vmul.f32 %v3409, %v3665
  %v3770 = vmul.f32 %v3410, %v3665
  %v3771 = vmul.f32 %v3411, %v3665
  %v3772 = vmul.f32 %v3412, %v3665
  %v3773 = vmul.f32 %v3413, %v3665
  %v3774 = vmul.f32 %v3414, %v3665
  %v3775 = vmul.f32 %v3415, %v3665
  %v3776 = vmul.f32 %v3416, %v3665
  %v3777 = vmul.f32 %v3417, %v3665
  %v3778 = vmul.f32 %v3418, %v3665
  %v3779 = vmul.f32 %v3419, %v3665
  %v3780 = vmul.f32 %v3420, %v3665
  %v3781 = vmul.f32 %v3421, %v3665
  %v3782 = vmul.f32 %v3422, %v3665
  %v3783 = vmul.f32 %v3423, %v3665
  %v3784 = vmul.f32 %v3424, %v3665
  %v3785 = vmul.f32 %v3425, %v3665
  %v3786 = vmul.f32 %v3426, %v3665
  %v3787 = vmul.f32 %v3427, %v3670
  %v3788 = vmul.f32 %v3428, %v3670
  %v3789 = vmul.f32 %v3429, %v3670
  %v3790 = vmul.f32 %v3430, %v3670
  %v3791 = vmul.f32 %v3431, %v3670
  %v3792 = vmul.f32 %v3432, %v3670
  %v3793 = vmul.f32 %v3433, %v3670
  %v3794 = vmul.f32 %v3434, %v3670
  %v3795 = vmul.f32 %v3435, %v3670
  %v3796 = vmul.f32 %v3436, %v3670
  %v3797 = vmul.f32 %v3437, %v3670
  %v3798 = vmul.f32 %v3438, %v3670
  %v3799 = vmul.f32 %v3439, %v3670
  %v3800 = vmul.f32 %v3440, %v3670
  %v3801 = vmul.f32 %v3441, %v3670
  %v3802 = vmul.f32 %v3442, %v3670
  %v3803 = vmul.f32 %v3443, %v3670
  %v3804 = vmul.f32 %v3444, %v3670
  %v3805 = vmul.f32 %v3445, %v3670
  %v3806 = vmul.f32 %v3446, %v3670
  %v3807 = vmul.f32 %v3447, %v3670
  %v3808 = vmul.f32 %v3448, %v3670
  %v3809 = vmul.f32 %v3449, %v3670
  %v3810 = vmul.f32 %v3450, %v3670
  %v3811 = vmul.f32 %v3451, %v3670
  %v3812 = vmul.f32 %v3452, %v3675
  %v3813 = vmul.f32 %v3453, %v3675
  %v3814 = vmul.f32 %v3454, %v3675
  %v3815 = vmul.f32 %v3455, %v3675
  %v3816 = vmul.f32 %v3456, %v3675
  %v3817 = vmul.f32 %v3457, %v3675
  %v3818 = vmul.f32 %v3458, %v3675
  %v3819 = vmul.f32 %v3459, %v3675
  %v3820 = vmul.f32 %v3460, %v3675
  %v3821 = vmul.f32 %v3461, %v3675
  %v3822 = vmul.f32 %v3462, %v3675
  %v3823 = vmul.f32 %v3463, %v3675
  %v3824 = vmul.f32 %v3464, %v3675
  %v3825 = vmul.f32 %v3465, %v3675
  %v3826 = vmul.f32 %v3466, %v3675
  %v3827 = vmul.f32 %v3467, %v3675
  %v3828 = vmul.f32 %v3468, %v3675
  %v3829 = vmul.f32 %v3469, %v3675
  %v3830 = vmul.f32 %v3470, %v3675
  %v3831 = vmul.f32 %v3471, %v3675
  %v3832 = vmul.f32 %v3472, %v3675
  %v3833 = vmul.f32 %v3473, %v3675
  %v3834 = vmul.f32 %v3474, %v3675
  %v3835 = vmul.f32 %v3475, %v3675
  %v3836 = vmul.f32 %v3476, %v3675
  %v3837 = vmul.f32 %v3477, %v3680
  %v3838 = vmul.f32 %v3478, %v3680
  %v3839 = vmul.f32 %v3479, %v3680
  %v3840 = vmul.f32 %v3480, %v3680
  %v3841 = vmul.f32 %v3481, %v3680
  %v3842 = vmul.f32 %v3482, %v3680
  %v3843 = vmul.f32 %v3483, %v3680
  %v3844 = vmul.f32 %v3484, %v3680
  %v3845 = vmul.f32 %v3485, %v3680
  %v3846 = vmul.f32 %v3486, %v3680
  %v3847 = vmul.f32 %v3487, %v3680
  %v3848 = vmul.f32 %v3488, %v3680
  %v3849 = vmul.f32 %v3489, %v3680
  %v3850 = vmul.f32 %v3490, %v3680
  %v3851 = vmul.f32 %v3491, %v3680
  %v3852 = vmul.f32 %v3492, %v3680
  %v3853 = vmul.f32 %v3493, %v3680
  %v3854 = vmul.f32 %v3494, %v3680
  %v3855 = vmul.f32 %v3495, %v3680
  %v3856 = vmul.f32 %v3496, %v3680
  %v3857 = vmul.f32 %v3497, %v3680
  %v3858 = vmul.f32 %v3498, %v3680
  %v3859 = vmul.f32 %v3499, %v3680
  %v3860 = vmul.f32 %v3500, %v3680
  %v3861 = vmul.f32 %v3501, %v3680
  %v3862 = vmul.f32 %v3502, %v3685
  %v3863 = vmul.f32 %v3503, %v3685
  %v3864 = vmul.f32 %v3504, %v3685
  %v3865 = vmul.f32 %v3505, %v3685
  %v3866 = vmul.f32 %v3506, %v3685
  %v3867 = vmul.f32 %v3507, %v3685
  %v3868 = vmul.f32 %v3508, %v3685
  %v3869 = vmul.f32 %v3509, %v3685
  %v3870 = vmul.f32 %v3510, %v3685
  %v3871 = vmul.f32 %v3511, %v3685
  %v3872 = vmul.f32 %v3512, %v3685
  %v3873 = vmul.f32 %v3513, %v3685
  %v3874 = vmul.f32 %v3514, %v3685
  %v3875 = vmul.f32 %v3515, %v3685
  %v3876 = vmul.f32 %v3516, %v3685
  %v3877 = vmul.f32 %v3517, %v3685
  %v3878 = vmul.f32 %v3518, %v3685
  %v3879 = vmul.f32 %v3519, %v3685
  %v3880 = vmul.f32 %v3520, %v3685
  %v3881 = vmul.f32 %v3521, %v3685
  %v3882 = vmul.f32 %v3522, %v3685
  %v3883 = vmul.f32 %v3523, %v3685
  %v3884 = vmul.f32 %v3524, %v3685
  %v3885 = vmul.f32 %v3525, %v3685
  %v3886 = vmul.f32 %v3526, %v3685
  %v3887 = vmul.f32 %v3527, %v3690
  %v3888 = vmul.f32 %v3528, %v3690
  %v3889 = vmul.f32 %v3529, %v3690
  %v3890 = vmul.f32 %v3530, %v3690
  %v3891 = vmul.f32 %v3531, %v3690
  %v3892 = vmul.f32 %v3532, %v3690
  %v3893 = vmul.f32 %v3533, %v3690
  %v3894 = vmul.f32 %v3534, %v3690
  %v3895 = vmul.f32 %v3535, %v3690
  %v3896 = vmul.f32 %v3536, %v3690
  %v3897 = vmul.f32 %v3537, %v3690
  %v3898 = vmul.f32 %v3538, %v3690
  %v3899 = vmul.f32 %v3539, %v3690
  %v3900 = vmul.f32 %v3540, %v3690
  %v3901 = vmul.f32 %v3541, %v3690
  %v3902 = vmul.f32 %v3542, %v3690
  %v3903 = vmul.f32 %v3543, %v3690
  %v3904 = vmul.f32 %v3544, %v3690
  %v3905 = vmul.f32 %v3545, %v3690
  %v3906 = vmul.f32 %v3546, %v3690
  %v3907 = vmul.f32 %v3547, %v3690
  %v3908 = vmul.f32 %v3548, %v3690
  %v3909 = vmul.f32 %v3549, %v3690
  %v3910 = vmul.f32 %v3550, %v3690
  %v3911 = vmul.f32 %v3551, %v3690
  %v3912 = vmul.f32 %v3552, %v3695
  %v3913 = vmul.f32 %v3553, %v3695
  %v3914 = vmul.f32 %v3554, %v3695
  %v3915 = vmul.f32 %v3555, %v3695
  %v3916 = vmul.f32 %v3556, %v3695
  %v3917 = vmul.f32 %v3557, %v3695
  %v3918 = vmul.f32 %v3558, %v3695
  %v3919 = vmul.f32 %v3559, %v3695
  %v3920 = vmul.f32 %v3560, %v3695
  %v3921 = vmul.f32 %v3561, %v3695
  %v3922 = vmul.f32 %v3562, %v3695
  %v3923 = vmul.f32 %v3563, %v3695
  %v3924 = vmul.f32 %v3564, %v3695
  %v3925 = vmul.f32 %v3565, %v3695
  %v3926 = vmul.f32 %v3566, %v3695
  %v3927 = vmul.f32 %v3567, %v3695
  %v3928 = vmul.f32 %v3568, %v3695
  %v3929 = vmul.f32 %v3569, %v3695
  %v3930 = vmul.f32 %v3570, %v3695
  %v3931 = vmul.f32 %v3571, %v3695
  %v3932 = vmul.f32 %v3572, %v3695
  %v3933 = vmul.f32 %v3573, %v3695
  %v3934 = vmul.f32 %v3574, %v3695
  %v3935 = vmul.f32 %v3575, %v3695
  %v3936 = vmul.f32 %v3576, %v3695
  %v3937 = vmul.f32 %v3577, %v3700
  %v3938 = vmul.f32 %v3578, %v3700
  %v3939 = vmul.f32 %v3579, %v3700
  %v3940 = vmul.f32 %v3580, %v3700
  %v3941 = vmul.f32 %v3581, %v3700
  %v3942 = vmul.f32 %v3582, %v3700
  %v3943 = vmul.f32 %v3583, %v3700
  %v3944 = vmul.f32 %v3584, %v3700
  %v3945 = vmul.f32 %v3585, %v3700
  %v3946 = vmul.f32 %v3586, %v3700
  %v3947 = vmul.f32 %v3587, %v3700
  %v3948 = vmul.f32 %v3588, %v3700
  %v3949 = vmul.f32 %v3589, %v3700
  %v3950 = vmul.f32 %v3590, %v3700
  %v3951 = vmul.f32 %v3591, %v3700
  %v3952 = vmul.f32 %v3592, %v3700
  %v3953 = vmul.f32 %v3593, %v3700
  %v3954 = vmul.f32 %v3594, %v3700
  %v3955 = vmul.f32 %v3595, %v3700
  %v3956 = vmul.f32 %v3596, %v3700
  %v3957 = vmul.f32 %v3597, %v3700
  %v3958 = vmul.f32 %v3598, %v3700
  %v3959 = vmul.f32 %v3599, %v3700
  %v3960 = vmul.f32 %v3600, %v3700
  %v3961 = vmul.f32 %v3601, %v3700
  %v3962 = vmul.f32 %v3602, %v3705
  %v3963 = vmul.f32 %v3603, %v3705
  %v3964 = vmul.f32 %v3604, %v3705
  %v3965 = vmul.f32 %v3605, %v3705
  %v3966 = vmul.f32 %v3606, %v3705
  %v3967 = vmul.f32 %v3607, %v3705
  %v3968 = vmul.f32 %v3608, %v3705
  %v3969 = vmul.f32 %v3609, %v3705
  %v3970 = vmul.f32 %v3610, %v3705
  %v3971 = vmul.f32 %v3611, %v3705
  %v3972 = vmul.f32 %v3612, %v3705
  %v3973 = vmul.f32 %v3613, %v3705
  %v3974 = vmul.f32 %v3614, %v3705
  %v3975 = vmul.f32 %v3615, %v3705
  %v3976 = vmul.f32 %v3616, %v3705
  %v3977 = vmul.f32 %v3617, %v3705
  %v3978 = vmul.f32 %v3618, %v3705
  %v3979 = vmul.f32 %v3619, %v3705
  %v3980 = vmul.f32 %v3620, %v3705
  %v3981 = vmul.f32 %v3621, %v3705
  %v3982 = vmul.f32 %v3622, %v3705
  %v3983 = vmul.f32 %v3623, %v3705
  %v3984 = vmul.f32 %v3624, %v3705
  %v3985 = vmul.f32 %v3625, %v3705
  %v3986 = vmul.f32 %v3626, %v3705
  %v3987 = vmul.f32 %v3627, %v3710
  %v3988 = vmul.f32 %v3628, %v3710
  %v3989 = vmul.f32 %v3629, %v3710
  %v3990 = vmul.f32 %v3630, %v3710
  %v3991 = vmul.f32 %v3631, %v3710
  %v3992 = vmul.f32 %v3632, %v3710
  %v3993 = vmul.f32 %v3633, %v3710
  %v3994 = vmul.f32 %v3634, %v3710
  %v3995 = vmul.f32 %v3635, %v3710
  %v3996 = vmul.f32 %v3636, %v3710
  %v3997 = vmul.f32 %v3637, %v3710
  %v3998 = vmul.f32 %v3638, %v3710
  %v3999 = vmul.f32 %v3639, %v3710
  %v4000 = vmul.f32 %v3640, %v3710
  %v4001 = vmul.f32 %v3641, %v3710
  %v4002 = vmul.f32 %v3642, %v3710
  %v4003 = vmul.f32 %v3643, %v3710
  %v4004 = vmul.f32 %v3644, %v3710
  %v4005 = vmul.f32 %v3645, %v3710
  %v4006 = vmul.f32 %v3646, %v3710
  %v4007 = vmul.f32 %v3647, %v3710
  %v4008 = vmul.f32 %v3648, %v3710
  %v4009 = vmul.f32 %v3649, %v3710
  %v4010 = vmul.f32 %v3650, %v3710
  %v4011 = vmul.f32 %v3651, %v3710
  %4013 = vset.pattern.permute.xlu0 0
  %4014 = vperm.xlu0 %4013, %v3340
  %v4015 = vpop.permute.xlu0 %4014
  %4018 = vset.pattern.permute.xlu0 0
  %4019 = vperm.xlu0 %4018, %v3341
  %v4020 = vpop.permute.xlu0 %4019
  %4023 = vset.pattern.permute.xlu0 0
  %4024 = vperm.xlu0 %4023, %v3342
  %v4025 = vpop.permute.xlu0 %4024
  %4028 = vset.pattern.permute.xlu0 0
  %4029 = vperm.xlu0 %4028, %v3343
  %v4030 = vpop.permute.xlu0 %4029
  %4033 = vset.pattern.permute.xlu0 0
  %4034 = vperm.xlu0 %4033, %v3344
  %v4035 = vpop.permute.xlu0 %4034
  %4038 = vset.pattern.permute.xlu0 0
  %4039 = vperm.xlu0 %4038, %v3345
  %v4040 = vpop.permute.xlu0 %4039
  %4043 = vset.pattern.permute.xlu0 0
  %4044 = vperm.xlu0 %4043, %v3346
  %v4045 = vpop.permute.xlu0 %4044
  %4048 = vset.pattern.permute.xlu0 0
  %4049 = vperm.xlu0 %4048, %v3347
  %v4050 = vpop.permute.xlu0 %4049
  %4053 = vset.pattern.permute.xlu0 0
  %4054 = vperm.xlu0 %4053, %v3348
  %v4055 = vpop.permute.xlu0 %4054
  %4058 = vset.pattern.permute.xlu0 0
  %4059 = vperm.xlu0 %4058, %v3349
  %v4060 = vpop.permute.xlu0 %4059
  %4063 = vset.pattern.permute.xlu0 0
  %4064 = vperm.xlu0 %4063, %v3350
  %v4065 = vpop.permute.xlu0 %4064
  %4068 = vset.pattern.permute.xlu0 0
  %4069 = vperm.xlu0 %4068, %v3351
  %v4070 = vpop.permute.xlu0 %4069
  %v4072 = vadd.f32 %v3712, %v4015
  %v4073 = vadd.f32 %v3713, %v4015
  %v4074 = vadd.f32 %v3714, %v4015
  %v4075 = vadd.f32 %v3715, %v4015
  %v4076 = vadd.f32 %v3716, %v4015
  %v4077 = vadd.f32 %v3717, %v4015
  %v4078 = vadd.f32 %v3718, %v4015
  %v4079 = vadd.f32 %v3719, %v4015
  %v4080 = vadd.f32 %v3720, %v4015
  %v4081 = vadd.f32 %v3721, %v4015
  %v4082 = vadd.f32 %v3722, %v4015
  %v4083 = vadd.f32 %v3723, %v4015
  %v4084 = vadd.f32 %v3724, %v4015
  %v4085 = vadd.f32 %v3725, %v4015
  %v4086 = vadd.f32 %v3726, %v4015
  %v4087 = vadd.f32 %v3727, %v4015
  %v4088 = vadd.f32 %v3728, %v4015
  %v4089 = vadd.f32 %v3729, %v4015
  %v4090 = vadd.f32 %v3730, %v4015
  %v4091 = vadd.f32 %v3731, %v4015
  %v4092 = vadd.f32 %v3732, %v4015
  %v4093 = vadd.f32 %v3733, %v4015
  %v4094 = vadd.f32 %v3734, %v4015
  %v4095 = vadd.f32 %v3735, %v4015
  %v4096 = vadd.f32 %v3736, %v4015
  %v4097 = vadd.f32 %v3737, %v4020
  %v4098 = vadd.f32 %v3738, %v4020
  %v4099 = vadd.f32 %v3739, %v4020
  %v4100 = vadd.f32 %v3740, %v4020
  %v4101 = vadd.f32 %v3741, %v4020
  %v4102 = vadd.f32 %v3742, %v4020
  %v4103 = vadd.f32 %v3743, %v4020
  %v4104 = vadd.f32 %v3744, %v4020
  %v4105 = vadd.f32 %v3745, %v4020
  %v4106 = vadd.f32 %v3746, %v4020
  %v4107 = vadd.f32 %v3747, %v4020
  %v4108 = vadd.f32 %v3748, %v4020
  %v4109 = vadd.f32 %v3749, %v4020
  %v4110 = vadd.f32 %v3750, %v4020
  %v4111 = vadd.f32 %v3751, %v4020
  %v4112 = vadd.f32 %v3752, %v4020
  %v4113 = vadd.f32 %v3753, %v4020
  %v4114 = vadd.f32 %v3754, %v4020
  %v4115 = vadd.f32 %v3755, %v4020
  %v4116 = vadd.f32 %v3756, %v4020
  %v4117 = vadd.f32 %v3757, %v4020
  %v4118 = vadd.f32 %v3758, %v4020
  %v4119 = vadd.f32 %v3759, %v4020
  %v4120 = vadd.f32 %v3760, %v4020
  %v4121 = vadd.f32 %v3761, %v4020
  %v4122 = vadd.f32 %v3762, %v4025
  %v4123 = vadd.f32 %v3763, %v4025
  %v4124 = vadd.f32 %v3764, %v4025
  %v4125 = vadd.f32 %v3765, %v4025
  %v4126 = vadd.f32 %v3766, %v4025
  %v4127 = vadd.f32 %v3767, %v4025
  %v4128 = vadd.f32 %v3768, %v4025
  %v4129 = vadd.f32 %v3769, %v4025
  %v4130 = vadd.f32 %v3770, %v4025
  %v4131 = vadd.f32 %v3771, %v4025
  %v4132 = vadd.f32 %v3772, %v4025
  %v4133 = vadd.f32 %v3773, %v4025
  %v4134 = vadd.f32 %v3774, %v4025
  %v4135 = vadd.f32 %v3775, %v4025
  %v4136 = vadd.f32 %v3776, %v4025
  %v4137 = vadd.f32 %v3777, %v4025
  %v4138 = vadd.f32 %v3778, %v4025
  %v4139 = vadd.f32 %v3779, %v4025
  %v4140 = vadd.f32 %v3780, %v4025
  %v4141 = vadd.f32 %v3781, %v4025
  %v4142 = vadd.f32 %v3782, %v4025
  %v4143 = vadd.f32 %v3783, %v4025
  %v4144 = vadd.f32 %v3784, %v4025
  %v4145 = vadd.f32 %v3785, %v4025
  %v4146 = vadd.f32 %v3786, %v4025
  %v4147 = vadd.f32 %v3787, %v4030
  %v4148 = vadd.f32 %v3788, %v4030
  %v4149 = vadd.f32 %v3789, %v4030
  %v4150 = vadd.f32 %v3790, %v4030
  %v4151 = vadd.f32 %v3791, %v4030
  %v4152 = vadd.f32 %v3792, %v4030
  %v4153 = vadd.f32 %v3793, %v4030
  %v4154 = vadd.f32 %v3794, %v4030
  %v4155 = vadd.f32 %v3795, %v4030
  %v4156 = vadd.f32 %v3796, %v4030
  %v4157 = vadd.f32 %v3797, %v4030
  %v4158 = vadd.f32 %v3798, %v4030
  %v4159 = vadd.f32 %v3799, %v4030
  %v4160 = vadd.f32 %v3800, %v4030
  %v4161 = vadd.f32 %v3801, %v4030
  %v4162 = vadd.f32 %v3802, %v4030
  %v4163 = vadd.f32 %v3803, %v4030
  %v4164 = vadd.f32 %v3804, %v4030
  %v4165 = vadd.f32 %v3805, %v4030
  %v4166 = vadd.f32 %v3806, %v4030
  %v4167 = vadd.f32 %v3807, %v4030
  %v4168 = vadd.f32 %v3808, %v4030
  %v4169 = vadd.f32 %v3809, %v4030
  %v4170 = vadd.f32 %v3810, %v4030
  %v4171 = vadd.f32 %v3811, %v4030
  %v4172 = vadd.f32 %v3812, %v4035
  %v4173 = vadd.f32 %v3813, %v4035
  %v4174 = vadd.f32 %v3814, %v4035
  %v4175 = vadd.f32 %v3815, %v4035
  %v4176 = vadd.f32 %v3816, %v4035
  %v4177 = vadd.f32 %v3817, %v4035
  %v4178 = vadd.f32 %v3818, %v4035
  %v4179 = vadd.f32 %v3819, %v4035
  %v4180 = vadd.f32 %v3820, %v4035
  %v4181 = vadd.f32 %v3821, %v4035
  %v4182 = vadd.f32 %v3822, %v4035
  %v4183 = vadd.f32 %v3823, %v4035
  %v4184 = vadd.f32 %v3824, %v4035
  %v4185 = vadd.f32 %v3825, %v4035
  %v4186 = vadd.f32 %v3826, %v4035
  %v4187 = vadd.f32 %v3827, %v4035
  %v4188 = vadd.f32 %v3828, %v4035
  %v4189 = vadd.f32 %v3829, %v4035
  %v4190 = vadd.f32 %v3830, %v4035
  %v4191 = vadd.f32 %v3831, %v4035
  %v4192 = vadd.f32 %v3832, %v4035
  %v4193 = vadd.f32 %v3833, %v4035
  %v4194 = vadd.f32 %v3834, %v4035
  %v4195 = vadd.f32 %v3835, %v4035
  %v4196 = vadd.f32 %v3836, %v4035
  %v4197 = vadd.f32 %v3837, %v4040
  %v4198 = vadd.f32 %v3838, %v4040
  %v4199 = vadd.f32 %v3839, %v4040
  %v4200 = vadd.f32 %v3840, %v4040
  %v4201 = vadd.f32 %v3841, %v4040
  %v4202 = vadd.f32 %v3842, %v4040
  %v4203 = vadd.f32 %v3843, %v4040
  %v4204 = vadd.f32 %v3844, %v4040
  %v4205 = vadd.f32 %v3845, %v4040
  %v4206 = vadd.f32 %v3846, %v4040
  %v4207 = vadd.f32 %v3847, %v4040
  %v4208 = vadd.f32 %v3848, %v4040
  %v4209 = vadd.f32 %v3849, %v4040
  %v4210 = vadd.f32 %v3850, %v4040
  %v4211 = vadd.f32 %v3851, %v4040
  %v4212 = vadd.f32 %v3852, %v4040
  %v4213 = vadd.f32 %v3853, %v4040
  %v4214 = vadd.f32 %v3854, %v4040
  %v4215 = vadd.f32 %v3855, %v4040
  %v4216 = vadd.f32 %v3856, %v4040
  %v4217 = vadd.f32 %v3857, %v4040
  %v4218 = vadd.f32 %v3858, %v4040
  %v4219 = vadd.f32 %v3859, %v4040
  %v4220 = vadd.f32 %v3860, %v4040
  %v4221 = vadd.f32 %v3861, %v4040
  %v4222 = vadd.f32 %v3862, %v4045
  %v4223 = vadd.f32 %v3863, %v4045
  %v4224 = vadd.f32 %v3864, %v4045
  %v4225 = vadd.f32 %v3865, %v4045
  %v4226 = vadd.f32 %v3866, %v4045
  %v4227 = vadd.f32 %v3867, %v4045
  %v4228 = vadd.f32 %v3868, %v4045
  %v4229 = vadd.f32 %v3869, %v4045
  %v4230 = vadd.f32 %v3870, %v4045
  %v4231 = vadd.f32 %v3871, %v4045
  %v4232 = vadd.f32 %v3872, %v4045
  %v4233 = vadd.f32 %v3873, %v4045
  %v4234 = vadd.f32 %v3874, %v4045
  %v4235 = vadd.f32 %v3875, %v4045
  %v4236 = vadd.f32 %v3876, %v4045
  %v4237 = vadd.f32 %v3877, %v4045
  %v4238 = vadd.f32 %v3878, %v4045
  %v4239 = vadd.f32 %v3879, %v4045
  %v4240 = vadd.f32 %v3880, %v4045
  %v4241 = vadd.f32 %v3881, %v4045
  %v4242 = vadd.f32 %v3882, %v4045
  %v4243 = vadd.f32 %v3883, %v4045
  %v4244 = vadd.f32 %v3884, %v4045
  %v4245 = vadd.f32 %v3885, %v4045
  %v4246 = vadd.f32 %v3886, %v4045
  %v4247 = vadd.f32 %v3887, %v4050
  %v4248 = vadd.f32 %v3888, %v4050
  %v4249 = vadd.f32 %v3889, %v4050
  %v4250 = vadd.f32 %v3890, %v4050
  %v4251 = vadd.f32 %v3891, %v4050
  %v4252 = vadd.f32 %v3892, %v4050
  %v4253 = vadd.f32 %v3893, %v4050
  %v4254 = vadd.f32 %v3894, %v4050
  %v4255 = vadd.f32 %v3895, %v4050
  %v4256 = vadd.f32 %v3896, %v4050
  %v4257 = vadd.f32 %v3897, %v4050
  %v4258 = vadd.f32 %v3898, %v4050
  %v4259 = vadd.f32 %v3899, %v4050
  %v4260 = vadd.f32 %v3900, %v4050
  %v4261 = vadd.f32 %v3901, %v4050
  %v4262 = vadd.f32 %v3902, %v4050
  %v4263 = vadd.f32 %v3903, %v4050
  %v4264 = vadd.f32 %v3904, %v4050
  %v4265 = vadd.f32 %v3905, %v4050
  %v4266 = vadd.f32 %v3906, %v4050
  %v4267 = vadd.f32 %v3907, %v4050
  %v4268 = vadd.f32 %v3908, %v4050
  %v4269 = vadd.f32 %v3909, %v4050
  %v4270 = vadd.f32 %v3910, %v4050
  %v4271 = vadd.f32 %v3911, %v4050
  %v4272 = vadd.f32 %v3912, %v4055
  %v4273 = vadd.f32 %v3913, %v4055
  %v4274 = vadd.f32 %v3914, %v4055
  %v4275 = vadd.f32 %v3915, %v4055
  %v4276 = vadd.f32 %v3916, %v4055
  %v4277 = vadd.f32 %v3917, %v4055
  %v4278 = vadd.f32 %v3918, %v4055
  %v4279 = vadd.f32 %v3919, %v4055
  %v4280 = vadd.f32 %v3920, %v4055
  %v4281 = vadd.f32 %v3921, %v4055
  %v4282 = vadd.f32 %v3922, %v4055
  %v4283 = vadd.f32 %v3923, %v4055
  %v4284 = vadd.f32 %v3924, %v4055
  %v4285 = vadd.f32 %v3925, %v4055
  %v4286 = vadd.f32 %v3926, %v4055
  %v4287 = vadd.f32 %v3927, %v4055
  %v4288 = vadd.f32 %v3928, %v4055
  %v4289 = vadd.f32 %v3929, %v4055
  %v4290 = vadd.f32 %v3930, %v4055
  %v4291 = vadd.f32 %v3931, %v4055
  %v4292 = vadd.f32 %v3932, %v4055
  %v4293 = vadd.f32 %v3933, %v4055
  %v4294 = vadd.f32 %v3934, %v4055
  %v4295 = vadd.f32 %v3935, %v4055
  %v4296 = vadd.f32 %v3936, %v4055
  %v4297 = vadd.f32 %v3937, %v4060
  %v4298 = vadd.f32 %v3938, %v4060
  %v4299 = vadd.f32 %v3939, %v4060
  %v4300 = vadd.f32 %v3940, %v4060
  %v4301 = vadd.f32 %v3941, %v4060
  %v4302 = vadd.f32 %v3942, %v4060
  %v4303 = vadd.f32 %v3943, %v4060
  %v4304 = vadd.f32 %v3944, %v4060
  %v4305 = vadd.f32 %v3945, %v4060
  %v4306 = vadd.f32 %v3946, %v4060
  %v4307 = vadd.f32 %v3947, %v4060
  %v4308 = vadd.f32 %v3948, %v4060
  %v4309 = vadd.f32 %v3949, %v4060
  %v4310 = vadd.f32 %v3950, %v4060
  %v4311 = vadd.f32 %v3951, %v4060
  %v4312 = vadd.f32 %v3952, %v4060
  %v4313 = vadd.f32 %v3953, %v4060
  %v4314 = vadd.f32 %v3954, %v4060
  %v4315 = vadd.f32 %v3955, %v4060
  %v4316 = vadd.f32 %v3956, %v4060
  %v4317 = vadd.f32 %v3957, %v4060
  %v4318 = vadd.f32 %v3958, %v4060
  %v4319 = vadd.f32 %v3959, %v4060
  %v4320 = vadd.f32 %v3960, %v4060
  %v4321 = vadd.f32 %v3961, %v4060
  %v4322 = vadd.f32 %v3962, %v4065
  %v4323 = vadd.f32 %v3963, %v4065
  %v4324 = vadd.f32 %v3964, %v4065
  %v4325 = vadd.f32 %v3965, %v4065
  %v4326 = vadd.f32 %v3966, %v4065
  %v4327 = vadd.f32 %v3967, %v4065
  %v4328 = vadd.f32 %v3968, %v4065
  %v4329 = vadd.f32 %v3969, %v4065
  %v4330 = vadd.f32 %v3970, %v4065
  %v4331 = vadd.f32 %v3971, %v4065
  %v4332 = vadd.f32 %v3972, %v4065
  %v4333 = vadd.f32 %v3973, %v4065
  %v4334 = vadd.f32 %v3974, %v4065
  %v4335 = vadd.f32 %v3975, %v4065
  %v4336 = vadd.f32 %v3976, %v4065
  %v4337 = vadd.f32 %v3977, %v4065
  %v4338 = vadd.f32 %v3978, %v4065
  %v4339 = vadd.f32 %v3979, %v4065
  %v4340 = vadd.f32 %v3980, %v4065
  %v4341 = vadd.f32 %v3981, %v4065
  %v4342 = vadd.f32 %v3982, %v4065
  %v4343 = vadd.f32 %v3983, %v4065
  %v4344 = vadd.f32 %v3984, %v4065
  %v4345 = vadd.f32 %v3985, %v4065
  %v4346 = vadd.f32 %v3986, %v4065
  %v4347 = vadd.f32 %v3987, %v4070
  %v4348 = vadd.f32 %v3988, %v4070
  %v4349 = vadd.f32 %v3989, %v4070
  %v4350 = vadd.f32 %v3990, %v4070
  %v4351 = vadd.f32 %v3991, %v4070
  %v4352 = vadd.f32 %v3992, %v4070
  %v4353 = vadd.f32 %v3993, %v4070
  %v4354 = vadd.f32 %v3994, %v4070
  %v4355 = vadd.f32 %v3995, %v4070
  %v4356 = vadd.f32 %v3996, %v4070
  %v4357 = vadd.f32 %v3997, %v4070
  %v4358 = vadd.f32 %v3998, %v4070
  %v4359 = vadd.f32 %v3999, %v4070
  %v4360 = vadd.f32 %v4000, %v4070
  %v4361 = vadd.f32 %v4001, %v4070
  %v4362 = vadd.f32 %v4002, %v4070
  %v4363 = vadd.f32 %v4003, %v4070
  %v4364 = vadd.f32 %v4004, %v4070
  %v4365 = vadd.f32 %v4005, %v4070
  %v4366 = vadd.f32 %v4006, %v4070
  %v4367 = vadd.f32 %v4007, %v4070
  %v4368 = vadd.f32 %v4008, %v4070
  %v4369 = vadd.f32 %v4009, %v4070
  %v4370 = vadd.f32 %v4010, %v4070
  %v4371 = vadd.f32 %v4011, %v4070
  %4372 = vst [vmem:[%s4] sm:$0xff] %v4072
  %4373 = vst [vmem:[%s4 + $0x8] sm:$0xff] %v4073
  %4374 = vst [vmem:[%s4 + $0x10] sm:$0xff] %v4074
  %4375 = vst [vmem:[%s4 + $0x18] sm:$0xff] %v4075
  %4376 = vst [vmem:[%s4 + $0x20] sm:$0xff] %v4076
  %4377 = vst [vmem:[%s4 + $0x28] sm:$0xff] %v4077
  %4378 = vst [vmem:[%s4 + $0x30] sm:$0xff] %v4078
  %4379 = vst [vmem:[%s4 + $0x38] sm:$0xff] %v4079
  %4380 = vst [vmem:[%s4 + $0x40] sm:$0xff] %v4080
  %4381 = vst [vmem:[%s4 + $0x48] sm:$0xff] %v4081
  %4382 = vst [vmem:[%s4 + $0x50] sm:$0xff] %v4082
  %4383 = vst [vmem:[%s4 + $0x58] sm:$0xff] %v4083
  %4384 = vst [vmem:[%s4 + $0x60] sm:$0xff] %v4084
  %4385 = vst [vmem:[%s4 + $0x68] sm:$0xff] %v4085
  %4386 = vst [vmem:[%s4 + $0x70] sm:$0xff] %v4086
  %4387 = vst [vmem:[%s4 + $0x78] sm:$0xff] %v4087
  %4388 = vst [vmem:[%s4 + $0x80] sm:$0xff] %v4088
  %4389 = vst [vmem:[%s4 + $0x88] sm:$0xff] %v4089
  %4390 = vst [vmem:[%s4 + $0x90] sm:$0xff] %v4090
  %4391 = vst [vmem:[%s4 + $0x98] sm:$0xff] %v4091
  %4392 = vst [vmem:[%s4 + $0xa0] sm:$0xff] %v4092
  %4393 = vst [vmem:[%s4 + $0xa8] sm:$0xff] %v4093
  %4394 = vst [vmem:[%s4 + $0xb0] sm:$0xff] %v4094
  %4395 = vst [vmem:[%s4 + $0xb8] sm:$0xff] %v4095
  %4396 = vst.msk [vmem:[%s4 + $0xc0] sm:$0xff] %vm1959, %v4096
  %4397 = vst [vmem:[%s4 + $0xc8] sm:$0xff] %v4097
  %4398 = vst [vmem:[%s4 + $0xd0] sm:$0xff] %v4098
  %4399 = vst [vmem:[%s4 + $0xd8] sm:$0xff] %v4099
  %4400 = vst [vmem:[%s4 + $0xe0] sm:$0xff] %v4100
  %4401 = vst [vmem:[%s4 + $0xe8] sm:$0xff] %v4101
  %4402 = vst [vmem:[%s4 + $0xf0] sm:$0xff] %v4102
  %4403 = vst [vmem:[%s4 + $0xf8] sm:$0xff] %v4103
  %4404 = vst [vmem:[%s4 + $0x100] sm:$0xff] %v4104
  %4405 = vst [vmem:[%s4 + $0x108] sm:$0xff] %v4105
  %4406 = vst [vmem:[%s4 + $0x110] sm:$0xff] %v4106
  %4407 = vst [vmem:[%s4 + $0x118] sm:$0xff] %v4107
  %4408 = vst [vmem:[%s4 + $0x120] sm:$0xff] %v4108
  %4409 = vst [vmem:[%s4 + $0x128] sm:$0xff] %v4109
  %4410 = vst [vmem:[%s4 + $0x130] sm:$0xff] %v4110
  %4411 = vst [vmem:[%s4 + $0x138] sm:$0xff] %v4111
  %4412 = vst [vmem:[%s4 + $0x140] sm:$0xff] %v4112
  %4413 = vst [vmem:[%s4 + $0x148] sm:$0xff] %v4113
  %4414 = vst [vmem:[%s4 + $0x150] sm:$0xff] %v4114
  %4415 = vst [vmem:[%s4 + $0x158] sm:$0xff] %v4115
  %4416 = vst [vmem:[%s4 + $0x160] sm:$0xff] %v4116
  %4417 = vst [vmem:[%s4 + $0x168] sm:$0xff] %v4117
  %4418 = vst [vmem:[%s4 + $0x170] sm:$0xff] %v4118
  %4419 = vst [vmem:[%s4 + $0x178] sm:$0xff] %v4119
  %4420 = vst [vmem:[%s4 + $0x180] sm:$0xff] %v4120
  %4421 = vst.msk [vmem:[%s4 + $0x188] sm:$0xff] %vm1959, %v4121
  %4422 = vst [vmem:[%s4 + $0x190] sm:$0xff] %v4122
  %4423 = vst [vmem:[%s4 + $0x198] sm:$0xff] %v4123
  %4424 = vst [vmem:[%s4 + $0x1a0] sm:$0xff] %v4124
  %4425 = vst [vmem:[%s4 + $0x1a8] sm:$0xff] %v4125
  %4426 = vst [vmem:[%s4 + $0x1b0] sm:$0xff] %v4126
  %4427 = vst [vmem:[%s4 + $0x1b8] sm:$0xff] %v4127
  %4428 = vst [vmem:[%s4 + $0x1c0] sm:$0xff] %v4128
  %4429 = vst [vmem:[%s4 + $0x1c8] sm:$0xff] %v4129
  %4430 = vst [vmem:[%s4 + $0x1d0] sm:$0xff] %v4130
  %4431 = vst [vmem:[%s4 + $0x1d8] sm:$0xff] %v4131
  %4432 = vst [vmem:[%s4 + $0x1e0] sm:$0xff] %v4132
  %4433 = vst [vmem:[%s4 + $0x1e8] sm:$0xff] %v4133
  %4434 = vst [vmem:[%s4 + $0x1f0] sm:$0xff] %v4134
  %4435 = vst [vmem:[%s4 + $0x1f8] sm:$0xff] %v4135
  %4436 = vst [vmem:[%s4 + $0x200] sm:$0xff] %v4136
  %4437 = vst [vmem:[%s4 + $0x208] sm:$0xff] %v4137
  %4438 = vst [vmem:[%s4 + $0x210] sm:$0xff] %v4138
  %4439 = vst [vmem:[%s4 + $0x218] sm:$0xff] %v4139
  %4440 = vst [vmem:[%s4 + $0x220] sm:$0xff] %v4140
  %4441 = vst [vmem:[%s4 + $0x228] sm:$0xff] %v4141
  %4442 = vst [vmem:[%s4 + $0x230] sm:$0xff] %v4142
  %4443 = vst [vmem:[%s4 + $0x238] sm:$0xff] %v4143
  %4444 = vst [vmem:[%s4 + $0x240] sm:$0xff] %v4144
  %4445 = vst [vmem:[%s4 + $0x248] sm:$0xff] %v4145
  %4446 = vst.msk [vmem:[%s4 + $0x250] sm:$0xff] %vm1959, %v4146
  %4447 = vst [vmem:[%s4 + $0x258] sm:$0xff] %v4147
  %4448 = vst [vmem:[%s4 + $0x260] sm:$0xff] %v4148
  %4449 = vst [vmem:[%s4 + $0x268] sm:$0xff] %v4149
  %4450 = vst [vmem:[%s4 + $0x270] sm:$0xff] %v4150
  %4451 = vst [vmem:[%s4 + $0x278] sm:$0xff] %v4151
  %4452 = vst [vmem:[%s4 + $0x280] sm:$0xff] %v4152
  %4453 = vst [vmem:[%s4 + $0x288] sm:$0xff] %v4153
  %4454 = vst [vmem:[%s4 + $0x290] sm:$0xff] %v4154
  %4455 = vst [vmem:[%s4 + $0x298] sm:$0xff] %v4155
  %4456 = vst [vmem:[%s4 + $0x2a0] sm:$0xff] %v4156
  %4457 = vst [vmem:[%s4 + $0x2a8] sm:$0xff] %v4157
  %4458 = vst [vmem:[%s4 + $0x2b0] sm:$0xff] %v4158
  %4459 = vst [vmem:[%s4 + $0x2b8] sm:$0xff] %v4159
  %4460 = vst [vmem:[%s4 + $0x2c0] sm:$0xff] %v4160
  %4461 = vst [vmem:[%s4 + $0x2c8] sm:$0xff] %v4161
  %4462 = vst [vmem:[%s4 + $0x2d0] sm:$0xff] %v4162
  %4463 = vst [vmem:[%s4 + $0x2d8] sm:$0xff] %v4163
  %4464 = vst [vmem:[%s4 + $0x2e0] sm:$0xff] %v4164
  %4465 = vst [vmem:[%s4 + $0x2e8] sm:$0xff] %v4165
  %4466 = vst [vmem:[%s4 + $0x2f0] sm:$0xff] %v4166
  %4467 = vst [vmem:[%s4 + $0x2f8] sm:$0xff] %v4167
  %4468 = vst [vmem:[%s4 + $0x300] sm:$0xff] %v4168
  %4469 = vst [vmem:[%s4 + $0x308] sm:$0xff] %v4169
  %4470 = vst [vmem:[%s4 + $0x310] sm:$0xff] %v4170
  %4471 = vst.msk [vmem:[%s4 + $0x318] sm:$0xff] %vm1959, %v4171
  %4472 = vst [vmem:[%s4 + $0x320] sm:$0xff] %v4172
  %4473 = vst [vmem:[%s4 + $0x328] sm:$0xff] %v4173
  %4474 = vst [vmem:[%s4 + $0x330] sm:$0xff] %v4174
  %4475 = vst [vmem:[%s4 + $0x338] sm:$0xff] %v4175
  %4476 = vst [vmem:[%s4 + $0x340] sm:$0xff] %v4176
  %4477 = vst [vmem:[%s4 + $0x348] sm:$0xff] %v4177
  %4478 = vst [vmem:[%s4 + $0x350] sm:$0xff] %v4178
  %4479 = vst [vmem:[%s4 + $0x358] sm:$0xff] %v4179
  %4480 = vst [vmem:[%s4 + $0x360] sm:$0xff] %v4180
  %4481 = vst [vmem:[%s4 + $0x368] sm:$0xff] %v4181
  %4482 = vst [vmem:[%s4 + $0x370] sm:$0xff] %v4182
  %4483 = vst [vmem:[%s4 + $0x378] sm:$0xff] %v4183
  %4484 = vst [vmem:[%s4 + $0x380] sm:$0xff] %v4184
  %4485 = vst [vmem:[%s4 + $0x388] sm:$0xff] %v4185
  %4486 = vst [vmem:[%s4 + $0x390] sm:$0xff] %v4186
  %4487 = vst [vmem:[%s4 + $0x398] sm:$0xff] %v4187
  %4488 = vst [vmem:[%s4 + $0x3a0] sm:$0xff] %v4188
  %4489 = vst [vmem:[%s4 + $0x3a8] sm:$0xff] %v4189
  %4490 = vst [vmem:[%s4 + $0x3b0] sm:$0xff] %v4190
  %4491 = vst [vmem:[%s4 + $0x3b8] sm:$0xff] %v4191
  %4492 = vst [vmem:[%s4 + $0x3c0] sm:$0xff] %v4192
  %4493 = vst [vmem:[%s4 + $0x3c8] sm:$0xff] %v4193
  %4494 = vst [vmem:[%s4 + $0x3d0] sm:$0xff] %v4194
  %4495 = vst [vmem:[%s4 + $0x3d8] sm:$0xff] %v4195
  %4496 = vst.msk [vmem:[%s4 + $0x3e0] sm:$0xff] %vm1959, %v4196
  %4497 = vst [vmem:[%s4 + $0x3e8] sm:$0xff] %v4197
  %4498 = vst [vmem:[%s4 + $0x3f0] sm:$0xff] %v4198
  %4499 = vst [vmem:[%s4 + $0x3f8] sm:$0xff] %v4199
  %4500 = vst [vmem:[%s4 + $0x400] sm:$0xff] %v4200
  %4501 = vst [vmem:[%s4 + $0x408] sm:$0xff] %v4201
  %4502 = vst [vmem:[%s4 + $0x410] sm:$0xff] %v4202
  %4503 = vst [vmem:[%s4 + $0x418] sm:$0xff] %v4203
  %4504 = vst [vmem:[%s4 + $0x420] sm:$0xff] %v4204
  %4505 = vst [vmem:[%s4 + $0x428] sm:$0xff] %v4205
  %4506 = vst [vmem:[%s4 + $0x430] sm:$0xff] %v4206
  %4507 = vst [vmem:[%s4 + $0x438] sm:$0xff] %v4207
  %4508 = vst [vmem:[%s4 + $0x440] sm:$0xff] %v4208
  %4509 = vst [vmem:[%s4 + $0x448] sm:$0xff] %v4209
  %4510 = vst [vmem:[%s4 + $0x450] sm:$0xff] %v4210
  %4511 = vst [vmem:[%s4 + $0x458] sm:$0xff] %v4211
  %4512 = vst [vmem:[%s4 + $0x460] sm:$0xff] %v4212
  %4513 = vst [vmem:[%s4 + $0x468] sm:$0xff] %v4213
  %4514 = vst [vmem:[%s4 + $0x470] sm:$0xff] %v4214
  %4515 = vst [vmem:[%s4 + $0x478] sm:$0xff] %v4215
  %4516 = vst [vmem:[%s4 + $0x480] sm:$0xff] %v4216
  %4517 = vst [vmem:[%s4 + $0x488] sm:$0xff] %v4217
  %4518 = vst [vmem:[%s4 + $0x490] sm:$0xff] %v4218
  %4519 = vst [vmem:[%s4 + $0x498] sm:$0xff] %v4219
  %4520 = vst [vmem:[%s4 + $0x4a0] sm:$0xff] %v4220
  %4521 = vst.msk [vmem:[%s4 + $0x4a8] sm:$0xff] %vm1959, %v4221
  %4522 = vst [vmem:[%s4 + $0x4b0] sm:$0xff] %v4222
  %4523 = vst [vmem:[%s4 + $0x4b8] sm:$0xff] %v4223
  %4524 = vst [vmem:[%s4 + $0x4c0] sm:$0xff] %v4224
  %4525 = vst [vmem:[%s4 + $0x4c8] sm:$0xff] %v4225
  %4526 = vst [vmem:[%s4 + $0x4d0] sm:$0xff] %v4226
  %4527 = vst [vmem:[%s4 + $0x4d8] sm:$0xff] %v4227
  %4528 = vst [vmem:[%s4 + $0x4e0] sm:$0xff] %v4228
  %4529 = vst [vmem:[%s4 + $0x4e8] sm:$0xff] %v4229
  %4530 = vst [vmem:[%s4 + $0x4f0] sm:$0xff] %v4230
  %4531 = vst [vmem:[%s4 + $0x4f8] sm:$0xff] %v4231
  %4532 = vst [vmem:[%s4 + $0x500] sm:$0xff] %v4232
  %4533 = vst [vmem:[%s4 + $0x508] sm:$0xff] %v4233
  %4534 = vst [vmem:[%s4 + $0x510] sm:$0xff] %v4234
  %4535 = vst [vmem:[%s4 + $0x518] sm:$0xff] %v4235
  %4536 = vst [vmem:[%s4 + $0x520] sm:$0xff] %v4236
  %4537 = vst [vmem:[%s4 + $0x528] sm:$0xff] %v4237
  %4538 = vst [vmem:[%s4 + $0x530] sm:$0xff] %v4238
  %4539 = vst [vmem:[%s4 + $0x538] sm:$0xff] %v4239
  %4540 = vst [vmem:[%s4 + $0x540] sm:$0xff] %v4240
  %4541 = vst [vmem:[%s4 + $0x548] sm:$0xff] %v4241
  %4542 = vst [vmem:[%s4 + $0x550] sm:$0xff] %v4242
  %4543 = vst [vmem:[%s4 + $0x558] sm:$0xff] %v4243
  %4544 = vst [vmem:[%s4 + $0x560] sm:$0xff] %v4244
  %4545 = vst [vmem:[%s4 + $0x568] sm:$0xff] %v4245
  %4546 = vst.msk [vmem:[%s4 + $0x570] sm:$0xff] %vm1959, %v4246
  %4547 = vst [vmem:[%s4 + $0x578] sm:$0xff] %v4247
  %4548 = vst [vmem:[%s4 + $0x580] sm:$0xff] %v4248
  %4549 = vst [vmem:[%s4 + $0x588] sm:$0xff] %v4249
  %4550 = vst [vmem:[%s4 + $0x590] sm:$0xff] %v4250
  %4551 = vst [vmem:[%s4 + $0x598] sm:$0xff] %v4251
  %4552 = vst [vmem:[%s4 + $0x5a0] sm:$0xff] %v4252
  %4553 = vst [vmem:[%s4 + $0x5a8] sm:$0xff] %v4253
  %4554 = vst [vmem:[%s4 + $0x5b0] sm:$0xff] %v4254
  %4555 = vst [vmem:[%s4 + $0x5b8] sm:$0xff] %v4255
  %4556 = vst [vmem:[%s4 + $0x5c0] sm:$0xff] %v4256
  %4557 = vst [vmem:[%s4 + $0x5c8] sm:$0xff] %v4257
  %4558 = vst [vmem:[%s4 + $0x5d0] sm:$0xff] %v4258
  %4559 = vst [vmem:[%s4 + $0x5d8] sm:$0xff] %v4259
  %4560 = vst [vmem:[%s4 + $0x5e0] sm:$0xff] %v4260
  %4561 = vst [vmem:[%s4 + $0x5e8] sm:$0xff] %v4261
  %4562 = vst [vmem:[%s4 + $0x5f0] sm:$0xff] %v4262
  %4563 = vst [vmem:[%s4 + $0x5f8] sm:$0xff] %v4263
  %4564 = vst [vmem:[%s4 + $0x600] sm:$0xff] %v4264
  %4565 = vst [vmem:[%s4 + $0x608] sm:$0xff] %v4265
  %4566 = vst [vmem:[%s4 + $0x610] sm:$0xff] %v4266
  %4567 = vst [vmem:[%s4 + $0x618] sm:$0xff] %v4267
  %4568 = vst [vmem:[%s4 + $0x620] sm:$0xff] %v4268
  %4569 = vst [vmem:[%s4 + $0x628] sm:$0xff] %v4269
  %4570 = vst [vmem:[%s4 + $0x630] sm:$0xff] %v4270
  %4571 = vst.msk [vmem:[%s4 + $0x638] sm:$0xff] %vm1959, %v4271
  %4572 = vst [vmem:[%s4 + $0x640] sm:$0xff] %v4272
  %4573 = vst [vmem:[%s4 + $0x648] sm:$0xff] %v4273
  %4574 = vst [vmem:[%s4 + $0x650] sm:$0xff] %v4274
  %4575 = vst [vmem:[%s4 + $0x658] sm:$0xff] %v4275
  %4576 = vst [vmem:[%s4 + $0x660] sm:$0xff] %v4276
  %4577 = vst [vmem:[%s4 + $0x668] sm:$0xff] %v4277
  %4578 = vst [vmem:[%s4 + $0x670] sm:$0xff] %v4278
  %4579 = vst [vmem:[%s4 + $0x678] sm:$0xff] %v4279
  %4580 = vst [vmem:[%s4 + $0x680] sm:$0xff] %v4280
  %4581 = vst [vmem:[%s4 + $0x688] sm:$0xff] %v4281
  %4582 = vst [vmem:[%s4 + $0x690] sm:$0xff] %v4282
  %4583 = vst [vmem:[%s4 + $0x698] sm:$0xff] %v4283
  %4584 = vst [vmem:[%s4 + $0x6a0] sm:$0xff] %v4284
  %4585 = vst [vmem:[%s4 + $0x6a8] sm:$0xff] %v4285
  %4586 = vst [vmem:[%s4 + $0x6b0] sm:$0xff] %v4286
  %4587 = vst [vmem:[%s4 + $0x6b8] sm:$0xff] %v4287
  %4588 = vst [vmem:[%s4 + $0x6c0] sm:$0xff] %v4288
  %4589 = vst [vmem:[%s4 + $0x6c8] sm:$0xff] %v4289
  %4590 = vst [vmem:[%s4 + $0x6d0] sm:$0xff] %v4290
  %4591 = vst [vmem:[%s4 + $0x6d8] sm:$0xff] %v4291
  %4592 = vst [vmem:[%s4 + $0x6e0] sm:$0xff] %v4292
  %4593 = vst [vmem:[%s4 + $0x6e8] sm:$0xff] %v4293
  %4594 = vst [vmem:[%s4 + $0x6f0] sm:$0xff] %v4294
  %4595 = vst [vmem:[%s4 + $0x6f8] sm:$0xff] %v4295
  %4596 = vst.msk [vmem:[%s4 + $0x700] sm:$0xff] %vm1959, %v4296
  %4597 = vst [vmem:[%s4 + $0x708] sm:$0xff] %v4297
  %4598 = vst [vmem:[%s4 + $0x710] sm:$0xff] %v4298
  %4599 = vst [vmem:[%s4 + $0x718] sm:$0xff] %v4299
  %4600 = vst [vmem:[%s4 + $0x720] sm:$0xff] %v4300
  %4601 = vst [vmem:[%s4 + $0x728] sm:$0xff] %v4301
  %4602 = vst [vmem:[%s4 + $0x730] sm:$0xff] %v4302
  %4603 = vst [vmem:[%s4 + $0x738] sm:$0xff] %v4303
  %4604 = vst [vmem:[%s4 + $0x740] sm:$0xff] %v4304
  %4605 = vst [vmem:[%s4 + $0x748] sm:$0xff] %v4305
  %4606 = vst [vmem:[%s4 + $0x750] sm:$0xff] %v4306
  %4607 = vst [vmem:[%s4 + $0x758] sm:$0xff] %v4307
  %4608 = vst [vmem:[%s4 + $0x760] sm:$0xff] %v4308
  %4609 = vst [vmem:[%s4 + $0x768] sm:$0xff] %v4309
  %4610 = vst [vmem:[%s4 + $0x770] sm:$0xff] %v4310
  %4611 = vst [vmem:[%s4 + $0x778] sm:$0xff] %v4311
  %4612 = vst [vmem:[%s4 + $0x780] sm:$0xff] %v4312
  %4613 = vst [vmem:[%s4 + $0x788] sm:$0xff] %v4313
  %4614 = vst [vmem:[%s4 + $0x790] sm:$0xff] %v4314
  %4615 = vst [vmem:[%s4 + $0x798] sm:$0xff] %v4315
  %4616 = vst [vmem:[%s4 + $0x7a0] sm:$0xff] %v4316
  %4617 = vst [vmem:[%s4 + $0x7a8] sm:$0xff] %v4317
  %4618 = vst [vmem:[%s4 + $0x7b0] sm:$0xff] %v4318
  %4619 = vst [vmem:[%s4 + $0x7b8] sm:$0xff] %v4319
  %4620 = vst [vmem:[%s4 + $0x7c0] sm:$0xff] %v4320
  %4621 = vst.msk [vmem:[%s4 + $0x7c8] sm:$0xff] %vm1959, %v4321
  %4622 = vst [vmem:[%s4 + $0x7d0] sm:$0xff] %v4322
  %4623 = vst [vmem:[%s4 + $0x7d8] sm:$0xff] %v4323
  %4624 = vst [vmem:[%s4 + $0x7e0] sm:$0xff] %v4324
  %4625 = vst [vmem:[%s4 + $0x7e8] sm:$0xff] %v4325
  %4626 = vst [vmem:[%s4 + $0x7f0] sm:$0xff] %v4326
  %4627 = vst [vmem:[%s4 + $0x7f8] sm:$0xff] %v4327
  %4628 = vst [vmem:[%s4 + $0x800] sm:$0xff] %v4328
  %4629 = vst [vmem:[%s4 + $0x808] sm:$0xff] %v4329
  %4630 = vst [vmem:[%s4 + $0x810] sm:$0xff] %v4330
  %4631 = vst [vmem:[%s4 + $0x818] sm:$0xff] %v4331
  %4632 = vst [vmem:[%s4 + $0x820] sm:$0xff] %v4332
  %4633 = vst [vmem:[%s4 + $0x828] sm:$0xff] %v4333
  %4634 = vst [vmem:[%s4 + $0x830] sm:$0xff] %v4334
  %4635 = vst [vmem:[%s4 + $0x838] sm:$0xff] %v4335
  %4636 = vst [vmem:[%s4 + $0x840] sm:$0xff] %v4336
  %4637 = vst [vmem:[%s4 + $0x848] sm:$0xff] %v4337
  %4638 = vst [vmem:[%s4 + $0x850] sm:$0xff] %v4338
  %4639 = vst [vmem:[%s4 + $0x858] sm:$0xff] %v4339
  %4640 = vst [vmem:[%s4 + $0x860] sm:$0xff] %v4340
  %4641 = vst [vmem:[%s4 + $0x868] sm:$0xff] %v4341
  %4642 = vst [vmem:[%s4 + $0x870] sm:$0xff] %v4342
  %4643 = vst [vmem:[%s4 + $0x878] sm:$0xff] %v4343
  %4644 = vst [vmem:[%s4 + $0x880] sm:$0xff] %v4344
  %4645 = vst [vmem:[%s4 + $0x888] sm:$0xff] %v4345
  %4646 = vst.msk [vmem:[%s4 + $0x890] sm:$0xff] %vm1959, %v4346
  %4647 = vst [vmem:[%s4 + $0x898] sm:$0xff] %v4347
  %4648 = vst [vmem:[%s4 + $0x8a0] sm:$0xff] %v4348
  %4649 = vst [vmem:[%s4 + $0x8a8] sm:$0xff] %v4349
  %4650 = vst [vmem:[%s4 + $0x8b0] sm:$0xff] %v4350
  %4651 = vst [vmem:[%s4 + $0x8b8] sm:$0xff] %v4351
  %4652 = vst [vmem:[%s4 + $0x8c0] sm:$0xff] %v4352
  %4653 = vst [vmem:[%s4 + $0x8c8] sm:$0xff] %v4353
  %4654 = vst [vmem:[%s4 + $0x8d0] sm:$0xff] %v4354
  %4655 = vst [vmem:[%s4 + $0x8d8] sm:$0xff] %v4355
  %4656 = vst [vmem:[%s4 + $0x8e0] sm:$0xff] %v4356
  %4657 = vst [vmem:[%s4 + $0x8e8] sm:$0xff] %v4357
  %4658 = vst [vmem:[%s4 + $0x8f0] sm:$0xff] %v4358
  %4659 = vst [vmem:[%s4 + $0x8f8] sm:$0xff] %v4359
  %4660 = vst [vmem:[%s4 + $0x900] sm:$0xff] %v4360
  %4661 = vst [vmem:[%s4 + $0x908] sm:$0xff] %v4361
  %4662 = vst [vmem:[%s4 + $0x910] sm:$0xff] %v4362
  %4663 = vst [vmem:[%s4 + $0x918] sm:$0xff] %v4363
  %4664 = vst [vmem:[%s4 + $0x920] sm:$0xff] %v4364
  %4665 = vst [vmem:[%s4 + $0x928] sm:$0xff] %v4365
  %4666 = vst [vmem:[%s4 + $0x930] sm:$0xff] %v4366
  %4667 = vst [vmem:[%s4 + $0x938] sm:$0xff] %v4367
  %4668 = vst [vmem:[%s4 + $0x940] sm:$0xff] %v4368
  %4669 = vst [vmem:[%s4 + $0x948] sm:$0xff] %v4369
  %4670 = vst [vmem:[%s4 + $0x950] sm:$0xff] %v4370
  %4671 = vst.msk [vmem:[%s4 + $0x958] sm:$0xff] %vm1959, %v4371
  // Predicated region
  $region18: #{conv_bn_forward.1} parent=0 // pred_check
    _
  $region19: #{conv_bn_forward.1} parent=0 // pred_check_branch
    %4673 = sbr.rel (0) target = $region21
  $region20: #{conv_bn_forward.1} parent=0 // pred_region
    _
  $region21: #{conv_bn_forward.1} parent=0 // pred_fallthru
    _
  // Predicated region
  $region22: #{conv_bn_forward.1} parent=0 // pred_check
    _
  $region23: #{conv_bn_forward.1} parent=0 // pred_check_branch
    %4675 = sbr.rel (0) target = $region25
  $region24: #{conv_bn_forward.1} parent=0 // pred_region
    _
  $region25: #{conv_bn_forward.1} parent=0 // pred_fallthru
    _

</llo_original>
